<compile_context>
chip_gen: v5e
topology: v5e:2x2
jax: 0.10.0
libtpu: 0.0.40
codegen_flags: <defaults>
</compile_context>

<pallas_src>
import functools
import math

import jax
import jax.numpy as jnp
from jax import lax
from jax.experimental import pallas as pl
from jax.experimental.pallas import tpu as pltpu

D = 12      # feature dimension fixed by Linear(12, ...) in the module
LANE = 128  # TPU lane width; feature dim is zero-padded to this


# ---------------------------------------------------------------------------
# Kernel
# ---------------------------------------------------------------------------
def _net_kernel(p, unroll_p, x_ref,
                hw1, hb1, hw2, hb2, hw3c, hb3m,
                xw1, xb1, xw2, xb2, xw3, xb3, xw4, xb4,
                y_ref):
    f32 = jnp.float32
    wdt = hw1.dtype  # MXU input dtype (bf16 by default)

    # Hoist bias loads out of the (possibly unrolled) flow loop: JAX does not
    # CSE broadcast_in_dim, so re-reading them per iteration re-emits vlds.
    b1 = hb1[...]
    b2 = hb2[...]

    z0 = x_ref[...].astype(f32)  # (TB, 128); lanes 12..127 are zero padding

    def flow_step(_, z):
        zb = z.astype(wdt)
        # H_net1 trunk
        h = jax.nn.sigmoid(
            jnp.dot(zb, hw1[...], preferred_element_type=f32) + b1)
        h = jax.nn.sigmoid(
            jnp.dot(h.astype(wdt), hw2[...], preferred_element_type=f32) + b2)
        hb = h.astype(wdt)
        # z_new[b, j] = sum_i z[b, i] * H[b, i, j]  with
        #   H[b, i, j] = (h @ hw3)[b, i*12+j] + hb3[i*12+j].
        # The bias part sum_i z[b, i] * hb3[i*12+j] is a single matmul z @ B
        # (B padded to 128x128) -> no per-chunk VALU bias adds.  Each data part
        # uses the i-th repacked (128, 128) weight chunk (real cols at lanes
        # 0..11, zero elsewhere), so every slice / store below is 128-lane
        # aligned and the zero padding of z is preserved.
        z_new = jnp.dot(zb, hb3m[...], preferred_element_type=f32)
        for i in range(D):  # static unroll; hw3c[i] is a free address offset
            chunk = jnp.dot(hb, hw3c[i], preferred_element_type=f32)
            z_new = z_new + z[:, i:i + 1] * chunk
        return z_new

    if unroll_p:
        z = z0
        for _ in range(p):
            z = flow_step(0, z)
    else:
        # Bound code size / vreg live ranges for large p.
        z = lax.fori_loop(0, p, flow_step, z0)

    # X_net head: 3x (Linear + ReLU) then Linear(128, 1) + Sigmoid.
    a = jnp.maximum(
        jnp.dot(z.astype(wdt), xw1[...], preferred_element_type=f32) + xb1[...], 0.0)
    a = jnp.maximum(
        jnp.dot(a.astype(wdt), xw2[...], preferred_element_type=f32) + xb2[...], 0.0)
    a = jnp.maximum(
        jnp.dot(a.astype(wdt), xw3[...], preferred_element_type=f32) + xb3[...], 0.0)
    # Final layer padded to 128 output lanes -> lane-dense, unmasked store;
    # only column 0 is real (wrapper slices it back out).
    y = jax.nn.sigmoid(
        jnp.dot(a.astype(wdt), xw4[...], preferred_element_type=f32) + xb4[...])
    y_ref[...] = y.astype(y_ref.dtype)


# ---------------------------------------------------------------------------
# Wrapper
# ---------------------------------------------------------------------------
def net_forward(x, packed_params, p, *, block_batch=256, single_tile_max=512):
    bs, d = x.shape
    assert d == D

    # Adaptive tile: small/medium batches run as one tile sized to the batch
    # (rounded up to the 8-sublane granule); large batches tile at block_batch.
    bs_r8 = 8 * pl.cdiv(bs, 8)
    tb = bs_r8 if bs_r8 <= max(block_batch, single_tile_max) else block_batch
    bs_pad = tb * pl.cdiv(bs, tb)

    # Zero-pad features (12 -> 128 lanes) and batch (to a multiple of the tile).
    xp = jnp.zeros((bs_pad, LANE), jnp.float32).at[:bs, :D].set(
        x.astype(jnp.float32))

    def const_spec(a):
        nd = a.ndim
        return pl.BlockSpec(a.shape, lambda i, _nd=nd: (0,) * _nd)

    kernel = functools.partial(_net_kernel, p, p <= 4)

    y_full = pl.pallas_call(
        kernel,
        out_shape=jax.ShapeDtypeStruct((bs_pad, LANE), jnp.float32),
        grid=(bs_pad // tb,),
        in_specs=[pl.BlockSpec((tb, LANE), lambda i: (i, 0))]
                 + [const_spec(a) for a in packed_params],
        out_specs=pl.BlockSpec((tb, LANE), lambda i: (i, 0)),
        compiler_params=pltpu.CompilerParams(
            dimension_semantics=("parallel",),
            vmem_limit_bytes=32 * 1024 * 1024,
        ),
    )(xp, *packed_params)
    return y_full[:bs, :1]


# ---------------------------------------------------------------------------
# Parameters.  Raw params mirror PyTorch nn.Linear defaults (U(-k, k),
# k = 1/sqrt(fan_in)); weights stored as (in, out) so y = x @ W + b.
# ---------------------------------------------------------------------------
def _init_linear(key, fan_in, fan_out):
    kw, kb = jax.random.split(key)
    bound = 1.0 / math.sqrt(fan_in)
    w = jax.random.uniform(kw, (fan_in, fan_out), jnp.float32, -bound, bound)
    b = jax.random.uniform(kb, (fan_out,), jnp.float32, -bound, bound)
    return w, b


def make_raw_params(key):
    keys = jax.random.split(key, 7)
    hw1, hb1 = _init_linear(keys[0], 12, 64)        # H_net1: 12 -> 64 -> 128 -> 144
    hw2, hb2 = _init_linear(keys[1], 64, 128)
    hw3, hb3 = _init_linear(keys[2], 128, D * D)
    xw1, xb1 = _init_linear(keys[3], 12, 64)        # X_net: 12 -> 64 -> 128 -> 128 -> 1
    xw2, xb2 = _init_linear(keys[4], 64, 128)
    xw3, xb3 = _init_linear(keys[5], 128, 128)
    xw4, xb4 = _init_linear(keys[6], 128, 1)
    return (hw1, hb1, hw2, hb2, hw3, hb3,
            xw1, xb1, xw2, xb2, xw3, xb3, xw4, xb4)


def pack_params(raw, mxu_dtype=jnp.bfloat16):
    """Pad / repack weights for the lane-aligned kernel (trace-time, free)."""
    (hw1, hb1, hw2, hb2, hw3, hb3,
     xw1, xb1, xw2, xb2, xw3, xb3, xw4, xb4) = raw
    f32 = jnp.float32

    def pad_rows(w, rows):  # zero-pad the input (K) dim
        return jnp.zeros((rows, w.shape[1]), f32).at[:w.shape[0], :].set(w)

    hw1p = pad_rows(hw1, LANE).astype(mxu_dtype)          # (128, 64)
    hb1p = hb1.reshape(1, -1).astype(f32)                 # (1, 64)
    hw2p = hw2.astype(mxu_dtype)                          # (64, 128)
    hb2p = hb2.reshape(1, -1).astype(f32)                 # (1, 128)

    # H_net1 last layer (128, 144) -> 12 chunks of (128, 12), each padded to a
    # full 128-lane block so the kernel never lane-slices the activation.
    hw3c = jnp.zeros((D, 128, LANE), f32)
    for i in range(D):
        hw3c = hw3c.at[i, :, :D].set(hw3[:, i * D:(i + 1) * D])
    hw3c = hw3c.astype(mxu_dtype)
    # Flow bias folded into a matmul: B[i, j] = hb3[i*12 + j], padded 128x128.
    hb3m = (jnp.zeros((LANE, LANE), f32)
            .at[:D, :D].set(hb3.reshape(D, D)).astype(mxu_dtype))

    xw1p = pad_rows(xw1, LANE).astype(mxu_dtype)          # (128, 64)
    xb1p = xb1.reshape(1, -1).astype(f32)
    xw2p = xw2.astype(mxu_dtype)
    xb2p = xb2.reshape(1, -1).astype(f32)
    xw3p = xw3.astype(mxu_dtype)
    xb3p = xb3.reshape(1, -1).astype(f32)
    # Final head padded to 128 output lanes (lane-dense store; col 0 is real).
    xw4p = jnp.zeros((128, LANE), f32).at[:, :1].set(xw4).astype(mxu_dtype)
    xb4p = jnp.zeros((1, LANE), f32).at[0, :1].set(xb4)

    return (hw1p, hb1p, hw2p, hb2p, hw3c, hb3m,
            xw1p, xb1p, xw2p, xb2p, xw3p, xb3p, xw4p, xb4p)


# ---------------------------------------------------------------------------
# References.
#   _ref_packed: same packed weights / same cast pattern as the kernel (tight check).
#   _ref_f32:    original full-f32 module semantics (loose sanity check).
# ---------------------------------------------------------------------------
def net_forward_ref_packed(x, packed, p):
    (hw1, hb1, hw2, hb2, hw3c, hb3m,
     xw1, xb1, xw2, xb2, xw3, xb3, xw4, xb4) = packed
    f32 = jnp.float32
    wdt = hw1.dtype
    bs = x.shape[0]
    z = jnp.zeros((bs, LANE), f32).at[:, :D].set(x.astype(f32))
    for _ in range(p):
        zb = z.astype(wdt)
        h = jax.nn.sigmoid(jnp.dot(zb, hw1, preferred_element_type=f32) + hb1)
        h = jax.nn.sigmoid(jnp.dot(h.astype(wdt), hw2, preferred_element_type=f32) + hb2)
        hb = h.astype(wdt)
        z_new = jnp.dot(zb, hb3m, preferred_element_type=f32)
        for i in range(D):
            chunk = jnp.dot(hb, hw3c[i], preferred_element_type=f32)
            z_new = z_new + z[:, i:i + 1] * chunk
        z = z_new
    a = jnp.maximum(jnp.dot(z.astype(wdt), xw1, preferred_element_type=f32) + xb1, 0.0)
    a = jnp.maximum(jnp.dot(a.astype(wdt), xw2, preferred_element_type=f32) + xb2, 0.0)
    a = jnp.maximum(jnp.dot(a.astype(wdt), xw3, preferred_element_type=f32) + xb3, 0.0)
    y = jax.nn.sigmoid(jnp.dot(a.astype(wdt), xw4, preferred_element_type=f32) + xb4)
    return y[:, :1]


def net_forward_ref_f32(x, raw, p):
    (hw1, hb1, hw2, hb2, hw3, hb3,
     xw1, xb1, xw2, xb2, xw3, xb3, xw4, xb4) = raw
    z = x.astype(jnp.float32)
    bs = z.shape[0]
    for _ in range(p):
        h = jax.nn.sigmoid(z @ hw1 + hb1)
        h = jax.nn.sigmoid(h @ hw2 + hb2)
        H = (h @ hw3 + hb3).reshape(bs, D, D)   # same row-major reshape as torch
        z = jnp.einsum("bd,bde->be", z, H)
    a = jnp.maximum(z @ xw1 + xb1, 0.0)
    a = jnp.maximum(a @ xw2 + xb2, 0.0)
    a = jnp.maximum(a @ xw3 + xb3, 0.0)
    return jax.nn.sigmoid(a @ xw4 + xb4)


if __name__ == "__main__":
    key = jax.random.PRNGKey(0)
    k_x1, k_x2, k_p = jax.random.split(key, 3)

    raw = make_raw_params(k_p)
    packed = pack_params(raw, mxu_dtype=jnp.bfloat16)

    # Case 1: small batch, small p (unrolled flow loop, single 8-row tile).
    bs1, p1 = 8, 3
    x1 = jax.random.normal(k_x1, (bs1, D), jnp.float32)
    y1 = jax.block_until_ready(net_forward(x1, packed, p1))
    assert y1.shape == (bs1, 1)
    y1_ref = net_forward_ref_packed(x1, packed, p1)
    assert jnp.allclose(y1, y1_ref, atol=5e-3, rtol=5e-3), \
        float(jnp.max(jnp.abs(y1 - y1_ref)))
    # Loose sanity check against the original all-f32 semantics (bf16 MXU inputs).
    y1_f32 = net_forward_ref_f32(x1, raw, p1)
    assert jnp.allclose(y1, y1_f32, atol=5e-2), \
        float(jnp.max(jnp.abs(y1 - y1_f32)))

    # Case 2: medium batch (single 304-row tile), larger p (fori_loop path).
    bs2, p2 = 300, 6
    x2 = jax.random.normal(k_x2, (bs2, D), jnp.float32)
    y2 = jax.block_until_ready(net_forward(x2, packed, p2))
    assert y2.shape == (bs2, 1)
    y2_ref = net_forward_ref_packed(x2, packed, p2)
    assert jnp.allclose(y2, y2_ref, atol=5e-3, rtol=5e-3), \
        float(jnp.max(jnp.abs(y2 - y2_ref)))

    # Case 3: batch > single-tile max (grid of 3 tiles of 256 with padding).
    bs3, p3 = 700, 6
    x3 = jax.random.normal(k_x1, (bs3, D), jnp.float32)
    y3 = jax.block_until_ready(net_forward(x3, packed, p3))
    assert y3.shape == (bs3, 1)
    y3_ref = net_forward_ref_packed(x3, packed, p3)
    assert jnp.allclose(y3, y3_ref, atol=5e-3, rtol=5e-3), \
        float(jnp.max(jnp.abs(y3 - y3_ref)))

    print("KERNEL_OK")
</pallas_src>

<mosaic_0001>
module attributes {stable_mosaic.version = 11 : i64} {
  func.func @_net_kernel(%arg0: i32, %arg1: memref<8x128xf32, #tpu.memory_space<vmem>>, %arg2: memref<128x64xbf16, #tpu.memory_space<vmem>>, %arg3: memref<1x64xf32, #tpu.memory_space<vmem>>, %arg4: memref<64x128xbf16, #tpu.memory_space<vmem>>, %arg5: memref<1x128xf32, #tpu.memory_space<vmem>>, %arg6: memref<12x128x128xbf16, #tpu.memory_space<vmem>>, %arg7: memref<128x128xbf16, #tpu.memory_space<vmem>>, %arg8: memref<128x64xbf16, #tpu.memory_space<vmem>>, %arg9: memref<1x64xf32, #tpu.memory_space<vmem>>, %arg10: memref<64x128xbf16, #tpu.memory_space<vmem>>, %arg11: memref<1x128xf32, #tpu.memory_space<vmem>>, %arg12: memref<128x128xbf16, #tpu.memory_space<vmem>>, %arg13: memref<1x128xf32, #tpu.memory_space<vmem>>, %arg14: memref<128x128xbf16, #tpu.memory_space<vmem>>, %arg15: memref<1x128xf32, #tpu.memory_space<vmem>>, %arg16: memref<8x128xf32, #tpu.memory_space<vmem>>) attributes {dimension_semantics = [#tpu.dimension_semantics<parallel>], iteration_bounds = array<i64: 1>, scalar_prefetch = 0 : i64, scratch_operands = 0 : i64, tpu.core_type = #tpu.core_type<tc>, window_params = [{transform_indices = @transform_0, window_bounds = array<i64: 8, 128>}, {pipeline_mode = #tpu.pipeline_mode<synchronous>, transform_indices = @transform_1, window_bounds = array<i64: 128, 64>}, {pipeline_mode = #tpu.pipeline_mode<synchronous>, transform_indices = @transform_2, window_bounds = array<i64: 1, 64>}, {pipeline_mode = #tpu.pipeline_mode<synchronous>, transform_indices = @transform_3, window_bounds = array<i64: 64, 128>}, {pipeline_mode = #tpu.pipeline_mode<synchronous>, transform_indices = @transform_4, window_bounds = array<i64: 1, 128>}, {pipeline_mode = #tpu.pipeline_mode<synchronous>, transform_indices = @transform_5, window_bounds = array<i64: 12, 128, 128>}, {pipeline_mode = #tpu.pipeline_mode<synchronous>, transform_indices = @transform_6, window_bounds = array<i64: 128, 128>}, {pipeline_mode = #tpu.pipeline_mode<synchronous>, transform_indices = @transform_7, window_bounds = array<i64: 128, 64>}, {pipeline_mode = #tpu.pipeline_mode<synchronous>, transform_indices = @transform_8, window_bounds = array<i64: 1, 64>}, {pipeline_mode = #tpu.pipeline_mode<synchronous>, transform_indices = @transform_9, window_bounds = array<i64: 64, 128>}, {pipeline_mode = #tpu.pipeline_mode<synchronous>, transform_indices = @transform_10, window_bounds = array<i64: 1, 128>}, {pipeline_mode = #tpu.pipeline_mode<synchronous>, transform_indices = @transform_11, window_bounds = array<i64: 128, 128>}, {pipeline_mode = #tpu.pipeline_mode<synchronous>, transform_indices = @transform_12, window_bounds = array<i64: 1, 128>}, {pipeline_mode = #tpu.pipeline_mode<synchronous>, transform_indices = @transform_13, window_bounds = array<i64: 128, 128>}, {pipeline_mode = #tpu.pipeline_mode<synchronous>, transform_indices = @transform_14, window_bounds = array<i64: 1, 128>}, {transform_indices = @transform_15, window_bounds = array<i64: 8, 128>}]} {
    %c0 = arith.constant 0 : index
    %c0_0 = arith.constant 0 : index
    %0 = vector.load %arg3[%c0, %c0_0] : memref<1x64xf32, #tpu.memory_space<vmem>>, vector<1x64xf32>
    %c0_1 = arith.constant 0 : index
    %c0_2 = arith.constant 0 : index
    %1 = vector.load %arg5[%c0_1, %c0_2] : memref<1x128xf32, #tpu.memory_space<vmem>>, vector<1x128xf32>
    %c0_3 = arith.constant 0 : index
    %c0_4 = arith.constant 0 : index
    %2 = vector.load %arg1[%c0_3, %c0_4] : memref<8x128xf32, #tpu.memory_space<vmem>>, vector<8x128xf32>
    %3 = arith.truncf %2 : vector<8x128xf32> to vector<8x128xbf16>
    %c0_5 = arith.constant 0 : index
    %c0_6 = arith.constant 0 : index
    %4 = vector.load %arg2[%c0_5, %c0_6] : memref<128x64xbf16, #tpu.memory_space<vmem>>, vector<128x64xbf16>
    %cst = arith.constant dense<0.000000e+00> : vector<8x64xf32>
    %5 = tpu.matmul %3, %4, %cst {dimension_numbers = #tpu.dot_dimension_numbers<[1], [0], [0], [1], [0, 0, 1, 1], [], []>} : vector<8x128xbf16>, vector<128x64xbf16>, vector<8x64xf32> -> vector<8x64xf32>
    %6 = vector.broadcast %0 : vector<1x64xf32> to vector<8x64xf32>
    %7 = arith.addf %5, %6 : vector<8x64xf32>
    %8 = arith.negf %7 : vector<8x64xf32>
    %9 = math.exp %8 : vector<8x64xf32>
    %cst_7 = arith.constant 1.000000e+00 : f32
    %10 = vector.broadcast %cst_7 : f32 to vector<8x64xf32>
    %11 = arith.addf %10, %9 : vector<8x64xf32>
    %12 = arith.divf %10, %11 : vector<8x64xf32>
    %13 = arith.truncf %12 : vector<8x64xf32> to vector<8x64xbf16>
    %c0_8 = arith.constant 0 : index
    %c0_9 = arith.constant 0 : index
    %14 = vector.load %arg4[%c0_8, %c0_9] : memref<64x128xbf16, #tpu.memory_space<vmem>>, vector<64x128xbf16>
    %cst_10 = arith.constant dense<0.000000e+00> : vector<8x128xf32>
    %15 = tpu.matmul %13, %14, %cst_10 {dimension_numbers = #tpu.dot_dimension_numbers<[1], [0], [0], [1], [0, 0, 1, 1], [], []>} : vector<8x64xbf16>, vector<64x128xbf16>, vector<8x128xf32> -> vector<8x128xf32>
    %16 = vector.broadcast %1 : vector<1x128xf32> to vector<8x128xf32>
    %17 = arith.addf %15, %16 : vector<8x128xf32>
    %18 = arith.negf %17 : vector<8x128xf32>
    %19 = math.exp %18 : vector<8x128xf32>
    %cst_11 = arith.constant 1.000000e+00 : f32
    %20 = vector.broadcast %cst_11 : f32 to vector<8x128xf32>
    %21 = arith.addf %20, %19 : vector<8x128xf32>
    %22 = arith.divf %20, %21 : vector<8x128xf32>
    %23 = arith.truncf %22 : vector<8x128xf32> to vector<8x128xbf16>
    %c0_12 = arith.constant 0 : index
    %c0_13 = arith.constant 0 : index
    %24 = vector.load %arg7[%c0_12, %c0_13] : memref<128x128xbf16, #tpu.memory_space<vmem>>, vector<128x128xbf16>
    %cst_14 = arith.constant dense<0.000000e+00> : vector<8x128xf32>
    %25 = tpu.matmul %3, %24, %cst_14 {dimension_numbers = #tpu.dot_dimension_numbers<[1], [0], [0], [1], [0, 0, 1, 1], [], []>} : vector<8x128xbf16>, vector<128x128xbf16>, vector<8x128xf32> -> vector<8x128xf32>
    %c0_15 = arith.constant 0 : index
    %c0_16 = arith.constant 0 : index
    %c0_17 = arith.constant 0 : index
    %26 = vector.load %arg6[%c0_15, %c0_16, %c0_17] : memref<12x128x128xbf16, #tpu.memory_space<vmem>>, vector<1x128x128xbf16>
    %27 = vector.shape_cast %26 : vector<1x128x128xbf16> to vector<128x128xbf16>
    %cst_18 = arith.constant dense<0.000000e+00> : vector<8x128xf32>
    %28 = tpu.matmul %23, %27, %cst_18 {dimension_numbers = #tpu.dot_dimension_numbers<[1], [0], [0], [1], [0, 0, 1, 1], [], []>} : vector<8x128xbf16>, vector<128x128xbf16>, vector<8x128xf32> -> vector<8x128xf32>
    %29 = vector.extract_strided_slice %2 {offsets = [0, 0], sizes = [8, 1], strides = [1, 1]} : vector<8x128xf32> to vector<8x1xf32>
    %30 = vector.broadcast %29 : vector<8x1xf32> to vector<8x128xf32>
    %31 = arith.mulf %30, %28 : vector<8x128xf32>
    %32 = arith.addf %25, %31 : vector<8x128xf32>
    %c1 = arith.constant 1 : index
    %c0_19 = arith.constant 0 : index
    %c0_20 = arith.constant 0 : index
    %33 = vector.load %arg6[%c1, %c0_19, %c0_20] : memref<12x128x128xbf16, #tpu.memory_space<vmem>>, vector<1x128x128xbf16>
    %34 = vector.shape_cast %33 : vector<1x128x128xbf16> to vector<128x128xbf16>
    %cst_21 = arith.constant dense<0.000000e+00> : vector<8x128xf32>
    %35 = tpu.matmul %23, %34, %cst_21 {dimension_numbers = #tpu.dot_dimension_numbers<[1], [0], [0], [1], [0, 0, 1, 1], [], []>} : vector<8x128xbf16>, vector<128x128xbf16>, vector<8x128xf32> -> vector<8x128xf32>
    %36 = vector.extract_strided_slice %2 {offsets = [0, 1], sizes = [8, 1], strides = [1, 1]} : vector<8x128xf32> to vector<8x1xf32>
    %37 = vector.broadcast %36 : vector<8x1xf32> to vector<8x128xf32>
    %38 = arith.mulf %37, %35 : vector<8x128xf32>
    %39 = arith.addf %32, %38 : vector<8x128xf32>
    %c2 = arith.constant 2 : index
    %c0_22 = arith.constant 0 : index
    %c0_23 = arith.constant 0 : index
    %40 = vector.load %arg6[%c2, %c0_22, %c0_23] : memref<12x128x128xbf16, #tpu.memory_space<vmem>>, vector<1x128x128xbf16>
    %41 = vector.shape_cast %40 : vector<1x128x128xbf16> to vector<128x128xbf16>
    %cst_24 = arith.constant dense<0.000000e+00> : vector<8x128xf32>
    %42 = tpu.matmul %23, %41, %cst_24 {dimension_numbers = #tpu.dot_dimension_numbers<[1], [0], [0], [1], [0, 0, 1, 1], [], []>} : vector<8x128xbf16>, vector<128x128xbf16>, vector<8x128xf32> -> vector<8x128xf32>
    %43 = vector.extract_strided_slice %2 {offsets = [0, 2], sizes = [8, 1], strides = [1, 1]} : vector<8x128xf32> to vector<8x1xf32>
    %44 = vector.broadcast %43 : vector<8x1xf32> to vector<8x128xf32>
    %45 = arith.mulf %44, %42 : vector<8x128xf32>
    %46 = arith.addf %39, %45 : vector<8x128xf32>
    %c3 = arith.constant 3 : index
    %c0_25 = arith.constant 0 : index
    %c0_26 = arith.constant 0 : index
    %47 = vector.load %arg6[%c3, %c0_25, %c0_26] : memref<12x128x128xbf16, #tpu.memory_space<vmem>>, vector<1x128x128xbf16>
    %48 = vector.shape_cast %47 : vector<1x128x128xbf16> to vector<128x128xbf16>
    %cst_27 = arith.constant dense<0.000000e+00> : vector<8x128xf32>
    %49 = tpu.matmul %23, %48, %cst_27 {dimension_numbers = #tpu.dot_dimension_numbers<[1], [0], [0], [1], [0, 0, 1, 1], [], []>} : vector<8x128xbf16>, vector<128x128xbf16>, vector<8x128xf32> -> vector<8x128xf32>
    %50 = vector.extract_strided_slice %2 {offsets = [0, 3], sizes = [8, 1], strides = [1, 1]} : vector<8x128xf32> to vector<8x1xf32>
    %51 = vector.broadcast %50 : vector<8x1xf32> to vector<8x128xf32>
    %52 = arith.mulf %51, %49 : vector<8x128xf32>
    %53 = arith.addf %46, %52 : vector<8x128xf32>
    %c4 = arith.constant 4 : index
    %c0_28 = arith.constant 0 : index
    %c0_29 = arith.constant 0 : index
    %54 = vector.load %arg6[%c4, %c0_28, %c0_29] : memref<12x128x128xbf16, #tpu.memory_space<vmem>>, vector<1x128x128xbf16>
    %55 = vector.shape_cast %54 : vector<1x128x128xbf16> to vector<128x128xbf16>
    %cst_30 = arith.constant dense<0.000000e+00> : vector<8x128xf32>
    %56 = tpu.matmul %23, %55, %cst_30 {dimension_numbers = #tpu.dot_dimension_numbers<[1], [0], [0], [1], [0, 0, 1, 1], [], []>} : vector<8x128xbf16>, vector<128x128xbf16>, vector<8x128xf32> -> vector<8x128xf32>
    %57 = vector.extract_strided_slice %2 {offsets = [0, 4], sizes = [8, 1], strides = [1, 1]} : vector<8x128xf32> to vector<8x1xf32>
    %58 = vector.broadcast %57 : vector<8x1xf32> to vector<8x128xf32>
    %59 = arith.mulf %58, %56 : vector<8x128xf32>
    %60 = arith.addf %53, %59 : vector<8x128xf32>
    %c5 = arith.constant 5 : index
    %c0_31 = arith.constant 0 : index
    %c0_32 = arith.constant 0 : index
    %61 = vector.load %arg6[%c5, %c0_31, %c0_32] : memref<12x128x128xbf16, #tpu.memory_space<vmem>>, vector<1x128x128xbf16>
    %62 = vector.shape_cast %61 : vector<1x128x128xbf16> to vector<128x128xbf16>
    %cst_33 = arith.constant dense<0.000000e+00> : vector<8x128xf32>
    %63 = tpu.matmul %23, %62, %cst_33 {dimension_numbers = #tpu.dot_dimension_numbers<[1], [0], [0], [1], [0, 0, 1, 1], [], []>} : vector<8x128xbf16>, vector<128x128xbf16>, vector<8x128xf32> -> vector<8x128xf32>
    %64 = vector.extract_strided_slice %2 {offsets = [0, 5], sizes = [8, 1], strides = [1, 1]} : vector<8x128xf32> to vector<8x1xf32>
    %65 = vector.broadcast %64 : vector<8x1xf32> to vector<8x128xf32>
    %66 = arith.mulf %65, %63 : vector<8x128xf32>
    %67 = arith.addf %60, %66 : vector<8x128xf32>
    %c6 = arith.constant 6 : index
    %c0_34 = arith.constant 0 : index
    %c0_35 = arith.constant 0 : index
    %68 = vector.load %arg6[%c6, %c0_34, %c0_35] : memref<12x128x128xbf16, #tpu.memory_space<vmem>>, vector<1x128x128xbf16>
    %69 = vector.shape_cast %68 : vector<1x128x128xbf16> to vector<128x128xbf16>
    %cst_36 = arith.constant dense<0.000000e+00> : vector<8x128xf32>
    %70 = tpu.matmul %23, %69, %cst_36 {dimension_numbers = #tpu.dot_dimension_numbers<[1], [0], [0], [1], [0, 0, 1, 1], [], []>} : vector<8x128xbf16>, vector<128x128xbf16>, vector<8x128xf32> -> vector<8x128xf32>
    %71 = vector.extract_strided_slice %2 {offsets = [0, 6], sizes = [8, 1], strides = [1, 1]} : vector<8x128xf32> to vector<8x1xf32>
    %72 = vector.broadcast %71 : vector<8x1xf32> to vector<8x128xf32>
    %73 = arith.mulf %72, %70 : vector<8x128xf32>
    %74 = arith.addf %67, %73 : vector<8x128xf32>
    %c7 = arith.constant 7 : index
    %c0_37 = arith.constant 0 : index
    %c0_38 = arith.constant 0 : index
    %75 = vector.load %arg6[%c7, %c0_37, %c0_38] : memref<12x128x128xbf16, #tpu.memory_space<vmem>>, vector<1x128x128xbf16>
    %76 = vector.shape_cast %75 : vector<1x128x128xbf16> to vector<128x128xbf16>
    %cst_39 = arith.constant dense<0.000000e+00> : vector<8x128xf32>
    %77 = tpu.matmul %23, %76, %cst_39 {dimension_numbers = #tpu.dot_dimension_numbers<[1], [0], [0], [1], [0, 0, 1, 1], [], []>} : vector<8x128xbf16>, vector<128x128xbf16>, vector<8x128xf32> -> vector<8x128xf32>
    %78 = vector.extract_strided_slice %2 {offsets = [0, 7], sizes = [8, 1], strides = [1, 1]} : vector<8x128xf32> to vector<8x1xf32>
    %79 = vector.broadcast %78 : vector<8x1xf32> to vector<8x128xf32>
    %80 = arith.mulf %79, %77 : vector<8x128xf32>
    %81 = arith.addf %74, %80 : vector<8x128xf32>
    %c8 = arith.constant 8 : index
    %c0_40 = arith.constant 0 : index
    %c0_41 = arith.constant 0 : index
    %82 = vector.load %arg6[%c8, %c0_40, %c0_41] : memref<12x128x128xbf16, #tpu.memory_space<vmem>>, vector<1x128x128xbf16>
    %83 = vector.shape_cast %82 : vector<1x128x128xbf16> to vector<128x128xbf16>
    %cst_42 = arith.constant dense<0.000000e+00> : vector<8x128xf32>
    %84 = tpu.matmul %23, %83, %cst_42 {dimension_numbers = #tpu.dot_dimension_numbers<[1], [0], [0], [1], [0, 0, 1, 1], [], []>} : vector<8x128xbf16>, vector<128x128xbf16>, vector<8x128xf32> -> vector<8x128xf32>
    %85 = vector.extract_strided_slice %2 {offsets = [0, 8], sizes = [8, 1], strides = [1, 1]} : vector<8x128xf32> to vector<8x1xf32>
    %86 = vector.broadcast %85 : vector<8x1xf32> to vector<8x128xf32>
    %87 = arith.mulf %86, %84 : vector<8x128xf32>
    %88 = arith.addf %81, %87 : vector<8x128xf32>
    %c9 = arith.constant 9 : index
    %c0_43 = arith.constant 0 : index
    %c0_44 = arith.constant 0 : index
    %89 = vector.load %arg6[%c9, %c0_43, %c0_44] : memref<12x128x128xbf16, #tpu.memory_space<vmem>>, vector<1x128x128xbf16>
    %90 = vector.shape_cast %89 : vector<1x128x128xbf16> to vector<128x128xbf16>
    %cst_45 = arith.constant dense<0.000000e+00> : vector<8x128xf32>
    %91 = tpu.matmul %23, %90, %cst_45 {dimension_numbers = #tpu.dot_dimension_numbers<[1], [0], [0], [1], [0, 0, 1, 1], [], []>} : vector<8x128xbf16>, vector<128x128xbf16>, vector<8x128xf32> -> vector<8x128xf32>
    %92 = vector.extract_strided_slice %2 {offsets = [0, 9], sizes = [8, 1], strides = [1, 1]} : vector<8x128xf32> to vector<8x1xf32>
    %93 = vector.broadcast %92 : vector<8x1xf32> to vector<8x128xf32>
    %94 = arith.mulf %93, %91 : vector<8x128xf32>
    %95 = arith.addf %88, %94 : vector<8x128xf32>
    %c10 = arith.constant 10 : index
    %c0_46 = arith.constant 0 : index
    %c0_47 = arith.constant 0 : index
    %96 = vector.load %arg6[%c10, %c0_46, %c0_47] : memref<12x128x128xbf16, #tpu.memory_space<vmem>>, vector<1x128x128xbf16>
    %97 = vector.shape_cast %96 : vector<1x128x128xbf16> to vector<128x128xbf16>
    %cst_48 = arith.constant dense<0.000000e+00> : vector<8x128xf32>
    %98 = tpu.matmul %23, %97, %cst_48 {dimension_numbers = #tpu.dot_dimension_numbers<[1], [0], [0], [1], [0, 0, 1, 1], [], []>} : vector<8x128xbf16>, vector<128x128xbf16>, vector<8x128xf32> -> vector<8x128xf32>
    %99 = vector.extract_strided_slice %2 {offsets = [0, 10], sizes = [8, 1], strides = [1, 1]} : vector<8x128xf32> to vector<8x1xf32>
    %100 = vector.broadcast %99 : vector<8x1xf32> to vector<8x128xf32>
    %101 = arith.mulf %100, %98 : vector<8x128xf32>
    %102 = arith.addf %95, %101 : vector<8x128xf32>
    %c11 = arith.constant 11 : index
    %c0_49 = arith.constant 0 : index
    %c0_50 = arith.constant 0 : index
    %103 = vector.load %arg6[%c11, %c0_49, %c0_50] : memref<12x128x128xbf16, #tpu.memory_space<vmem>>, vector<1x128x128xbf16>
    %104 = vector.shape_cast %103 : vector<1x128x128xbf16> to vector<128x128xbf16>
    %cst_51 = arith.constant dense<0.000000e+00> : vector<8x128xf32>
    %105 = tpu.matmul %23, %104, %cst_51 {dimension_numbers = #tpu.dot_dimension_numbers<[1], [0], [0], [1], [0, 0, 1, 1], [], []>} : vector<8x128xbf16>, vector<128x128xbf16>, vector<8x128xf32> -> vector<8x128xf32>
    %106 = vector.extract_strided_slice %2 {offsets = [0, 11], sizes = [8, 1], strides = [1, 1]} : vector<8x128xf32> to vector<8x1xf32>
    %107 = vector.broadcast %106 : vector<8x1xf32> to vector<8x128xf32>
    %108 = arith.mulf %107, %105 : vector<8x128xf32>
    %109 = arith.addf %102, %108 : vector<8x128xf32>
    %110 = arith.truncf %109 : vector<8x128xf32> to vector<8x128xbf16>
    %c0_52 = arith.constant 0 : index
    %c0_53 = arith.constant 0 : index
    %111 = vector.load %arg2[%c0_52, %c0_53] : memref<128x64xbf16, #tpu.memory_space<vmem>>, vector<128x64xbf16>
    %cst_54 = arith.constant dense<0.000000e+00> : vector<8x64xf32>
    %112 = tpu.matmul %110, %111, %cst_54 {dimension_numbers = #tpu.dot_dimension_numbers<[1], [0], [0], [1], [0, 0, 1, 1], [], []>} : vector<8x128xbf16>, vector<128x64xbf16>, vector<8x64xf32> -> vector<8x64xf32>
    %113 = vector.broadcast %0 : vector<1x64xf32> to vector<8x64xf32>
    %114 = arith.addf %112, %113 : vector<8x64xf32>
    %115 = arith.negf %114 : vector<8x64xf32>
    %116 = math.exp %115 : vector<8x64xf32>
    %cst_55 = arith.constant 1.000000e+00 : f32
    %117 = vector.broadcast %cst_55 : f32 to vector<8x64xf32>
    %118 = arith.addf %117, %116 : vector<8x64xf32>
    %119 = arith.divf %117, %118 : vector<8x64xf32>
    %120 = arith.truncf %119 : vector<8x64xf32> to vector<8x64xbf16>
    %c0_56 = arith.constant 0 : index
    %c0_57 = arith.constant 0 : index
    %121 = vector.load %arg4[%c0_56, %c0_57] : memref<64x128xbf16, #tpu.memory_space<vmem>>, vector<64x128xbf16>
    %cst_58 = arith.constant dense<0.000000e+00> : vector<8x128xf32>
    %122 = tpu.matmul %120, %121, %cst_58 {dimension_numbers = #tpu.dot_dimension_numbers<[1], [0], [0], [1], [0, 0, 1, 1], [], []>} : vector<8x64xbf16>, vector<64x128xbf16>, vector<8x128xf32> -> vector<8x128xf32>
    %123 = vector.broadcast %1 : vector<1x128xf32> to vector<8x128xf32>
    %124 = arith.addf %122, %123 : vector<8x128xf32>
    %125 = arith.negf %124 : vector<8x128xf32>
    %126 = math.exp %125 : vector<8x128xf32>
    %cst_59 = arith.constant 1.000000e+00 : f32
    %127 = vector.broadcast %cst_59 : f32 to vector<8x128xf32>
    %128 = arith.addf %127, %126 : vector<8x128xf32>
    %129 = arith.divf %127, %128 : vector<8x128xf32>
    %130 = arith.truncf %129 : vector<8x128xf32> to vector<8x128xbf16>
    %c0_60 = arith.constant 0 : index
    %c0_61 = arith.constant 0 : index
    %131 = vector.load %arg7[%c0_60, %c0_61] : memref<128x128xbf16, #tpu.memory_space<vmem>>, vector<128x128xbf16>
    %cst_62 = arith.constant dense<0.000000e+00> : vector<8x128xf32>
    %132 = tpu.matmul %110, %131, %cst_62 {dimension_numbers = #tpu.dot_dimension_numbers<[1], [0], [0], [1], [0, 0, 1, 1], [], []>} : vector<8x128xbf16>, vector<128x128xbf16>, vector<8x128xf32> -> vector<8x128xf32>
    %c0_63 = arith.constant 0 : index
    %c0_64 = arith.constant 0 : index
    %c0_65 = arith.constant 0 : index
    %133 = vector.load %arg6[%c0_63, %c0_64, %c0_65] : memref<12x128x128xbf16, #tpu.memory_space<vmem>>, vector<1x128x128xbf16>
    %134 = vector.shape_cast %133 : vector<1x128x128xbf16> to vector<128x128xbf16>
    %cst_66 = arith.constant dense<0.000000e+00> : vector<8x128xf32>
    %135 = tpu.matmul %130, %134, %cst_66 {dimension_numbers = #tpu.dot_dimension_numbers<[1], [0], [0], [1], [0, 0, 1, 1], [], []>} : vector<8x128xbf16>, vector<128x128xbf16>, vector<8x128xf32> -> vector<8x128xf32>
    %136 = vector.extract_strided_slice %109 {offsets = [0, 0], sizes = [8, 1], strides = [1, 1]} : vector<8x128xf32> to vector<8x1xf32>
    %137 = vector.broadcast %136 : vector<8x1xf32> to vector<8x128xf32>
    %138 = arith.mulf %137, %135 : vector<8x128xf32>
    %139 = arith.addf %132, %138 : vector<8x128xf32>
    %c1_67 = arith.constant 1 : index
    %c0_68 = arith.constant 0 : index
    %c0_69 = arith.constant 0 : index
    %140 = vector.load %arg6[%c1_67, %c0_68, %c0_69] : memref<12x128x128xbf16, #tpu.memory_space<vmem>>, vector<1x128x128xbf16>
    %141 = vector.shape_cast %140 : vector<1x128x128xbf16> to vector<128x128xbf16>
    %cst_70 = arith.constant dense<0.000000e+00> : vector<8x128xf32>
    %142 = tpu.matmul %130, %141, %cst_70 {dimension_numbers = #tpu.dot_dimension_numbers<[1], [0], [0], [1], [0, 0, 1, 1], [], []>} : vector<8x128xbf16>, vector<128x128xbf16>, vector<8x128xf32> -> vector<8x128xf32>
    %143 = vector.extract_strided_slice %109 {offsets = [0, 1], sizes = [8, 1], strides = [1, 1]} : vector<8x128xf32> to vector<8x1xf32>
    %144 = vector.broadcast %143 : vector<8x1xf32> to vector<8x128xf32>
    %145 = arith.mulf %144, %142 : vector<8x128xf32>
    %146 = arith.addf %139, %145 : vector<8x128xf32>
    %c2_71 = arith.constant 2 : index
    %c0_72 = arith.constant 0 : index
    %c0_73 = arith.constant 0 : index
    %147 = vector.load %arg6[%c2_71, %c0_72, %c0_73] : memref<12x128x128xbf16, #tpu.memory_space<vmem>>, vector<1x128x128xbf16>
    %148 = vector.shape_cast %147 : vector<1x128x128xbf16> to vector<128x128xbf16>
    %cst_74 = arith.constant dense<0.000000e+00> : vector<8x128xf32>
    %149 = tpu.matmul %130, %148, %cst_74 {dimension_numbers = #tpu.dot_dimension_numbers<[1], [0], [0], [1], [0, 0, 1, 1], [], []>} : vector<8x128xbf16>, vector<128x128xbf16>, vector<8x128xf32> -> vector<8x128xf32>
    %150 = vector.extract_strided_slice %109 {offsets = [0, 2], sizes = [8, 1], strides = [1, 1]} : vector<8x128xf32> to vector<8x1xf32>
    %151 = vector.broadcast %150 : vector<8x1xf32> to vector<8x128xf32>
    %152 = arith.mulf %151, %149 : vector<8x128xf32>
    %153 = arith.addf %146, %152 : vector<8x128xf32>
    %c3_75 = arith.constant 3 : index
    %c0_76 = arith.constant 0 : index
    %c0_77 = arith.constant 0 : index
    %154 = vector.load %arg6[%c3_75, %c0_76, %c0_77] : memref<12x128x128xbf16, #tpu.memory_space<vmem>>, vector<1x128x128xbf16>
    %155 = vector.shape_cast %154 : vector<1x128x128xbf16> to vector<128x128xbf16>
    %cst_78 = arith.constant dense<0.000000e+00> : vector<8x128xf32>
    %156 = tpu.matmul %130, %155, %cst_78 {dimension_numbers = #tpu.dot_dimension_numbers<[1], [0], [0], [1], [0, 0, 1, 1], [], []>} : vector<8x128xbf16>, vector<128x128xbf16>, vector<8x128xf32> -> vector<8x128xf32>
    %157 = vector.extract_strided_slice %109 {offsets = [0, 3], sizes = [8, 1], strides = [1, 1]} : vector<8x128xf32> to vector<8x1xf32>
    %158 = vector.broadcast %157 : vector<8x1xf32> to vector<8x128xf32>
    %159 = arith.mulf %158, %156 : vector<8x128xf32>
    %160 = arith.addf %153, %159 : vector<8x128xf32>
    %c4_79 = arith.constant 4 : index
    %c0_80 = arith.constant 0 : index
    %c0_81 = arith.constant 0 : index
    %161 = vector.load %arg6[%c4_79, %c0_80, %c0_81] : memref<12x128x128xbf16, #tpu.memory_space<vmem>>, vector<1x128x128xbf16>
    %162 = vector.shape_cast %161 : vector<1x128x128xbf16> to vector<128x128xbf16>
    %cst_82 = arith.constant dense<0.000000e+00> : vector<8x128xf32>
    %163 = tpu.matmul %130, %162, %cst_82 {dimension_numbers = #tpu.dot_dimension_numbers<[1], [0], [0], [1], [0, 0, 1, 1], [], []>} : vector<8x128xbf16>, vector<128x128xbf16>, vector<8x128xf32> -> vector<8x128xf32>
    %164 = vector.extract_strided_slice %109 {offsets = [0, 4], sizes = [8, 1], strides = [1, 1]} : vector<8x128xf32> to vector<8x1xf32>
    %165 = vector.broadcast %164 : vector<8x1xf32> to vector<8x128xf32>
    %166 = arith.mulf %165, %163 : vector<8x128xf32>
    %167 = arith.addf %160, %166 : vector<8x128xf32>
    %c5_83 = arith.constant 5 : index
    %c0_84 = arith.constant 0 : index
    %c0_85 = arith.constant 0 : index
    %168 = vector.load %arg6[%c5_83, %c0_84, %c0_85] : memref<12x128x128xbf16, #tpu.memory_space<vmem>>, vector<1x128x128xbf16>
    %169 = vector.shape_cast %168 : vector<1x128x128xbf16> to vector<128x128xbf16>
    %cst_86 = arith.constant dense<0.000000e+00> : vector<8x128xf32>
    %170 = tpu.matmul %130, %169, %cst_86 {dimension_numbers = #tpu.dot_dimension_numbers<[1], [0], [0], [1], [0, 0, 1, 1], [], []>} : vector<8x128xbf16>, vector<128x128xbf16>, vector<8x128xf32> -> vector<8x128xf32>
    %171 = vector.extract_strided_slice %109 {offsets = [0, 5], sizes = [8, 1], strides = [1, 1]} : vector<8x128xf32> to vector<8x1xf32>
    %172 = vector.broadcast %171 : vector<8x1xf32> to vector<8x128xf32>
    %173 = arith.mulf %172, %170 : vector<8x128xf32>
    %174 = arith.addf %167, %173 : vector<8x128xf32>
    %c6_87 = arith.constant 6 : index
    %c0_88 = arith.constant 0 : index
    %c0_89 = arith.constant 0 : index
    %175 = vector.load %arg6[%c6_87, %c0_88, %c0_89] : memref<12x128x128xbf16, #tpu.memory_space<vmem>>, vector<1x128x128xbf16>
    %176 = vector.shape_cast %175 : vector<1x128x128xbf16> to vector<128x128xbf16>
    %cst_90 = arith.constant dense<0.000000e+00> : vector<8x128xf32>
    %177 = tpu.matmul %130, %176, %cst_90 {dimension_numbers = #tpu.dot_dimension_numbers<[1], [0], [0], [1], [0, 0, 1, 1], [], []>} : vector<8x128xbf16>, vector<128x128xbf16>, vector<8x128xf32> -> vector<8x128xf32>
    %178 = vector.extract_strided_slice %109 {offsets = [0, 6], sizes = [8, 1], strides = [1, 1]} : vector<8x128xf32> to vector<8x1xf32>
    %179 = vector.broadcast %178 : vector<8x1xf32> to vector<8x128xf32>
    %180 = arith.mulf %179, %177 : vector<8x128xf32>
    %181 = arith.addf %174, %180 : vector<8x128xf32>
    %c7_91 = arith.constant 7 : index
    %c0_92 = arith.constant 0 : index
    %c0_93 = arith.constant 0 : index
    %182 = vector.load %arg6[%c7_91, %c0_92, %c0_93] : memref<12x128x128xbf16, #tpu.memory_space<vmem>>, vector<1x128x128xbf16>
    %183 = vector.shape_cast %182 : vector<1x128x128xbf16> to vector<128x128xbf16>
    %cst_94 = arith.constant dense<0.000000e+00> : vector<8x128xf32>
    %184 = tpu.matmul %130, %183, %cst_94 {dimension_numbers = #tpu.dot_dimension_numbers<[1], [0], [0], [1], [0, 0, 1, 1], [], []>} : vector<8x128xbf16>, vector<128x128xbf16>, vector<8x128xf32> -> vector<8x128xf32>
    %185 = vector.extract_strided_slice %109 {offsets = [0, 7], sizes = [8, 1], strides = [1, 1]} : vector<8x128xf32> to vector<8x1xf32>
    %186 = vector.broadcast %185 : vector<8x1xf32> to vector<8x128xf32>
    %187 = arith.mulf %186, %184 : vector<8x128xf32>
    %188 = arith.addf %181, %187 : vector<8x128xf32>
    %c8_95 = arith.constant 8 : index
    %c0_96 = arith.constant 0 : index
    %c0_97 = arith.constant 0 : index
    %189 = vector.load %arg6[%c8_95, %c0_96, %c0_97] : memref<12x128x128xbf16, #tpu.memory_space<vmem>>, vector<1x128x128xbf16>
    %190 = vector.shape_cast %189 : vector<1x128x128xbf16> to vector<128x128xbf16>
    %cst_98 = arith.constant dense<0.000000e+00> : vector<8x128xf32>
    %191 = tpu.matmul %130, %190, %cst_98 {dimension_numbers = #tpu.dot_dimension_numbers<[1], [0], [0], [1], [0, 0, 1, 1], [], []>} : vector<8x128xbf16>, vector<128x128xbf16>, vector<8x128xf32> -> vector<8x128xf32>
    %192 = vector.extract_strided_slice %109 {offsets = [0, 8], sizes = [8, 1], strides = [1, 1]} : vector<8x128xf32> to vector<8x1xf32>
    %193 = vector.broadcast %192 : vector<8x1xf32> to vector<8x128xf32>
    %194 = arith.mulf %193, %191 : vector<8x128xf32>
    %195 = arith.addf %188, %194 : vector<8x128xf32>
    %c9_99 = arith.constant 9 : index
    %c0_100 = arith.constant 0 : index
    %c0_101 = arith.constant 0 : index
    %196 = vector.load %arg6[%c9_99, %c0_100, %c0_101] : memref<12x128x128xbf16, #tpu.memory_space<vmem>>, vector<1x128x128xbf16>
    %197 = vector.shape_cast %196 : vector<1x128x128xbf16> to vector<128x128xbf16>
    %cst_102 = arith.constant dense<0.000000e+00> : vector<8x128xf32>
    %198 = tpu.matmul %130, %197, %cst_102 {dimension_numbers = #tpu.dot_dimension_numbers<[1], [0], [0], [1], [0, 0, 1, 1], [], []>} : vector<8x128xbf16>, vector<128x128xbf16>, vector<8x128xf32> -> vector<8x128xf32>
    %199 = vector.extract_strided_slice %109 {offsets = [0, 9], sizes = [8, 1], strides = [1, 1]} : vector<8x128xf32> to vector<8x1xf32>
    %200 = vector.broadcast %199 : vector<8x1xf32> to vector<8x128xf32>
    %201 = arith.mulf %200, %198 : vector<8x128xf32>
    %202 = arith.addf %195, %201 : vector<8x128xf32>
    %c10_103 = arith.constant 10 : index
    %c0_104 = arith.constant 0 : index
    %c0_105 = arith.constant 0 : index
    %203 = vector.load %arg6[%c10_103, %c0_104, %c0_105] : memref<12x128x128xbf16, #tpu.memory_space<vmem>>, vector<1x128x128xbf16>
    %204 = vector.shape_cast %203 : vector<1x128x128xbf16> to vector<128x128xbf16>
    %cst_106 = arith.constant dense<0.000000e+00> : vector<8x128xf32>
    %205 = tpu.matmul %130, %204, %cst_106 {dimension_numbers = #tpu.dot_dimension_numbers<[1], [0], [0], [1], [0, 0, 1, 1], [], []>} : vector<8x128xbf16>, vector<128x128xbf16>, vector<8x128xf32> -> vector<8x128xf32>
    %206 = vector.extract_strided_slice %109 {offsets = [0, 10], sizes = [8, 1], strides = [1, 1]} : vector<8x128xf32> to vector<8x1xf32>
    %207 = vector.broadcast %206 : vector<8x1xf32> to vector<8x128xf32>
    %208 = arith.mulf %207, %205 : vector<8x128xf32>
    %209 = arith.addf %202, %208 : vector<8x128xf32>
    %c11_107 = arith.constant 11 : index
    %c0_108 = arith.constant 0 : index
    %c0_109 = arith.constant 0 : index
    %210 = vector.load %arg6[%c11_107, %c0_108, %c0_109] : memref<12x128x128xbf16, #tpu.memory_space<vmem>>, vector<1x128x128xbf16>
    %211 = vector.shape_cast %210 : vector<1x128x128xbf16> to vector<128x128xbf16>
    %cst_110 = arith.constant dense<0.000000e+00> : vector<8x128xf32>
    %212 = tpu.matmul %130, %211, %cst_110 {dimension_numbers = #tpu.dot_dimension_numbers<[1], [0], [0], [1], [0, 0, 1, 1], [], []>} : vector<8x128xbf16>, vector<128x128xbf16>, vector<8x128xf32> -> vector<8x128xf32>
    %213 = vector.extract_strided_slice %109 {offsets = [0, 11], sizes = [8, 1], strides = [1, 1]} : vector<8x128xf32> to vector<8x1xf32>
    %214 = vector.broadcast %213 : vector<8x1xf32> to vector<8x128xf32>
    %215 = arith.mulf %214, %212 : vector<8x128xf32>
    %216 = arith.addf %209, %215 : vector<8x128xf32>
    %217 = arith.truncf %216 : vector<8x128xf32> to vector<8x128xbf16>
    %c0_111 = arith.constant 0 : index
    %c0_112 = arith.constant 0 : index
    %218 = vector.load %arg2[%c0_111, %c0_112] : memref<128x64xbf16, #tpu.memory_space<vmem>>, vector<128x64xbf16>
    %cst_113 = arith.constant dense<0.000000e+00> : vector<8x64xf32>
    %219 = tpu.matmul %217, %218, %cst_113 {dimension_numbers = #tpu.dot_dimension_numbers<[1], [0], [0], [1], [0, 0, 1, 1], [], []>} : vector<8x128xbf16>, vector<128x64xbf16>, vector<8x64xf32> -> vector<8x64xf32>
    %220 = vector.broadcast %0 : vector<1x64xf32> to vector<8x64xf32>
    %221 = arith.addf %219, %220 : vector<8x64xf32>
    %222 = arith.negf %221 : vector<8x64xf32>
    %223 = math.exp %222 : vector<8x64xf32>
    %cst_114 = arith.constant 1.000000e+00 : f32
    %224 = vector.broadcast %cst_114 : f32 to vector<8x64xf32>
    %225 = arith.addf %224, %223 : vector<8x64xf32>
    %226 = arith.divf %224, %225 : vector<8x64xf32>
    %227 = arith.truncf %226 : vector<8x64xf32> to vector<8x64xbf16>
    %c0_115 = arith.constant 0 : index
    %c0_116 = arith.constant 0 : index
    %228 = vector.load %arg4[%c0_115, %c0_116] : memref<64x128xbf16, #tpu.memory_space<vmem>>, vector<64x128xbf16>
    %cst_117 = arith.constant dense<0.000000e+00> : vector<8x128xf32>
    %229 = tpu.matmul %227, %228, %cst_117 {dimension_numbers = #tpu.dot_dimension_numbers<[1], [0], [0], [1], [0, 0, 1, 1], [], []>} : vector<8x64xbf16>, vector<64x128xbf16>, vector<8x128xf32> -> vector<8x128xf32>
    %230 = vector.broadcast %1 : vector<1x128xf32> to vector<8x128xf32>
    %231 = arith.addf %229, %230 : vector<8x128xf32>
    %232 = arith.negf %231 : vector<8x128xf32>
    %233 = math.exp %232 : vector<8x128xf32>
    %cst_118 = arith.constant 1.000000e+00 : f32
    %234 = vector.broadcast %cst_118 : f32 to vector<8x128xf32>
    %235 = arith.addf %234, %233 : vector<8x128xf32>
    %236 = arith.divf %234, %235 : vector<8x128xf32>
    %237 = arith.truncf %236 : vector<8x128xf32> to vector<8x128xbf16>
    %c0_119 = arith.constant 0 : index
    %c0_120 = arith.constant 0 : index
    %238 = vector.load %arg7[%c0_119, %c0_120] : memref<128x128xbf16, #tpu.memory_space<vmem>>, vector<128x128xbf16>
    %cst_121 = arith.constant dense<0.000000e+00> : vector<8x128xf32>
    %239 = tpu.matmul %217, %238, %cst_121 {dimension_numbers = #tpu.dot_dimension_numbers<[1], [0], [0], [1], [0, 0, 1, 1], [], []>} : vector<8x128xbf16>, vector<128x128xbf16>, vector<8x128xf32> -> vector<8x128xf32>
    %c0_122 = arith.constant 0 : index
    %c0_123 = arith.constant 0 : index
    %c0_124 = arith.constant 0 : index
    %240 = vector.load %arg6[%c0_122, %c0_123, %c0_124] : memref<12x128x128xbf16, #tpu.memory_space<vmem>>, vector<1x128x128xbf16>
    %241 = vector.shape_cast %240 : vector<1x128x128xbf16> to vector<128x128xbf16>
    %cst_125 = arith.constant dense<0.000000e+00> : vector<8x128xf32>
    %242 = tpu.matmul %237, %241, %cst_125 {dimension_numbers = #tpu.dot_dimension_numbers<[1], [0], [0], [1], [0, 0, 1, 1], [], []>} : vector<8x128xbf16>, vector<128x128xbf16>, vector<8x128xf32> -> vector<8x128xf32>
    %243 = vector.extract_strided_slice %216 {offsets = [0, 0], sizes = [8, 1], strides = [1, 1]} : vector<8x128xf32> to vector<8x1xf32>
    %244 = vector.broadcast %243 : vector<8x1xf32> to vector<8x128xf32>
    %245 = arith.mulf %244, %242 : vector<8x128xf32>
    %246 = arith.addf %239, %245 : vector<8x128xf32>
    %c1_126 = arith.constant 1 : index
    %c0_127 = arith.constant 0 : index
    %c0_128 = arith.constant 0 : index
    %247 = vector.load %arg6[%c1_126, %c0_127, %c0_128] : memref<12x128x128xbf16, #tpu.memory_space<vmem>>, vector<1x128x128xbf16>
    %248 = vector.shape_cast %247 : vector<1x128x128xbf16> to vector<128x128xbf16>
    %cst_129 = arith.constant dense<0.000000e+00> : vector<8x128xf32>
    %249 = tpu.matmul %237, %248, %cst_129 {dimension_numbers = #tpu.dot_dimension_numbers<[1], [0], [0], [1], [0, 0, 1, 1], [], []>} : vector<8x128xbf16>, vector<128x128xbf16>, vector<8x128xf32> -> vector<8x128xf32>
    %250 = vector.extract_strided_slice %216 {offsets = [0, 1], sizes = [8, 1], strides = [1, 1]} : vector<8x128xf32> to vector<8x1xf32>
    %251 = vector.broadcast %250 : vector<8x1xf32> to vector<8x128xf32>
    %252 = arith.mulf %251, %249 : vector<8x128xf32>
    %253 = arith.addf %246, %252 : vector<8x128xf32>
    %c2_130 = arith.constant 2 : index
    %c0_131 = arith.constant 0 : index
    %c0_132 = arith.constant 0 : index
    %254 = vector.load %arg6[%c2_130, %c0_131, %c0_132] : memref<12x128x128xbf16, #tpu.memory_space<vmem>>, vector<1x128x128xbf16>
    %255 = vector.shape_cast %254 : vector<1x128x128xbf16> to vector<128x128xbf16>
    %cst_133 = arith.constant dense<0.000000e+00> : vector<8x128xf32>
    %256 = tpu.matmul %237, %255, %cst_133 {dimension_numbers = #tpu.dot_dimension_numbers<[1], [0], [0], [1], [0, 0, 1, 1], [], []>} : vector<8x128xbf16>, vector<128x128xbf16>, vector<8x128xf32> -> vector<8x128xf32>
    %257 = vector.extract_strided_slice %216 {offsets = [0, 2], sizes = [8, 1], strides = [1, 1]} : vector<8x128xf32> to vector<8x1xf32>
    %258 = vector.broadcast %257 : vector<8x1xf32> to vector<8x128xf32>
    %259 = arith.mulf %258, %256 : vector<8x128xf32>
    %260 = arith.addf %253, %259 : vector<8x128xf32>
    %c3_134 = arith.constant 3 : index
    %c0_135 = arith.constant 0 : index
    %c0_136 = arith.constant 0 : index
    %261 = vector.load %arg6[%c3_134, %c0_135, %c0_136] : memref<12x128x128xbf16, #tpu.memory_space<vmem>>, vector<1x128x128xbf16>
    %262 = vector.shape_cast %261 : vector<1x128x128xbf16> to vector<128x128xbf16>
    %cst_137 = arith.constant dense<0.000000e+00> : vector<8x128xf32>
    %263 = tpu.matmul %237, %262, %cst_137 {dimension_numbers = #tpu.dot_dimension_numbers<[1], [0], [0], [1], [0, 0, 1, 1], [], []>} : vector<8x128xbf16>, vector<128x128xbf16>, vector<8x128xf32> -> vector<8x128xf32>
    %264 = vector.extract_strided_slice %216 {offsets = [0, 3], sizes = [8, 1], strides = [1, 1]} : vector<8x128xf32> to vector<8x1xf32>
    %265 = vector.broadcast %264 : vector<8x1xf32> to vector<8x128xf32>
    %266 = arith.mulf %265, %263 : vector<8x128xf32>
    %267 = arith.addf %260, %266 : vector<8x128xf32>
    %c4_138 = arith.constant 4 : index
    %c0_139 = arith.constant 0 : index
    %c0_140 = arith.constant 0 : index
    %268 = vector.load %arg6[%c4_138, %c0_139, %c0_140] : memref<12x128x128xbf16, #tpu.memory_space<vmem>>, vector<1x128x128xbf16>
    %269 = vector.shape_cast %268 : vector<1x128x128xbf16> to vector<128x128xbf16>
    %cst_141 = arith.constant dense<0.000000e+00> : vector<8x128xf32>
    %270 = tpu.matmul %237, %269, %cst_141 {dimension_numbers = #tpu.dot_dimension_numbers<[1], [0], [0], [1], [0, 0, 1, 1], [], []>} : vector<8x128xbf16>, vector<128x128xbf16>, vector<8x128xf32> -> vector<8x128xf32>
    %271 = vector.extract_strided_slice %216 {offsets = [0, 4], sizes = [8, 1], strides = [1, 1]} : vector<8x128xf32> to vector<8x1xf32>
    %272 = vector.broadcast %271 : vector<8x1xf32> to vector<8x128xf32>
    %273 = arith.mulf %272, %270 : vector<8x128xf32>
    %274 = arith.addf %267, %273 : vector<8x128xf32>
    %c5_142 = arith.constant 5 : index
    %c0_143 = arith.constant 0 : index
    %c0_144 = arith.constant 0 : index
    %275 = vector.load %arg6[%c5_142, %c0_143, %c0_144] : memref<12x128x128xbf16, #tpu.memory_space<vmem>>, vector<1x128x128xbf16>
    %276 = vector.shape_cast %275 : vector<1x128x128xbf16> to vector<128x128xbf16>
    %cst_145 = arith.constant dense<0.000000e+00> : vector<8x128xf32>
    %277 = tpu.matmul %237, %276, %cst_145 {dimension_numbers = #tpu.dot_dimension_numbers<[1], [0], [0], [1], [0, 0, 1, 1], [], []>} : vector<8x128xbf16>, vector<128x128xbf16>, vector<8x128xf32> -> vector<8x128xf32>
    %278 = vector.extract_strided_slice %216 {offsets = [0, 5], sizes = [8, 1], strides = [1, 1]} : vector<8x128xf32> to vector<8x1xf32>
    %279 = vector.broadcast %278 : vector<8x1xf32> to vector<8x128xf32>
    %280 = arith.mulf %279, %277 : vector<8x128xf32>
    %281 = arith.addf %274, %280 : vector<8x128xf32>
    %c6_146 = arith.constant 6 : index
    %c0_147 = arith.constant 0 : index
    %c0_148 = arith.constant 0 : index
    %282 = vector.load %arg6[%c6_146, %c0_147, %c0_148] : memref<12x128x128xbf16, #tpu.memory_space<vmem>>, vector<1x128x128xbf16>
    %283 = vector.shape_cast %282 : vector<1x128x128xbf16> to vector<128x128xbf16>
    %cst_149 = arith.constant dense<0.000000e+00> : vector<8x128xf32>
    %284 = tpu.matmul %237, %283, %cst_149 {dimension_numbers = #tpu.dot_dimension_numbers<[1], [0], [0], [1], [0, 0, 1, 1], [], []>} : vector<8x128xbf16>, vector<128x128xbf16>, vector<8x128xf32> -> vector<8x128xf32>
    %285 = vector.extract_strided_slice %216 {offsets = [0, 6], sizes = [8, 1], strides = [1, 1]} : vector<8x128xf32> to vector<8x1xf32>
    %286 = vector.broadcast %285 : vector<8x1xf32> to vector<8x128xf32>
    %287 = arith.mulf %286, %284 : vector<8x128xf32>
    %288 = arith.addf %281, %287 : vector<8x128xf32>
    %c7_150 = arith.constant 7 : index
    %c0_151 = arith.constant 0 : index
    %c0_152 = arith.constant 0 : index
    %289 = vector.load %arg6[%c7_150, %c0_151, %c0_152] : memref<12x128x128xbf16, #tpu.memory_space<vmem>>, vector<1x128x128xbf16>
    %290 = vector.shape_cast %289 : vector<1x128x128xbf16> to vector<128x128xbf16>
    %cst_153 = arith.constant dense<0.000000e+00> : vector<8x128xf32>
    %291 = tpu.matmul %237, %290, %cst_153 {dimension_numbers = #tpu.dot_dimension_numbers<[1], [0], [0], [1], [0, 0, 1, 1], [], []>} : vector<8x128xbf16>, vector<128x128xbf16>, vector<8x128xf32> -> vector<8x128xf32>
    %292 = vector.extract_strided_slice %216 {offsets = [0, 7], sizes = [8, 1], strides = [1, 1]} : vector<8x128xf32> to vector<8x1xf32>
    %293 = vector.broadcast %292 : vector<8x1xf32> to vector<8x128xf32>
    %294 = arith.mulf %293, %291 : vector<8x128xf32>
    %295 = arith.addf %288, %294 : vector<8x128xf32>
    %c8_154 = arith.constant 8 : index
    %c0_155 = arith.constant 0 : index
    %c0_156 = arith.constant 0 : index
    %296 = vector.load %arg6[%c8_154, %c0_155, %c0_156] : memref<12x128x128xbf16, #tpu.memory_space<vmem>>, vector<1x128x128xbf16>
    %297 = vector.shape_cast %296 : vector<1x128x128xbf16> to vector<128x128xbf16>
    %cst_157 = arith.constant dense<0.000000e+00> : vector<8x128xf32>
    %298 = tpu.matmul %237, %297, %cst_157 {dimension_numbers = #tpu.dot_dimension_numbers<[1], [0], [0], [1], [0, 0, 1, 1], [], []>} : vector<8x128xbf16>, vector<128x128xbf16>, vector<8x128xf32> -> vector<8x128xf32>
    %299 = vector.extract_strided_slice %216 {offsets = [0, 8], sizes = [8, 1], strides = [1, 1]} : vector<8x128xf32> to vector<8x1xf32>
    %300 = vector.broadcast %299 : vector<8x1xf32> to vector<8x128xf32>
    %301 = arith.mulf %300, %298 : vector<8x128xf32>
    %302 = arith.addf %295, %301 : vector<8x128xf32>
    %c9_158 = arith.constant 9 : index
    %c0_159 = arith.constant 0 : index
    %c0_160 = arith.constant 0 : index
    %303 = vector.load %arg6[%c9_158, %c0_159, %c0_160] : memref<12x128x128xbf16, #tpu.memory_space<vmem>>, vector<1x128x128xbf16>
    %304 = vector.shape_cast %303 : vector<1x128x128xbf16> to vector<128x128xbf16>
    %cst_161 = arith.constant dense<0.000000e+00> : vector<8x128xf32>
    %305 = tpu.matmul %237, %304, %cst_161 {dimension_numbers = #tpu.dot_dimension_numbers<[1], [0], [0], [1], [0, 0, 1, 1], [], []>} : vector<8x128xbf16>, vector<128x128xbf16>, vector<8x128xf32> -> vector<8x128xf32>
    %306 = vector.extract_strided_slice %216 {offsets = [0, 9], sizes = [8, 1], strides = [1, 1]} : vector<8x128xf32> to vector<8x1xf32>
    %307 = vector.broadcast %306 : vector<8x1xf32> to vector<8x128xf32>
    %308 = arith.mulf %307, %305 : vector<8x128xf32>
    %309 = arith.addf %302, %308 : vector<8x128xf32>
    %c10_162 = arith.constant 10 : index
    %c0_163 = arith.constant 0 : index
    %c0_164 = arith.constant 0 : index
    %310 = vector.load %arg6[%c10_162, %c0_163, %c0_164] : memref<12x128x128xbf16, #tpu.memory_space<vmem>>, vector<1x128x128xbf16>
    %311 = vector.shape_cast %310 : vector<1x128x128xbf16> to vector<128x128xbf16>
    %cst_165 = arith.constant dense<0.000000e+00> : vector<8x128xf32>
    %312 = tpu.matmul %237, %311, %cst_165 {dimension_numbers = #tpu.dot_dimension_numbers<[1], [0], [0], [1], [0, 0, 1, 1], [], []>} : vector<8x128xbf16>, vector<128x128xbf16>, vector<8x128xf32> -> vector<8x128xf32>
    %313 = vector.extract_strided_slice %216 {offsets = [0, 10], sizes = [8, 1], strides = [1, 1]} : vector<8x128xf32> to vector<8x1xf32>
    %314 = vector.broadcast %313 : vector<8x1xf32> to vector<8x128xf32>
    %315 = arith.mulf %314, %312 : vector<8x128xf32>
    %316 = arith.addf %309, %315 : vector<8x128xf32>
    %c11_166 = arith.constant 11 : index
    %c0_167 = arith.constant 0 : index
    %c0_168 = arith.constant 0 : index
    %317 = vector.load %arg6[%c11_166, %c0_167, %c0_168] : memref<12x128x128xbf16, #tpu.memory_space<vmem>>, vector<1x128x128xbf16>
    %318 = vector.shape_cast %317 : vector<1x128x128xbf16> to vector<128x128xbf16>
    %cst_169 = arith.constant dense<0.000000e+00> : vector<8x128xf32>
    %319 = tpu.matmul %237, %318, %cst_169 {dimension_numbers = #tpu.dot_dimension_numbers<[1], [0], [0], [1], [0, 0, 1, 1], [], []>} : vector<8x128xbf16>, vector<128x128xbf16>, vector<8x128xf32> -> vector<8x128xf32>
    %320 = vector.extract_strided_slice %216 {offsets = [0, 11], sizes = [8, 1], strides = [1, 1]} : vector<8x128xf32> to vector<8x1xf32>
    %321 = vector.broadcast %320 : vector<8x1xf32> to vector<8x128xf32>
    %322 = arith.mulf %321, %319 : vector<8x128xf32>
    %323 = arith.addf %316, %322 : vector<8x128xf32>
    %324 = arith.truncf %323 : vector<8x128xf32> to vector<8x128xbf16>
    %c0_170 = arith.constant 0 : index
    %c0_171 = arith.constant 0 : index
    %325 = vector.load %arg8[%c0_170, %c0_171] : memref<128x64xbf16, #tpu.memory_space<vmem>>, vector<128x64xbf16>
    %cst_172 = arith.constant dense<0.000000e+00> : vector<8x64xf32>
    %326 = tpu.matmul %324, %325, %cst_172 {dimension_numbers = #tpu.dot_dimension_numbers<[1], [0], [0], [1], [0, 0, 1, 1], [], []>} : vector<8x128xbf16>, vector<128x64xbf16>, vector<8x64xf32> -> vector<8x64xf32>
    %c0_173 = arith.constant 0 : index
    %c0_174 = arith.constant 0 : index
    %327 = vector.load %arg9[%c0_173, %c0_174] : memref<1x64xf32, #tpu.memory_space<vmem>>, vector<1x64xf32>
    %328 = vector.broadcast %327 : vector<1x64xf32> to vector<8x64xf32>
    %329 = arith.addf %326, %328 : vector<8x64xf32>
    %cst_175 = arith.constant 0.000000e+00 : f32
    %330 = vector.broadcast %cst_175 : f32 to vector<8x64xf32>
    %331 = arith.maximumf %329, %330 : vector<8x64xf32>
    %332 = arith.truncf %331 : vector<8x64xf32> to vector<8x64xbf16>
    %c0_176 = arith.constant 0 : index
    %c0_177 = arith.constant 0 : index
    %333 = vector.load %arg10[%c0_176, %c0_177] : memref<64x128xbf16, #tpu.memory_space<vmem>>, vector<64x128xbf16>
    %cst_178 = arith.constant dense<0.000000e+00> : vector<8x128xf32>
    %334 = tpu.matmul %332, %333, %cst_178 {dimension_numbers = #tpu.dot_dimension_numbers<[1], [0], [0], [1], [0, 0, 1, 1], [], []>} : vector<8x64xbf16>, vector<64x128xbf16>, vector<8x128xf32> -> vector<8x128xf32>
    %c0_179 = arith.constant 0 : index
    %c0_180 = arith.constant 0 : index
    %335 = vector.load %arg11[%c0_179, %c0_180] : memref<1x128xf32, #tpu.memory_space<vmem>>, vector<1x128xf32>
    %336 = vector.broadcast %335 : vector<1x128xf32> to vector<8x128xf32>
    %337 = arith.addf %334, %336 : vector<8x128xf32>
    %cst_181 = arith.constant 0.000000e+00 : f32
    %338 = vector.broadcast %cst_181 : f32 to vector<8x128xf32>
    %339 = arith.maximumf %337, %338 : vector<8x128xf32>
    %340 = arith.truncf %339 : vector<8x128xf32> to vector<8x128xbf16>
    %c0_182 = arith.constant 0 : index
    %c0_183 = arith.constant 0 : index
    %341 = vector.load %arg12[%c0_182, %c0_183] : memref<128x128xbf16, #tpu.memory_space<vmem>>, vector<128x128xbf16>
    %cst_184 = arith.constant dense<0.000000e+00> : vector<8x128xf32>
    %342 = tpu.matmul %340, %341, %cst_184 {dimension_numbers = #tpu.dot_dimension_numbers<[1], [0], [0], [1], [0, 0, 1, 1], [], []>} : vector<8x128xbf16>, vector<128x128xbf16>, vector<8x128xf32> -> vector<8x128xf32>
    %c0_185 = arith.constant 0 : index
    %c0_186 = arith.constant 0 : index
    %343 = vector.load %arg13[%c0_185, %c0_186] : memref<1x128xf32, #tpu.memory_space<vmem>>, vector<1x128xf32>
    %344 = vector.broadcast %343 : vector<1x128xf32> to vector<8x128xf32>
    %345 = arith.addf %342, %344 : vector<8x128xf32>
    %cst_187 = arith.constant 0.000000e+00 : f32
    %346 = vector.broadcast %cst_187 : f32 to vector<8x128xf32>
    %347 = arith.maximumf %345, %346 : vector<8x128xf32>
    %348 = arith.truncf %347 : vector<8x128xf32> to vector<8x128xbf16>
    %c0_188 = arith.constant 0 : index
    %c0_189 = arith.constant 0 : index
    %349 = vector.load %arg14[%c0_188, %c0_189] : memref<128x128xbf16, #tpu.memory_space<vmem>>, vector<128x128xbf16>
    %cst_190 = arith.constant dense<0.000000e+00> : vector<8x128xf32>
    %350 = tpu.matmul %348, %349, %cst_190 {dimension_numbers = #tpu.dot_dimension_numbers<[1], [0], [0], [1], [0, 0, 1, 1], [], []>} : vector<8x128xbf16>, vector<128x128xbf16>, vector<8x128xf32> -> vector<8x128xf32>
    %c0_191 = arith.constant 0 : index
    %c0_192 = arith.constant 0 : index
    %351 = vector.load %arg15[%c0_191, %c0_192] : memref<1x128xf32, #tpu.memory_space<vmem>>, vector<1x128xf32>
    %352 = vector.broadcast %351 : vector<1x128xf32> to vector<8x128xf32>
    %353 = arith.addf %350, %352 : vector<8x128xf32>
    %354 = arith.negf %353 : vector<8x128xf32>
    %355 = math.exp %354 : vector<8x128xf32>
    %cst_193 = arith.constant 1.000000e+00 : f32
    %356 = vector.broadcast %cst_193 : f32 to vector<8x128xf32>
    %357 = arith.addf %356, %355 : vector<8x128xf32>
    %358 = arith.divf %356, %357 : vector<8x128xf32>
    %c0_194 = arith.constant 0 : index
    %c0_195 = arith.constant 0 : index
    %359 = vector.load %arg16[%c0_194, %c0_195] : memref<8x128xf32, #tpu.memory_space<vmem>>, vector<8x128xf32>
    tpu.vector_store %arg16[%c0_194, %c0_195], %358 {strides = array<i32>} : memref<8x128xf32, #tpu.memory_space<vmem>>, vector<8x128xf32>,
    return
  }
  func.func @transform_0(%arg0: i32) -> (i32, i32) {
    %c0_i32 = arith.constant 0 : i32
    %c0_i32_0 = arith.constant 0 : i32
    return %arg0, %c0_i32 : i32, i32
  }
  func.func @transform_1(%arg0: i32) -> (i32, i32) {
    %c0_i32 = arith.constant 0 : i32
    %c0_i32_0 = arith.constant 0 : i32
    %c0_i32_1 = arith.constant 0 : i32
    return %c0_i32, %c0_i32_0 : i32, i32
  }
  func.func @transform_2(%arg0: i32) -> (i32, i32) {
    %c0_i32 = arith.constant 0 : i32
    %c0_i32_0 = arith.constant 0 : i32
    %c0_i32_1 = arith.constant 0 : i32
    return %c0_i32, %c0_i32_0 : i32, i32
  }
  func.func @transform_3(%arg0: i32) -> (i32, i32) {
    %c0_i32 = arith.constant 0 : i32
    %c0_i32_0 = arith.constant 0 : i32
    %c0_i32_1 = arith.constant 0 : i32
    return %c0_i32, %c0_i32_0 : i32, i32
  }
  func.func @transform_4(%arg0: i32) -> (i32, i32) {
    %c0_i32 = arith.constant 0 : i32
    %c0_i32_0 = arith.constant 0 : i32
    %c0_i32_1 = arith.constant 0 : i32
    return %c0_i32, %c0_i32_0 : i32, i32
  }
  func.func @transform_5(%arg0: i32) -> (i32, i32, i32) {
    %c0_i32 = arith.constant 0 : i32
    %c0_i32_0 = arith.constant 0 : i32
    %c0_i32_1 = arith.constant 0 : i32
    %c0_i32_2 = arith.constant 0 : i32
    return %c0_i32, %c0_i32_0, %c0_i32_1 : i32, i32, i32
  }
  func.func @transform_6(%arg0: i32) -> (i32, i32) {
    %c0_i32 = arith.constant 0 : i32
    %c0_i32_0 = arith.constant 0 : i32
    %c0_i32_1 = arith.constant 0 : i32
    return %c0_i32, %c0_i32_0 : i32, i32
  }
  func.func @transform_7(%arg0: i32) -> (i32, i32) {
    %c0_i32 = arith.constant 0 : i32
    %c0_i32_0 = arith.constant 0 : i32
    %c0_i32_1 = arith.constant 0 : i32
    return %c0_i32, %c0_i32_0 : i32, i32
  }
  func.func @transform_8(%arg0: i32) -> (i32, i32) {
    %c0_i32 = arith.constant 0 : i32
    %c0_i32_0 = arith.constant 0 : i32
    %c0_i32_1 = arith.constant 0 : i32
    return %c0_i32, %c0_i32_0 : i32, i32
  }
  func.func @transform_9(%arg0: i32) -> (i32, i32) {
    %c0_i32 = arith.constant 0 : i32
    %c0_i32_0 = arith.constant 0 : i32
    %c0_i32_1 = arith.constant 0 : i32
    return %c0_i32, %c0_i32_0 : i32, i32
  }
  func.func @transform_10(%arg0: i32) -> (i32, i32) {
    %c0_i32 = arith.constant 0 : i32
    %c0_i32_0 = arith.constant 0 : i32
    %c0_i32_1 = arith.constant 0 : i32
    return %c0_i32, %c0_i32_0 : i32, i32
  }
  func.func @transform_11(%arg0: i32) -> (i32, i32) {
    %c0_i32 = arith.constant 0 : i32
    %c0_i32_0 = arith.constant 0 : i32
    %c0_i32_1 = arith.constant 0 : i32
    return %c0_i32, %c0_i32_0 : i32, i32
  }
  func.func @transform_12(%arg0: i32) -> (i32, i32) {
    %c0_i32 = arith.constant 0 : i32
    %c0_i32_0 = arith.constant 0 : i32
    %c0_i32_1 = arith.constant 0 : i32
    return %c0_i32, %c0_i32_0 : i32, i32
  }
  func.func @transform_13(%arg0: i32) -> (i32, i32) {
    %c0_i32 = arith.constant 0 : i32
    %c0_i32_0 = arith.constant 0 : i32
    %c0_i32_1 = arith.constant 0 : i32
    return %c0_i32, %c0_i32_0 : i32, i32
  }
  func.func @transform_14(%arg0: i32) -> (i32, i32) {
    %c0_i32 = arith.constant 0 : i32
    %c0_i32_0 = arith.constant 0 : i32
    %c0_i32_1 = arith.constant 0 : i32
    return %c0_i32, %c0_i32_0 : i32, i32
  }
  func.func @transform_15(%arg0: i32) -> (i32, i32) {
    %c0_i32 = arith.constant 0 : i32
    %c0_i32_0 = arith.constant 0 : i32
    return %arg0, %c0_i32 : i32, i32
  }
}

</mosaic_0001>

<llo_original>
// kernel: tpu_custom_call.1
$region0: #{tpu_custom_call.1}
  #allocation0 [shape = 'u32[]', space=smem, size = 0x4, offset = 0x4, fixed_abs, tag = 'smem constant byte address 0x4 - core index']
  #allocation1 [shape = 'u32[72,128]{1,0:T(1,128)}', space=vmem, size = 0x9000, scoped, tag = 'internal scratch']
  %s0 = inlined_call_operand.hbm [shape: f32[8,128], index: 0, kind: input, shape index: {}]
  %s1 = inlined_call_operand.vmem [shape: bf16[128,64], index: 1, kind: input, shape index: {}]
  %s2 = inlined_call_operand.hbm [shape: f32[1,64], index: 2, kind: input, shape index: {}]
  %s3 = inlined_call_operand.vmem [shape: bf16[64,128], index: 3, kind: input, shape index: {}]
  %s4 = inlined_call_operand.vmem [shape: f32[1,128], index: 4, kind: input, shape index: {}]
  %s5 = inlined_call_operand.hbm [shape: bf16[12,128,128], index: 5, kind: input, shape index: {}]
  %s6 = inlined_call_operand.vmem [shape: bf16[128,128], index: 6, kind: input, shape index: {}]
  %s7 = inlined_call_operand.vmem [shape: bf16[128,64], index: 7, kind: input, shape index: {}]
  %s8 = inlined_call_operand.vmem [shape: f32[1,64], index: 8, kind: input, shape index: {}]
  %s9 = inlined_call_operand.hbm [shape: bf16[64,128], index: 9, kind: input, shape index: {}]
  %s10 = inlined_call_operand.vmem [shape: f32[1,128], index: 10, kind: input, shape index: {}]
  %s11 = inlined_call_operand.vmem [shape: bf16[128,128], index: 11, kind: input, shape index: {}]
  %s12 = inlined_call_operand.vmem [shape: f32[1,128], index: 12, kind: input, shape index: {}]
  %s13 = inlined_call_operand.hbm [shape: bf16[128,128], index: 13, kind: input, shape index: {}]
  %s14 = inlined_call_operand.vmem [shape: f32[1,128], index: 14, kind: input, shape index: {}]
  %s15 = inlined_call_operand.hbm [shape: f32[8,128], index: 15, kind: output, shape index: {}]
  %s16 = sld [smem:[#allocation0]]
  $region90: #{tpu_custom_call.1} parent=0
    _
  %s18 = ssub.s32 1, %s16
  %s19 = scalar_select 0, %s18, %s16
  $region1: #{tpu_custom_call.1} parent=0
    #allocation2 [shape = 'u8[4096]{0}', space=vmem, size = 0x1000, scoped, tag = 'input window, operand 0, single buffered']
    #allocation3 [shape = 's32[1]{0}', space=sflag, size = 0x4, scoped, tag = 'scoped memory for tpu_custom_call.1']
    #allocation4 [shape = 's32[1]{0}', space=sflag, size = 0x4, scoped, tag = 'scoped memory for tpu_custom_call.1']
    #allocation5 [shape = 'u8[512]{0}', space=vmem, size = 0x400, scoped, tag = 'input window, operand 2, single buffered']
    #allocation6 [shape = 's32[1]{0}', space=sflag, size = 0x4, scoped, tag = 'scoped memory for tpu_custom_call.1']
    #allocation7 [shape = 'u8[393216]{0}', space=vmem, size = 0x60000, scoped, tag = 'input window, operand 5, single buffered']
    #allocation8 [shape = 'u8[16384]{0}', space=vmem, size = 0x4000, scoped, tag = 'input window, operand 9, single buffered']
    #allocation9 [shape = 's32[1]{0}', space=sflag, size = 0x4, scoped, tag = 'scoped memory for tpu_custom_call.1']
    #allocation10 [shape = 'u8[32768]{0}', space=vmem, size = 0x8000, scoped, tag = 'input window, operand 13, single buffered']
    #allocation11 [shape = 'u8[4096]{0}', space=vmem, size = 0x1000, scoped, tag = 'output window, operand 0, single buffered']
    %20 = vsyncpa [#allocation3], 0
    %21 = vsyncpa [#allocation6], 0
    %22 = vsyncpa [#allocation9], 0
    %23 = vsyncpa [#allocation4], 0
    // Predicated region
    $region2: #{tpu_custom_call.1} parent=1 // pred_check
      _
    $region3: #{tpu_custom_call.1} parent=1 // pred_check_branch
      %25 = sbr.rel (0) target = $region5
    $region4: #{tpu_custom_call.1} parent=1 // pred_region
      %27 = vsyncadd [#allocation3], 0
      %s29 = sshll.u32 %s0, 4
      %s30 = int_to_ptr.hbm [resolvable:$true] %s29
      %s31 = sshll.u32 [#allocation2], 4
      %s32 = int_to_ptr.vmem [resolvable:$true] %s31
      %34 = dma.hbm_to_vmem [thread:$0]  %s30, 128, %s32, [#allocation3]
    $region5: #{tpu_custom_call.1} parent=1 // pred_fallthru
      _
    // Predicated region
    $region6: #{tpu_custom_call.1} parent=1 // pred_check
      _
    $region7: #{tpu_custom_call.1} parent=1 // pred_check_branch
      %36 = sbr.rel (0) target = $region9
    $region8: #{tpu_custom_call.1} parent=1 // pred_region
      _
    $region9: #{tpu_custom_call.1} parent=1 // pred_fallthru
      _
    // Predicated region
    $region10: #{tpu_custom_call.1} parent=1 // pred_check
      _
    $region11: #{tpu_custom_call.1} parent=1 // pred_check_branch
      %38 = sbr.rel (0) target = $region13
    $region12: #{tpu_custom_call.1} parent=1 // pred_region
      %40 = vsyncadd [#allocation6], 0
      %s42 = sshll.u32 %s2, 4
      %s43 = int_to_ptr.hbm [resolvable:$true] %s42
      %s44 = sshll.u32 [#allocation5], 4
      %s45 = int_to_ptr.vmem [resolvable:$true] %s44
      %47 = dma.hbm_to_vmem [thread:$0]  %s43, 16, %s45, [#allocation6]
    $region13: #{tpu_custom_call.1} parent=1 // pred_fallthru
      _
    // Predicated region
    $region14: #{tpu_custom_call.1} parent=1 // pred_check
      _
    $region15: #{tpu_custom_call.1} parent=1 // pred_check_branch
      %49 = sbr.rel (0) target = $region17
    $region16: #{tpu_custom_call.1} parent=1 // pred_region
      _
    $region17: #{tpu_custom_call.1} parent=1 // pred_fallthru
      _
    // Predicated region
    $region18: #{tpu_custom_call.1} parent=1 // pred_check
      _
    $region19: #{tpu_custom_call.1} parent=1 // pred_check_branch
      %51 = sbr.rel (0) target = $region21
    $region20: #{tpu_custom_call.1} parent=1 // pred_region
      _
    $region21: #{tpu_custom_call.1} parent=1 // pred_fallthru
      _
    // Predicated region
    $region22: #{tpu_custom_call.1} parent=1 // pred_check
      _
    $region23: #{tpu_custom_call.1} parent=1 // pred_check_branch
      %53 = sbr.rel (0) target = $region25
    $region24: #{tpu_custom_call.1} parent=1 // pred_region
      %55 = vsyncadd [#allocation6], 0
      %s56 = sshll.u32 %s5, 4
      %s57 = int_to_ptr.hbm [resolvable:$true] %s56
      %s58 = sshll.u32 [#allocation7], 4
      %s59 = int_to_ptr.vmem [resolvable:$true] %s58
      %64 = dma.hbm_to_vmem [thread:$0]  %s57, 12288, %s59, [#allocation6], 64, 64, 4
    $region25: #{tpu_custom_call.1} parent=1 // pred_fallthru
      _
    // Predicated region
    $region26: #{tpu_custom_call.1} parent=1 // pred_check
      _
    $region27: #{tpu_custom_call.1} parent=1 // pred_check_branch
      %66 = sbr.rel (0) target = $region29
    $region28: #{tpu_custom_call.1} parent=1 // pred_region
      _
    $region29: #{tpu_custom_call.1} parent=1 // pred_fallthru
      _
    // Predicated region
    $region30: #{tpu_custom_call.1} parent=1 // pred_check
      _
    $region31: #{tpu_custom_call.1} parent=1 // pred_check_branch
      %68 = sbr.rel (0) target = $region33
    $region32: #{tpu_custom_call.1} parent=1 // pred_region
      _
    $region33: #{tpu_custom_call.1} parent=1 // pred_fallthru
      _
    // Predicated region
    $region34: #{tpu_custom_call.1} parent=1 // pred_check
      _
    $region35: #{tpu_custom_call.1} parent=1 // pred_check_branch
      %70 = sbr.rel (0) target = $region37
    $region36: #{tpu_custom_call.1} parent=1 // pred_region
      _
    $region37: #{tpu_custom_call.1} parent=1 // pred_fallthru
      _
    // Predicated region
    $region38: #{tpu_custom_call.1} parent=1 // pred_check
      _
    $region39: #{tpu_custom_call.1} parent=1 // pred_check_branch
      %72 = sbr.rel (0) target = $region41
    $region40: #{tpu_custom_call.1} parent=1 // pred_region
      %74 = vsyncadd [#allocation9], 0
      %s75 = sshll.u32 %s9, 4
      %s76 = int_to_ptr.hbm [resolvable:$true] %s75
      %s77 = sshll.u32 [#allocation8], 4
      %s78 = int_to_ptr.vmem [resolvable:$true] %s77
      %83 = dma.hbm_to_vmem [thread:$0]  %s76, 512, %s78, [#allocation9], 64, 64, 4
    $region41: #{tpu_custom_call.1} parent=1 // pred_fallthru
      _
    // Predicated region
    $region42: #{tpu_custom_call.1} parent=1 // pred_check
      _
    $region43: #{tpu_custom_call.1} parent=1 // pred_check_branch
      %85 = sbr.rel (0) target = $region45
    $region44: #{tpu_custom_call.1} parent=1 // pred_region
      _
    $region45: #{tpu_custom_call.1} parent=1 // pred_fallthru
      _
    // Predicated region
    $region46: #{tpu_custom_call.1} parent=1 // pred_check
      _
    $region47: #{tpu_custom_call.1} parent=1 // pred_check_branch
      %87 = sbr.rel (0) target = $region49
    $region48: #{tpu_custom_call.1} parent=1 // pred_region
      _
    $region49: #{tpu_custom_call.1} parent=1 // pred_fallthru
      _
    // Predicated region
    $region50: #{tpu_custom_call.1} parent=1 // pred_check
      _
    $region51: #{tpu_custom_call.1} parent=1 // pred_check_branch
      %89 = sbr.rel (0) target = $region53
    $region52: #{tpu_custom_call.1} parent=1 // pred_region
      _
    $region53: #{tpu_custom_call.1} parent=1 // pred_fallthru
      _
    // Predicated region
    $region54: #{tpu_custom_call.1} parent=1 // pred_check
      _
    $region55: #{tpu_custom_call.1} parent=1 // pred_check_branch
      %91 = sbr.rel (0) target = $region57
    $region56: #{tpu_custom_call.1} parent=1 // pred_region
      %93 = vsyncadd [#allocation9], 0
      %s94 = sshll.u32 %s13, 4
      %s95 = int_to_ptr.hbm [resolvable:$true] %s94
      %s96 = sshll.u32 [#allocation10], 4
      %s97 = int_to_ptr.vmem [resolvable:$true] %s96
      %102 = dma.hbm_to_vmem [thread:$0]  %s95, 1024, %s97, [#allocation9], 64, 64, 4
    $region57: #{tpu_custom_call.1} parent=1 // pred_fallthru
      _
    // Predicated region
    $region58: #{tpu_custom_call.1} parent=1 // pred_check
      _
    $region59: #{tpu_custom_call.1} parent=1 // pred_check_branch
      %104 = sbr.rel (0) target = $region61
    $region60: #{tpu_custom_call.1} parent=1 // pred_region
      _
    $region61: #{tpu_custom_call.1} parent=1 // pred_fallthru
      _
    // Predicated region
    $region62: #{tpu_custom_call.1} parent=1 // pred_check
      _
    $region63: #{tpu_custom_call.1} parent=1 // pred_check_branch
      %106 = sbr.rel (0) target = $region65
    $region64: #{tpu_custom_call.1} parent=1 // pred_region
      %108 = dma.done [#allocation3], 128
    $region65: #{tpu_custom_call.1} parent=1 // pred_fallthru
      _
    // Predicated region
    $region66: #{tpu_custom_call.1} parent=1 // pred_check
      _
    $region67: #{tpu_custom_call.1} parent=1 // pred_check_branch
      %110 = sbr.rel (0) target = $region69
    $region68: #{tpu_custom_call.1} parent=1 // pred_region
      %112 = dma.done [#allocation6], 16
    $region69: #{tpu_custom_call.1} parent=1 // pred_fallthru
      _
    // Predicated region
    $region70: #{tpu_custom_call.1} parent=1 // pred_check
      _
    $region71: #{tpu_custom_call.1} parent=1 // pred_check_branch
      %114 = sbr.rel (0) target = $region73
    $region72: #{tpu_custom_call.1} parent=1 // pred_region
      %116 = dma.done [#allocation6], 12288
    $region73: #{tpu_custom_call.1} parent=1 // pred_fallthru
      _
    // Predicated region
    $region74: #{tpu_custom_call.1} parent=1 // pred_check
      _
    $region75: #{tpu_custom_call.1} parent=1 // pred_check_branch
      %118 = sbr.rel (0) target = $region77
    $region76: #{tpu_custom_call.1} parent=1 // pred_region
      %120 = dma.done [#allocation9], 512
    $region77: #{tpu_custom_call.1} parent=1 // pred_fallthru
      _
    // Predicated region
    $region78: #{tpu_custom_call.1} parent=1 // pred_check
      _
    $region79: #{tpu_custom_call.1} parent=1 // pred_check_branch
      %122 = sbr.rel (0) target = $region81
    $region80: #{tpu_custom_call.1} parent=1 // pred_region
      %124 = dma.done [#allocation9], 1024
    $region81: #{tpu_custom_call.1} parent=1 // pred_fallthru
      _
    %v126 = vld [vmem:[#allocation5] sm:$0x1]
    %v127 = vld [vmem:[%s4] sm:$0x1]
    %v128 = vld [vmem:[#allocation2] sm:$0xff]
    %v129 = vpack.c.bf16 %v128, %v128
    %v130 = vld [vmem:[%s1] sm:$0xf]
    %v131 = vld [vmem:[%s1 + $0x4] sm:$0xf]
    %v132 = vld [vmem:[%s1 + $0x8] sm:$0xf]
    %v133 = vld [vmem:[%s1 + $0xc] sm:$0xf]
    %v134 = vld [vmem:[%s1 + $0x10] sm:$0xf]
    %v135 = vld [vmem:[%s1 + $0x14] sm:$0xf]
    %v136 = vld [vmem:[%s1 + $0x18] sm:$0xf]
    %v137 = vld [vmem:[%s1 + $0x1c] sm:$0xf]
    %v138 = vld [vmem:[%s1 + $0x20] sm:$0xf]
    %v139 = vld [vmem:[%s1 + $0x24] sm:$0xf]
    %v140 = vld [vmem:[%s1 + $0x28] sm:$0xf]
    %v141 = vld [vmem:[%s1 + $0x2c] sm:$0xf]
    %v142 = vld [vmem:[%s1 + $0x30] sm:$0xf]
    %v143 = vld [vmem:[%s1 + $0x34] sm:$0xf]
    %v144 = vld [vmem:[%s1 + $0x38] sm:$0xf]
    %v145 = vld [vmem:[%s1 + $0x3c] sm:$0xf]
    %v147 = vperm.slane %v126, 0
    %v165 = vunpack.c.l.b16 %v130
    %v166 = vunpack.c.l.b16 %v131
    %v167 = vunpack.c.l.b16 %v132
    %v168 = vunpack.c.l.b16 %v133
    %v169 = vunpack.c.l.b16 %v134
    %v170 = vunpack.c.l.b16 %v135
    %v171 = vunpack.c.l.b16 %v136
    %v172 = vunpack.c.l.b16 %v137
    %v173 = vunpack.c.l.b16 %v138
    %v174 = vunpack.c.l.b16 %v139
    %v175 = vunpack.c.l.b16 %v140
    %v176 = vunpack.c.l.b16 %v141
    %v177 = vunpack.c.l.b16 %v142
    %v178 = vunpack.c.l.b16 %v143
    %v179 = vunpack.c.l.b16 %v144
    %v180 = vunpack.c.l.b16 %v145
    %v181 = vpack.c.b16 %v166, %v165
    %v182 = vpack.c.b16 %v168, %v167
    %v183 = vpack.c.b16 %v170, %v169
    %v184 = vpack.c.b16 %v172, %v171
    %v185 = vpack.c.b16 %v174, %v173
    %v186 = vpack.c.b16 %v176, %v175
    %v187 = vpack.c.b16 %v178, %v177
    %v188 = vpack.c.b16 %v180, %v179
    %197 = vmatpush.bf16.msra.mxu0 %v188
    %198 = vmatpush.bf16.msra.mxu0 %v187
    %199 = vmatpush.bf16.msra.mxu0 %v186
    %200 = vmatpush.bf16.msra.mxu0 %v185
    %201 = vmatpush.bf16.msra.mxu0 %v184
    %202 = vmatpush.bf16.msra.mxu0 %v183
    %203 = vmatpush.bf16.msra.mxu0 %v182
    %204 = vmatpush.bf16.msra.mxu0 %v181
    %205 = vmatmul.bf16.gmra.mxu0 %v129
    %v206 = vpop.f32.mrf.mxu0
    %v207 = vadd.f32 %v147, %v206
    %v208 = vpop.f32.mrf.mxu0
    %209 = vdwg.mxu0
    %v210 = vxor.u32 %v207, 2147483648
    %v211 = vmul.f32 %v210, 1.442695
    %v212 = vpow.pop %v211
    %v213 = vadd.f32 %v212, 1.0
    %v214 = vrcp.pop %v213
    %v215 = vmul.f32 %v213, %v214
    %v216 = vsub.f32 1.0, %v215
    %v217 = vmul.f32 %v214, %v216
    %v218 = vadd.f32 %v214, %v217
    %vm219 = vweird.f32 %v213
    %vm220 = vweird.f32 %v214
    %vm221 = vmor %vm219, %vm220
    %v222 = vsel %vm221, %v214, %v218
    %v223 = vand.u32 2147483647, %v213
    %vm224 = vcmp.eq.f32.partialorder %v223, 8.507059e+37
    %v225 = vand.u32 %v213, 2147483648
    %v226 = vor.u32 1.1754944e-38, %v225
    %v227 = vsel %vm224, %v226, %v222
    %v228 = vmul.f32 1.0, %v227
    %v229 = vpack.c.bf16 %v228, %v228
    %v230 = vld [vmem:[%s3] sm:$0xf]
    %v231 = vld [vmem:[%s3 + $0x4] sm:$0xf]
    %v232 = vld [vmem:[%s3 + $0x8] sm:$0xf]
    %v233 = vld [vmem:[%s3 + $0xc] sm:$0xf]
    %v234 = vld [vmem:[%s3 + $0x10] sm:$0xf]
    %v235 = vld [vmem:[%s3 + $0x14] sm:$0xf]
    %v236 = vld [vmem:[%s3 + $0x18] sm:$0xf]
    %v237 = vld [vmem:[%s3 + $0x1c] sm:$0xf]
    %v239 = vperm.slane %v127, 0
    %v249 = vunpack.c.l.b16 %v230
    %v250 = vunpack.c.l.b16 %v231
    %v251 = vunpack.c.l.b16 %v232
    %v252 = vunpack.c.l.b16 %v233
    %v253 = vunpack.c.l.b16 %v234
    %v254 = vunpack.c.l.b16 %v235
    %v255 = vunpack.c.l.b16 %v236
    %v256 = vunpack.c.l.b16 %v237
    %v257 = vpack.c.b16 %v250, %v249
    %v258 = vpack.c.b16 %v252, %v251
    %v259 = vpack.c.b16 %v254, %v253
    %v260 = vpack.c.b16 %v256, %v255
    %vm265 = vcmask 523264
    %v267 = vsel %vm265, %v229, 0
    %269 = vmatpush.bf16.msra.mxu0 0
    %270 = vmatpush.bf16.msra.mxu0 0
    %271 = vmatpush.bf16.msra.mxu0 0
    %272 = vmatpush.bf16.msra.mxu0 0
    %273 = vmatpush.bf16.msra.mxu0 %v260
    %274 = vmatpush.bf16.msra.mxu0 %v259
    %275 = vmatpush.bf16.msra.mxu0 %v258
    %276 = vmatpush.bf16.msra.mxu0 %v257
    %277 = vmatmul.bf16.gmra.mxu0 %v267
    %v278 = vpop.f32.mrf.mxu0
    %v279 = vadd.f32 %v239, %v278
    %v280 = vpop.f32.mrf.mxu0
    %281 = vdwg.mxu0
    %v282 = vxor.u32 %v279, 2147483648
    %v283 = vmul.f32 %v282, 1.442695
    %v284 = vpow.pop %v283
    %v285 = vadd.f32 %v284, 1.0
    %v286 = vrcp.pop %v285
    %v287 = vmul.f32 %v285, %v286
    %v288 = vsub.f32 1.0, %v287
    %v289 = vmul.f32 %v286, %v288
    %v290 = vadd.f32 %v286, %v289
    %vm291 = vweird.f32 %v285
    %vm292 = vweird.f32 %v286
    %vm293 = vmor %vm291, %vm292
    %v294 = vsel %vm293, %v286, %v290
    %v295 = vand.u32 2147483647, %v285
    %vm296 = vcmp.eq.f32.partialorder %v295, 8.507059e+37
    %v297 = vand.u32 %v285, 2147483648
    %v298 = vor.u32 1.1754944e-38, %v297
    %v299 = vsel %vm296, %v298, %v294
    %v300 = vmul.f32 1.0, %v299
    %v301 = vpack.c.bf16 %v300, %v300
    %v302 = vld [vmem:[%s6] sm:$0xf]
    %v303 = vld [vmem:[%s6 + $0x4] sm:$0xf]
    %v304 = vld [vmem:[%s6 + $0x8] sm:$0xf]
    %v305 = vld [vmem:[%s6 + $0xc] sm:$0xf]
    %v306 = vld [vmem:[%s6 + $0x10] sm:$0xf]
    %v307 = vld [vmem:[%s6 + $0x14] sm:$0xf]
    %v308 = vld [vmem:[%s6 + $0x18] sm:$0xf]
    %v309 = vld [vmem:[%s6 + $0x1c] sm:$0xf]
    %v310 = vld [vmem:[%s6 + $0x20] sm:$0xf]
    %v311 = vld [vmem:[%s6 + $0x24] sm:$0xf]
    %v312 = vld [vmem:[%s6 + $0x28] sm:$0xf]
    %v313 = vld [vmem:[%s6 + $0x2c] sm:$0xf]
    %v314 = vld [vmem:[%s6 + $0x30] sm:$0xf]
    %v315 = vld [vmem:[%s6 + $0x34] sm:$0xf]
    %v316 = vld [vmem:[%s6 + $0x38] sm:$0xf]
    %v317 = vld [vmem:[%s6 + $0x3c] sm:$0xf]
    %v318 = vld [vmem:[#allocation7] sm:$0xf]
    %v319 = vld [vmem:[#allocation7 + $0x4] sm:$0xf]
    %v320 = vld [vmem:[#allocation7 + $0x8] sm:$0xf]
    %v321 = vld [vmem:[#allocation7 + $0xc] sm:$0xf]
    %v322 = vld [vmem:[#allocation7 + $0x10] sm:$0xf]
    %v323 = vld [vmem:[#allocation7 + $0x14] sm:$0xf]
    %v324 = vld [vmem:[#allocation7 + $0x18] sm:$0xf]
    %v325 = vld [vmem:[#allocation7 + $0x1c] sm:$0xf]
    %v326 = vld [vmem:[#allocation7 + $0x20] sm:$0xf]
    %v327 = vld [vmem:[#allocation7 + $0x24] sm:$0xf]
    %v328 = vld [vmem:[#allocation7 + $0x28] sm:$0xf]
    %v329 = vld [vmem:[#allocation7 + $0x2c] sm:$0xf]
    %v330 = vld [vmem:[#allocation7 + $0x30] sm:$0xf]
    %v331 = vld [vmem:[#allocation7 + $0x34] sm:$0xf]
    %v332 = vld [vmem:[#allocation7 + $0x38] sm:$0xf]
    %v333 = vld [vmem:[#allocation7 + $0x3c] sm:$0xf]
    %v350 = vunpack.c.l.b16 %v318
    %v351 = vunpack.c.l.b16 %v319
    %v352 = vunpack.c.l.b16 %v320
    %v353 = vunpack.c.l.b16 %v321
    %v354 = vunpack.c.l.b16 %v322
    %v355 = vunpack.c.l.b16 %v323
    %v356 = vunpack.c.l.b16 %v324
    %v357 = vunpack.c.l.b16 %v325
    %v358 = vunpack.c.l.b16 %v326
    %v359 = vunpack.c.l.b16 %v327
    %v360 = vunpack.c.l.b16 %v328
    %v361 = vunpack.c.l.b16 %v329
    %v362 = vunpack.c.l.b16 %v330
    %v363 = vunpack.c.l.b16 %v331
    %v364 = vunpack.c.l.b16 %v332
    %v365 = vunpack.c.l.b16 %v333
    %v366 = vpack.c.b16 %v351, %v350
    %v367 = vpack.c.b16 %v353, %v352
    %v368 = vpack.c.b16 %v355, %v354
    %v369 = vpack.c.b16 %v357, %v356
    %v370 = vpack.c.b16 %v359, %v358
    %v371 = vpack.c.b16 %v361, %v360
    %v372 = vpack.c.b16 %v363, %v362
    %v373 = vpack.c.b16 %v365, %v364
    %382 = vmatpush.bf16.msra.mxu0 %v373
    %383 = vmatpush.bf16.msra.mxu0 %v372
    %384 = vmatpush.bf16.msra.mxu0 %v371
    %385 = vmatpush.bf16.msra.mxu0 %v370
    %386 = vmatpush.bf16.msra.mxu0 %v369
    %387 = vmatpush.bf16.msra.mxu0 %v368
    %388 = vmatpush.bf16.msra.mxu0 %v367
    %389 = vmatpush.bf16.msra.mxu0 %v366
    %390 = vmatmul.bf16.gmra.mxu0 %v301
    %v391 = vpop.f32.mrf.mxu0
    %v392 = vadd.f32 0.0, %v391
    %v393 = vpop.f32.mrf.mxu0
    %394 = vdwg.mxu0
    %396 = vset.pattern.permute.xlu0 0
    %397 = vperm.xlu0 %396, %v128
    %v398 = vpop.permute.xlu0 %397
    %v400 = vmul.f32 %v398, %v392
    %v417 = vunpack.c.l.b16 %v302
    %v418 = vunpack.c.l.b16 %v303
    %v419 = vunpack.c.l.b16 %v304
    %v420 = vunpack.c.l.b16 %v305
    %v421 = vunpack.c.l.b16 %v306
    %v422 = vunpack.c.l.b16 %v307
    %v423 = vunpack.c.l.b16 %v308
    %v424 = vunpack.c.l.b16 %v309
    %v425 = vunpack.c.l.b16 %v310
    %v426 = vunpack.c.l.b16 %v311
    %v427 = vunpack.c.l.b16 %v312
    %v428 = vunpack.c.l.b16 %v313
    %v429 = vunpack.c.l.b16 %v314
    %v430 = vunpack.c.l.b16 %v315
    %v431 = vunpack.c.l.b16 %v316
    %v432 = vunpack.c.l.b16 %v317
    %v433 = vpack.c.b16 %v418, %v417
    %v434 = vpack.c.b16 %v420, %v419
    %v435 = vpack.c.b16 %v422, %v421
    %v436 = vpack.c.b16 %v424, %v423
    %v437 = vpack.c.b16 %v426, %v425
    %v438 = vpack.c.b16 %v428, %v427
    %v439 = vpack.c.b16 %v430, %v429
    %v440 = vpack.c.b16 %v432, %v431
    %449 = vmatpush.bf16.msra.mxu0 %v440
    %450 = vmatpush.bf16.msra.mxu0 %v439
    %451 = vmatpush.bf16.msra.mxu0 %v438
    %452 = vmatpush.bf16.msra.mxu0 %v437
    %453 = vmatpush.bf16.msra.mxu0 %v436
    %454 = vmatpush.bf16.msra.mxu0 %v435
    %455 = vmatpush.bf16.msra.mxu0 %v434
    %456 = vmatpush.bf16.msra.mxu0 %v433
    %457 = vmatmul.bf16.gmra.mxu0 %v129
    %v458 = vpop.f32.mrf.mxu0
    %v459 = vadd.f32 %v400, %v458
    %v460 = vpop.f32.mrf.mxu0
    %461 = vdwg.mxu0
    %s462 = scalar_lea.vmem [#allocation7], 64
    %v463 = vld [vmem:[%s462] sm:$0xf]
    %v464 = vld [vmem:[%s462 + $0x4] sm:$0xf]
    %v465 = vld [vmem:[%s462 + $0x8] sm:$0xf]
    %v466 = vld [vmem:[%s462 + $0xc] sm:$0xf]
    %v467 = vld [vmem:[%s462 + $0x10] sm:$0xf]
    %v468 = vld [vmem:[%s462 + $0x14] sm:$0xf]
    %v469 = vld [vmem:[%s462 + $0x18] sm:$0xf]
    %v470 = vld [vmem:[%s462 + $0x1c] sm:$0xf]
    %v471 = vld [vmem:[%s462 + $0x20] sm:$0xf]
    %v472 = vld [vmem:[%s462 + $0x24] sm:$0xf]
    %v473 = vld [vmem:[%s462 + $0x28] sm:$0xf]
    %v474 = vld [vmem:[%s462 + $0x2c] sm:$0xf]
    %v475 = vld [vmem:[%s462 + $0x30] sm:$0xf]
    %v476 = vld [vmem:[%s462 + $0x34] sm:$0xf]
    %v477 = vld [vmem:[%s462 + $0x38] sm:$0xf]
    %v478 = vld [vmem:[%s462 + $0x3c] sm:$0xf]
    %v495 = vunpack.c.l.b16 %v463
    %v496 = vunpack.c.l.b16 %v464
    %v497 = vunpack.c.l.b16 %v465
    %v498 = vunpack.c.l.b16 %v466
    %v499 = vunpack.c.l.b16 %v467
    %v500 = vunpack.c.l.b16 %v468
    %v501 = vunpack.c.l.b16 %v469
    %v502 = vunpack.c.l.b16 %v470
    %v503 = vunpack.c.l.b16 %v471
    %v504 = vunpack.c.l.b16 %v472
    %v505 = vunpack.c.l.b16 %v473
    %v506 = vunpack.c.l.b16 %v474
    %v507 = vunpack.c.l.b16 %v475
    %v508 = vunpack.c.l.b16 %v476
    %v509 = vunpack.c.l.b16 %v477
    %v510 = vunpack.c.l.b16 %v478
    %v511 = vpack.c.b16 %v496, %v495
    %v512 = vpack.c.b16 %v498, %v497
    %v513 = vpack.c.b16 %v500, %v499
    %v514 = vpack.c.b16 %v502, %v501
    %v515 = vpack.c.b16 %v504, %v503
    %v516 = vpack.c.b16 %v506, %v505
    %v517 = vpack.c.b16 %v508, %v507
    %v518 = vpack.c.b16 %v510, %v509
    %527 = vmatpush.bf16.msra.mxu0 %v518
    %528 = vmatpush.bf16.msra.mxu0 %v517
    %529 = vmatpush.bf16.msra.mxu0 %v516
    %530 = vmatpush.bf16.msra.mxu0 %v515
    %531 = vmatpush.bf16.msra.mxu0 %v514
    %532 = vmatpush.bf16.msra.mxu0 %v513
    %533 = vmatpush.bf16.msra.mxu0 %v512
    %534 = vmatpush.bf16.msra.mxu0 %v511
    %535 = vmatmul.bf16.gmra.mxu0 %v301
    %v536 = vpop.f32.mrf.mxu0
    %v537 = vadd.f32 0.0, %v536
    %v538 = vpop.f32.mrf.mxu0
    %539 = vdwg.mxu0
    %540 = vset.pattern.permute.xlu0 1
    %541 = vperm.xlu0 %540, %v128
    %v542 = vpop.permute.xlu0 %541
    %v544 = vmul.f32 %v542, %v537
    %v545 = vadd.f32 %v459, %v544
    %s546 = scalar_lea.vmem [#allocation7], 128
    %v547 = vld [vmem:[%s546] sm:$0xf]
    %v548 = vld [vmem:[%s546 + $0x4] sm:$0xf]
    %v549 = vld [vmem:[%s546 + $0x8] sm:$0xf]
    %v550 = vld [vmem:[%s546 + $0xc] sm:$0xf]
    %v551 = vld [vmem:[%s546 + $0x10] sm:$0xf]
    %v552 = vld [vmem:[%s546 + $0x14] sm:$0xf]
    %v553 = vld [vmem:[%s546 + $0x18] sm:$0xf]
    %v554 = vld [vmem:[%s546 + $0x1c] sm:$0xf]
    %v555 = vld [vmem:[%s546 + $0x20] sm:$0xf]
    %v556 = vld [vmem:[%s546 + $0x24] sm:$0xf]
    %v557 = vld [vmem:[%s546 + $0x28] sm:$0xf]
    %v558 = vld [vmem:[%s546 + $0x2c] sm:$0xf]
    %v559 = vld [vmem:[%s546 + $0x30] sm:$0xf]
    %v560 = vld [vmem:[%s546 + $0x34] sm:$0xf]
    %v561 = vld [vmem:[%s546 + $0x38] sm:$0xf]
    %v562 = vld [vmem:[%s546 + $0x3c] sm:$0xf]
    %v579 = vunpack.c.l.b16 %v547
    %v580 = vunpack.c.l.b16 %v548
    %v581 = vunpack.c.l.b16 %v549
    %v582 = vunpack.c.l.b16 %v550
    %v583 = vunpack.c.l.b16 %v551
    %v584 = vunpack.c.l.b16 %v552
    %v585 = vunpack.c.l.b16 %v553
    %v586 = vunpack.c.l.b16 %v554
    %v587 = vunpack.c.l.b16 %v555
    %v588 = vunpack.c.l.b16 %v556
    %v589 = vunpack.c.l.b16 %v557
    %v590 = vunpack.c.l.b16 %v558
    %v591 = vunpack.c.l.b16 %v559
    %v592 = vunpack.c.l.b16 %v560
    %v593 = vunpack.c.l.b16 %v561
    %v594 = vunpack.c.l.b16 %v562
    %v595 = vpack.c.b16 %v580, %v579
    %v596 = vpack.c.b16 %v582, %v581
    %v597 = vpack.c.b16 %v584, %v583
    %v598 = vpack.c.b16 %v586, %v585
    %v599 = vpack.c.b16 %v588, %v587
    %v600 = vpack.c.b16 %v590, %v589
    %v601 = vpack.c.b16 %v592, %v591
    %v602 = vpack.c.b16 %v594, %v593
    %611 = vmatpush.bf16.msra.mxu0 %v602
    %612 = vmatpush.bf16.msra.mxu0 %v601
    %613 = vmatpush.bf16.msra.mxu0 %v600
    %614 = vmatpush.bf16.msra.mxu0 %v599
    %615 = vmatpush.bf16.msra.mxu0 %v598
    %616 = vmatpush.bf16.msra.mxu0 %v597
    %617 = vmatpush.bf16.msra.mxu0 %v596
    %618 = vmatpush.bf16.msra.mxu0 %v595
    %619 = vmatmul.bf16.gmra.mxu0 %v301
    %v620 = vpop.f32.mrf.mxu0
    %v621 = vadd.f32 0.0, %v620
    %v622 = vpop.f32.mrf.mxu0
    %623 = vdwg.mxu0
    %624 = vset.pattern.permute.xlu0 2
    %625 = vperm.xlu0 %624, %v128
    %v626 = vpop.permute.xlu0 %625
    %v628 = vmul.f32 %v626, %v621
    %v629 = vadd.f32 %v545, %v628
    %s630 = scalar_lea.vmem [#allocation7], 192
    %v631 = vld [vmem:[%s630] sm:$0xf]
    %v632 = vld [vmem:[%s630 + $0x4] sm:$0xf]
    %v633 = vld [vmem:[%s630 + $0x8] sm:$0xf]
    %v634 = vld [vmem:[%s630 + $0xc] sm:$0xf]
    %v635 = vld [vmem:[%s630 + $0x10] sm:$0xf]
    %v636 = vld [vmem:[%s630 + $0x14] sm:$0xf]
    %v637 = vld [vmem:[%s630 + $0x18] sm:$0xf]
    %v638 = vld [vmem:[%s630 + $0x1c] sm:$0xf]
    %v639 = vld [vmem:[%s630 + $0x20] sm:$0xf]
    %v640 = vld [vmem:[%s630 + $0x24] sm:$0xf]
    %v641 = vld [vmem:[%s630 + $0x28] sm:$0xf]
    %v642 = vld [vmem:[%s630 + $0x2c] sm:$0xf]
    %v643 = vld [vmem:[%s630 + $0x30] sm:$0xf]
    %v644 = vld [vmem:[%s630 + $0x34] sm:$0xf]
    %v645 = vld [vmem:[%s630 + $0x38] sm:$0xf]
    %v646 = vld [vmem:[%s630 + $0x3c] sm:$0xf]
    %v663 = vunpack.c.l.b16 %v631
    %v664 = vunpack.c.l.b16 %v632
    %v665 = vunpack.c.l.b16 %v633
    %v666 = vunpack.c.l.b16 %v634
    %v667 = vunpack.c.l.b16 %v635
    %v668 = vunpack.c.l.b16 %v636
    %v669 = vunpack.c.l.b16 %v637
    %v670 = vunpack.c.l.b16 %v638
    %v671 = vunpack.c.l.b16 %v639
    %v672 = vunpack.c.l.b16 %v640
    %v673 = vunpack.c.l.b16 %v641
    %v674 = vunpack.c.l.b16 %v642
    %v675 = vunpack.c.l.b16 %v643
    %v676 = vunpack.c.l.b16 %v644
    %v677 = vunpack.c.l.b16 %v645
    %v678 = vunpack.c.l.b16 %v646
    %v679 = vpack.c.b16 %v664, %v663
    %v680 = vpack.c.b16 %v666, %v665
    %v681 = vpack.c.b16 %v668, %v667
    %v682 = vpack.c.b16 %v670, %v669
    %v683 = vpack.c.b16 %v672, %v671
    %v684 = vpack.c.b16 %v674, %v673
    %v685 = vpack.c.b16 %v676, %v675
    %v686 = vpack.c.b16 %v678, %v677
    %695 = vmatpush.bf16.msra.mxu0 %v686
    %696 = vmatpush.bf16.msra.mxu0 %v685
    %697 = vmatpush.bf16.msra.mxu0 %v684
    %698 = vmatpush.bf16.msra.mxu0 %v683
    %699 = vmatpush.bf16.msra.mxu0 %v682
    %700 = vmatpush.bf16.msra.mxu0 %v681
    %701 = vmatpush.bf16.msra.mxu0 %v680
    %702 = vmatpush.bf16.msra.mxu0 %v679
    %703 = vmatmul.bf16.gmra.mxu0 %v301
    %v704 = vpop.f32.mrf.mxu0
    %v705 = vadd.f32 0.0, %v704
    %v706 = vpop.f32.mrf.mxu0
    %707 = vdwg.mxu0
    %708 = vset.pattern.permute.xlu0 3
    %709 = vperm.xlu0 %708, %v128
    %v710 = vpop.permute.xlu0 %709
    %v712 = vmul.f32 %v710, %v705
    %v713 = vadd.f32 %v629, %v712
    %s714 = scalar_lea.vmem [#allocation7], 256
    %v715 = vld [vmem:[%s714] sm:$0xf]
    %v716 = vld [vmem:[%s714 + $0x4] sm:$0xf]
    %v717 = vld [vmem:[%s714 + $0x8] sm:$0xf]
    %v718 = vld [vmem:[%s714 + $0xc] sm:$0xf]
    %v719 = vld [vmem:[%s714 + $0x10] sm:$0xf]
    %v720 = vld [vmem:[%s714 + $0x14] sm:$0xf]
    %v721 = vld [vmem:[%s714 + $0x18] sm:$0xf]
    %v722 = vld [vmem:[%s714 + $0x1c] sm:$0xf]
    %v723 = vld [vmem:[%s714 + $0x20] sm:$0xf]
    %v724 = vld [vmem:[%s714 + $0x24] sm:$0xf]
    %v725 = vld [vmem:[%s714 + $0x28] sm:$0xf]
    %v726 = vld [vmem:[%s714 + $0x2c] sm:$0xf]
    %v727 = vld [vmem:[%s714 + $0x30] sm:$0xf]
    %v728 = vld [vmem:[%s714 + $0x34] sm:$0xf]
    %v729 = vld [vmem:[%s714 + $0x38] sm:$0xf]
    %v730 = vld [vmem:[%s714 + $0x3c] sm:$0xf]
    %v747 = vunpack.c.l.b16 %v715
    %v748 = vunpack.c.l.b16 %v716
    %v749 = vunpack.c.l.b16 %v717
    %v750 = vunpack.c.l.b16 %v718
    %v751 = vunpack.c.l.b16 %v719
    %v752 = vunpack.c.l.b16 %v720
    %v753 = vunpack.c.l.b16 %v721
    %v754 = vunpack.c.l.b16 %v722
    %v755 = vunpack.c.l.b16 %v723
    %v756 = vunpack.c.l.b16 %v724
    %v757 = vunpack.c.l.b16 %v725
    %v758 = vunpack.c.l.b16 %v726
    %v759 = vunpack.c.l.b16 %v727
    %v760 = vunpack.c.l.b16 %v728
    %v761 = vunpack.c.l.b16 %v729
    %v762 = vunpack.c.l.b16 %v730
    %v763 = vpack.c.b16 %v748, %v747
    %v764 = vpack.c.b16 %v750, %v749
    %v765 = vpack.c.b16 %v752, %v751
    %v766 = vpack.c.b16 %v754, %v753
    %v767 = vpack.c.b16 %v756, %v755
    %v768 = vpack.c.b16 %v758, %v757
    %v769 = vpack.c.b16 %v760, %v759
    %v770 = vpack.c.b16 %v762, %v761
    %779 = vmatpush.bf16.msra.mxu0 %v770
    %780 = vmatpush.bf16.msra.mxu0 %v769
    %781 = vmatpush.bf16.msra.mxu0 %v768
    %782 = vmatpush.bf16.msra.mxu0 %v767
    %783 = vmatpush.bf16.msra.mxu0 %v766
    %784 = vmatpush.bf16.msra.mxu0 %v765
    %785 = vmatpush.bf16.msra.mxu0 %v764
    %786 = vmatpush.bf16.msra.mxu0 %v763
    %787 = vmatmul.bf16.gmra.mxu0 %v301
    %v788 = vpop.f32.mrf.mxu0
    %v789 = vadd.f32 0.0, %v788
    %v790 = vpop.f32.mrf.mxu0
    %791 = vdwg.mxu0
    %792 = vset.pattern.permute.xlu0 4
    %793 = vperm.xlu0 %792, %v128
    %v794 = vpop.permute.xlu0 %793
    %v796 = vmul.f32 %v794, %v789
    %v797 = vadd.f32 %v713, %v796
    %s798 = scalar_lea.vmem [#allocation7], 320
    %v799 = vld [vmem:[%s798] sm:$0xf]
    %v800 = vld [vmem:[%s798 + $0x4] sm:$0xf]
    %v801 = vld [vmem:[%s798 + $0x8] sm:$0xf]
    %v802 = vld [vmem:[%s798 + $0xc] sm:$0xf]
    %v803 = vld [vmem:[%s798 + $0x10] sm:$0xf]
    %v804 = vld [vmem:[%s798 + $0x14] sm:$0xf]
    %v805 = vld [vmem:[%s798 + $0x18] sm:$0xf]
    %v806 = vld [vmem:[%s798 + $0x1c] sm:$0xf]
    %v807 = vld [vmem:[%s798 + $0x20] sm:$0xf]
    %v808 = vld [vmem:[%s798 + $0x24] sm:$0xf]
    %v809 = vld [vmem:[%s798 + $0x28] sm:$0xf]
    %v810 = vld [vmem:[%s798 + $0x2c] sm:$0xf]
    %v811 = vld [vmem:[%s798 + $0x30] sm:$0xf]
    %v812 = vld [vmem:[%s798 + $0x34] sm:$0xf]
    %v813 = vld [vmem:[%s798 + $0x38] sm:$0xf]
    %v814 = vld [vmem:[%s798 + $0x3c] sm:$0xf]
    %v831 = vunpack.c.l.b16 %v799
    %v832 = vunpack.c.l.b16 %v800
    %v833 = vunpack.c.l.b16 %v801
    %v834 = vunpack.c.l.b16 %v802
    %v835 = vunpack.c.l.b16 %v803
    %v836 = vunpack.c.l.b16 %v804
    %v837 = vunpack.c.l.b16 %v805
    %v838 = vunpack.c.l.b16 %v806
    %v839 = vunpack.c.l.b16 %v807
    %v840 = vunpack.c.l.b16 %v808
    %v841 = vunpack.c.l.b16 %v809
    %v842 = vunpack.c.l.b16 %v810
    %v843 = vunpack.c.l.b16 %v811
    %v844 = vunpack.c.l.b16 %v812
    %v845 = vunpack.c.l.b16 %v813
    %v846 = vunpack.c.l.b16 %v814
    %v847 = vpack.c.b16 %v832, %v831
    %v848 = vpack.c.b16 %v834, %v833
    %v849 = vpack.c.b16 %v836, %v835
    %v850 = vpack.c.b16 %v838, %v837
    %v851 = vpack.c.b16 %v840, %v839
    %v852 = vpack.c.b16 %v842, %v841
    %v853 = vpack.c.b16 %v844, %v843
    %v854 = vpack.c.b16 %v846, %v845
    %863 = vmatpush.bf16.msra.mxu0 %v854
    %864 = vmatpush.bf16.msra.mxu0 %v853
    %865 = vmatpush.bf16.msra.mxu0 %v852
    %866 = vmatpush.bf16.msra.mxu0 %v851
    %867 = vmatpush.bf16.msra.mxu0 %v850
    %868 = vmatpush.bf16.msra.mxu0 %v849
    %869 = vmatpush.bf16.msra.mxu0 %v848
    %870 = vmatpush.bf16.msra.mxu0 %v847
    %871 = vmatmul.bf16.gmra.mxu0 %v301
    %v872 = vpop.f32.mrf.mxu0
    %v873 = vadd.f32 0.0, %v872
    %v874 = vpop.f32.mrf.mxu0
    %875 = vdwg.mxu0
    %876 = vset.pattern.permute.xlu0 5
    %877 = vperm.xlu0 %876, %v128
    %v878 = vpop.permute.xlu0 %877
    %v880 = vmul.f32 %v878, %v873
    %v881 = vadd.f32 %v797, %v880
    %s882 = scalar_lea.vmem [#allocation7], 384
    %v883 = vld [vmem:[%s882] sm:$0xf]
    %v884 = vld [vmem:[%s882 + $0x4] sm:$0xf]
    %v885 = vld [vmem:[%s882 + $0x8] sm:$0xf]
    %v886 = vld [vmem:[%s882 + $0xc] sm:$0xf]
    %v887 = vld [vmem:[%s882 + $0x10] sm:$0xf]
    %v888 = vld [vmem:[%s882 + $0x14] sm:$0xf]
    %v889 = vld [vmem:[%s882 + $0x18] sm:$0xf]
    %v890 = vld [vmem:[%s882 + $0x1c] sm:$0xf]
    %v891 = vld [vmem:[%s882 + $0x20] sm:$0xf]
    %v892 = vld [vmem:[%s882 + $0x24] sm:$0xf]
    %v893 = vld [vmem:[%s882 + $0x28] sm:$0xf]
    %v894 = vld [vmem:[%s882 + $0x2c] sm:$0xf]
    %v895 = vld [vmem:[%s882 + $0x30] sm:$0xf]
    %v896 = vld [vmem:[%s882 + $0x34] sm:$0xf]
    %v897 = vld [vmem:[%s882 + $0x38] sm:$0xf]
    %v898 = vld [vmem:[%s882 + $0x3c] sm:$0xf]
    %v915 = vunpack.c.l.b16 %v883
    %v916 = vunpack.c.l.b16 %v884
    %v917 = vunpack.c.l.b16 %v885
    %v918 = vunpack.c.l.b16 %v886
    %v919 = vunpack.c.l.b16 %v887
    %v920 = vunpack.c.l.b16 %v888
    %v921 = vunpack.c.l.b16 %v889
    %v922 = vunpack.c.l.b16 %v890
    %v923 = vunpack.c.l.b16 %v891
    %v924 = vunpack.c.l.b16 %v892
    %v925 = vunpack.c.l.b16 %v893
    %v926 = vunpack.c.l.b16 %v894
    %v927 = vunpack.c.l.b16 %v895
    %v928 = vunpack.c.l.b16 %v896
    %v929 = vunpack.c.l.b16 %v897
    %v930 = vunpack.c.l.b16 %v898
    %v931 = vpack.c.b16 %v916, %v915
    %v932 = vpack.c.b16 %v918, %v917
    %v933 = vpack.c.b16 %v920, %v919
    %v934 = vpack.c.b16 %v922, %v921
    %v935 = vpack.c.b16 %v924, %v923
    %v936 = vpack.c.b16 %v926, %v925
    %v937 = vpack.c.b16 %v928, %v927
    %v938 = vpack.c.b16 %v930, %v929
    %947 = vmatpush.bf16.msra.mxu0 %v938
    %948 = vmatpush.bf16.msra.mxu0 %v937
    %949 = vmatpush.bf16.msra.mxu0 %v936
    %950 = vmatpush.bf16.msra.mxu0 %v935
    %951 = vmatpush.bf16.msra.mxu0 %v934
    %952 = vmatpush.bf16.msra.mxu0 %v933
    %953 = vmatpush.bf16.msra.mxu0 %v932
    %954 = vmatpush.bf16.msra.mxu0 %v931
    %955 = vmatmul.bf16.gmra.mxu0 %v301
    %v956 = vpop.f32.mrf.mxu0
    %v957 = vadd.f32 0.0, %v956
    %v958 = vpop.f32.mrf.mxu0
    %959 = vdwg.mxu0
    %960 = vset.pattern.permute.xlu0 6
    %961 = vperm.xlu0 %960, %v128
    %v962 = vpop.permute.xlu0 %961
    %v964 = vmul.f32 %v962, %v957
    %v965 = vadd.f32 %v881, %v964
    %s966 = scalar_lea.vmem [#allocation7], 448
    %v967 = vld [vmem:[%s966] sm:$0xf]
    %v968 = vld [vmem:[%s966 + $0x4] sm:$0xf]
    %v969 = vld [vmem:[%s966 + $0x8] sm:$0xf]
    %v970 = vld [vmem:[%s966 + $0xc] sm:$0xf]
    %v971 = vld [vmem:[%s966 + $0x10] sm:$0xf]
    %v972 = vld [vmem:[%s966 + $0x14] sm:$0xf]
    %v973 = vld [vmem:[%s966 + $0x18] sm:$0xf]
    %v974 = vld [vmem:[%s966 + $0x1c] sm:$0xf]
    %v975 = vld [vmem:[%s966 + $0x20] sm:$0xf]
    %v976 = vld [vmem:[%s966 + $0x24] sm:$0xf]
    %v977 = vld [vmem:[%s966 + $0x28] sm:$0xf]
    %v978 = vld [vmem:[%s966 + $0x2c] sm:$0xf]
    %v979 = vld [vmem:[%s966 + $0x30] sm:$0xf]
    %v980 = vld [vmem:[%s966 + $0x34] sm:$0xf]
    %v981 = vld [vmem:[%s966 + $0x38] sm:$0xf]
    %v982 = vld [vmem:[%s966 + $0x3c] sm:$0xf]
    %v999 = vunpack.c.l.b16 %v967
    %v1000 = vunpack.c.l.b16 %v968
    %v1001 = vunpack.c.l.b16 %v969
    %v1002 = vunpack.c.l.b16 %v970
    %v1003 = vunpack.c.l.b16 %v971
    %v1004 = vunpack.c.l.b16 %v972
    %v1005 = vunpack.c.l.b16 %v973
    %v1006 = vunpack.c.l.b16 %v974
    %v1007 = vunpack.c.l.b16 %v975
    %v1008 = vunpack.c.l.b16 %v976
    %v1009 = vunpack.c.l.b16 %v977
    %v1010 = vunpack.c.l.b16 %v978
    %v1011 = vunpack.c.l.b16 %v979
    %v1012 = vunpack.c.l.b16 %v980
    %v1013 = vunpack.c.l.b16 %v981
    %v1014 = vunpack.c.l.b16 %v982
    %v1015 = vpack.c.b16 %v1000, %v999
    %v1016 = vpack.c.b16 %v1002, %v1001
    %v1017 = vpack.c.b16 %v1004, %v1003
    %v1018 = vpack.c.b16 %v1006, %v1005
    %v1019 = vpack.c.b16 %v1008, %v1007
    %v1020 = vpack.c.b16 %v1010, %v1009
    %v1021 = vpack.c.b16 %v1012, %v1011
    %v1022 = vpack.c.b16 %v1014, %v1013
    %1031 = vmatpush.bf16.msra.mxu0 %v1022
    %1032 = vmatpush.bf16.msra.mxu0 %v1021
    %1033 = vmatpush.bf16.msra.mxu0 %v1020
    %1034 = vmatpush.bf16.msra.mxu0 %v1019
    %1035 = vmatpush.bf16.msra.mxu0 %v1018
    %1036 = vmatpush.bf16.msra.mxu0 %v1017
    %1037 = vmatpush.bf16.msra.mxu0 %v1016
    %1038 = vmatpush.bf16.msra.mxu0 %v1015
    %1039 = vmatmul.bf16.gmra.mxu0 %v301
    %v1040 = vpop.f32.mrf.mxu0
    %v1041 = vadd.f32 0.0, %v1040
    %v1042 = vpop.f32.mrf.mxu0
    %1043 = vdwg.mxu0
    %1044 = vset.pattern.permute.xlu0 7
    %1045 = vperm.xlu0 %1044, %v128
    %v1046 = vpop.permute.xlu0 %1045
    %v1048 = vmul.f32 %v1046, %v1041
    %v1049 = vadd.f32 %v965, %v1048
    %s1050 = scalar_lea.vmem [#allocation7], 512
    %v1051 = vld [vmem:[%s1050] sm:$0xf]
    %v1052 = vld [vmem:[%s1050 + $0x4] sm:$0xf]
    %v1053 = vld [vmem:[%s1050 + $0x8] sm:$0xf]
    %v1054 = vld [vmem:[%s1050 + $0xc] sm:$0xf]
    %v1055 = vld [vmem:[%s1050 + $0x10] sm:$0xf]
    %v1056 = vld [vmem:[%s1050 + $0x14] sm:$0xf]
    %v1057 = vld [vmem:[%s1050 + $0x18] sm:$0xf]
    %v1058 = vld [vmem:[%s1050 + $0x1c] sm:$0xf]
    %v1059 = vld [vmem:[%s1050 + $0x20] sm:$0xf]
    %v1060 = vld [vmem:[%s1050 + $0x24] sm:$0xf]
    %v1061 = vld [vmem:[%s1050 + $0x28] sm:$0xf]
    %v1062 = vld [vmem:[%s1050 + $0x2c] sm:$0xf]
    %v1063 = vld [vmem:[%s1050 + $0x30] sm:$0xf]
    %v1064 = vld [vmem:[%s1050 + $0x34] sm:$0xf]
    %v1065 = vld [vmem:[%s1050 + $0x38] sm:$0xf]
    %v1066 = vld [vmem:[%s1050 + $0x3c] sm:$0xf]
    %v1083 = vunpack.c.l.b16 %v1051
    %v1084 = vunpack.c.l.b16 %v1052
    %v1085 = vunpack.c.l.b16 %v1053
    %v1086 = vunpack.c.l.b16 %v1054
    %v1087 = vunpack.c.l.b16 %v1055
    %v1088 = vunpack.c.l.b16 %v1056
    %v1089 = vunpack.c.l.b16 %v1057
    %v1090 = vunpack.c.l.b16 %v1058
    %v1091 = vunpack.c.l.b16 %v1059
    %v1092 = vunpack.c.l.b16 %v1060
    %v1093 = vunpack.c.l.b16 %v1061
    %v1094 = vunpack.c.l.b16 %v1062
    %v1095 = vunpack.c.l.b16 %v1063
    %v1096 = vunpack.c.l.b16 %v1064
    %v1097 = vunpack.c.l.b16 %v1065
    %v1098 = vunpack.c.l.b16 %v1066
    %v1099 = vpack.c.b16 %v1084, %v1083
    %v1100 = vpack.c.b16 %v1086, %v1085
    %v1101 = vpack.c.b16 %v1088, %v1087
    %v1102 = vpack.c.b16 %v1090, %v1089
    %v1103 = vpack.c.b16 %v1092, %v1091
    %v1104 = vpack.c.b16 %v1094, %v1093
    %v1105 = vpack.c.b16 %v1096, %v1095
    %v1106 = vpack.c.b16 %v1098, %v1097
    %1115 = vmatpush.bf16.msra.mxu0 %v1106
    %1116 = vmatpush.bf16.msra.mxu0 %v1105
    %1117 = vmatpush.bf16.msra.mxu0 %v1104
    %1118 = vmatpush.bf16.msra.mxu0 %v1103
    %1119 = vmatpush.bf16.msra.mxu0 %v1102
    %1120 = vmatpush.bf16.msra.mxu0 %v1101
    %1121 = vmatpush.bf16.msra.mxu0 %v1100
    %1122 = vmatpush.bf16.msra.mxu0 %v1099
    %1123 = vmatmul.bf16.gmra.mxu0 %v301
    %v1124 = vpop.f32.mrf.mxu0
    %v1125 = vadd.f32 0.0, %v1124
    %v1126 = vpop.f32.mrf.mxu0
    %1127 = vdwg.mxu0
    %1128 = vset.pattern.permute.xlu0 8
    %1129 = vperm.xlu0 %1128, %v128
    %v1130 = vpop.permute.xlu0 %1129
    %v1132 = vmul.f32 %v1130, %v1125
    %v1133 = vadd.f32 %v1049, %v1132
    %s1134 = scalar_lea.vmem [#allocation7], 576
    %v1135 = vld [vmem:[%s1134] sm:$0xf]
    %v1136 = vld [vmem:[%s1134 + $0x4] sm:$0xf]
    %v1137 = vld [vmem:[%s1134 + $0x8] sm:$0xf]
    %v1138 = vld [vmem:[%s1134 + $0xc] sm:$0xf]
    %v1139 = vld [vmem:[%s1134 + $0x10] sm:$0xf]
    %v1140 = vld [vmem:[%s1134 + $0x14] sm:$0xf]
    %v1141 = vld [vmem:[%s1134 + $0x18] sm:$0xf]
    %v1142 = vld [vmem:[%s1134 + $0x1c] sm:$0xf]
    %v1143 = vld [vmem:[%s1134 + $0x20] sm:$0xf]
    %v1144 = vld [vmem:[%s1134 + $0x24] sm:$0xf]
    %v1145 = vld [vmem:[%s1134 + $0x28] sm:$0xf]
    %v1146 = vld [vmem:[%s1134 + $0x2c] sm:$0xf]
    %v1147 = vld [vmem:[%s1134 + $0x30] sm:$0xf]
    %v1148 = vld [vmem:[%s1134 + $0x34] sm:$0xf]
    %v1149 = vld [vmem:[%s1134 + $0x38] sm:$0xf]
    %v1150 = vld [vmem:[%s1134 + $0x3c] sm:$0xf]
    %v1167 = vunpack.c.l.b16 %v1135
    %v1168 = vunpack.c.l.b16 %v1136
    %v1169 = vunpack.c.l.b16 %v1137
    %v1170 = vunpack.c.l.b16 %v1138
    %v1171 = vunpack.c.l.b16 %v1139
    %v1172 = vunpack.c.l.b16 %v1140
    %v1173 = vunpack.c.l.b16 %v1141
    %v1174 = vunpack.c.l.b16 %v1142
    %v1175 = vunpack.c.l.b16 %v1143
    %v1176 = vunpack.c.l.b16 %v1144
    %v1177 = vunpack.c.l.b16 %v1145
    %v1178 = vunpack.c.l.b16 %v1146
    %v1179 = vunpack.c.l.b16 %v1147
    %v1180 = vunpack.c.l.b16 %v1148
    %v1181 = vunpack.c.l.b16 %v1149
    %v1182 = vunpack.c.l.b16 %v1150
    %v1183 = vpack.c.b16 %v1168, %v1167
    %v1184 = vpack.c.b16 %v1170, %v1169
    %v1185 = vpack.c.b16 %v1172, %v1171
    %v1186 = vpack.c.b16 %v1174, %v1173
    %v1187 = vpack.c.b16 %v1176, %v1175
    %v1188 = vpack.c.b16 %v1178, %v1177
    %v1189 = vpack.c.b16 %v1180, %v1179
    %v1190 = vpack.c.b16 %v1182, %v1181
    %1199 = vmatpush.bf16.msra.mxu0 %v1190
    %1200 = vmatpush.bf16.msra.mxu0 %v1189
    %1201 = vmatpush.bf16.msra.mxu0 %v1188
    %1202 = vmatpush.bf16.msra.mxu0 %v1187
    %1203 = vmatpush.bf16.msra.mxu0 %v1186
    %1204 = vmatpush.bf16.msra.mxu0 %v1185
    %1205 = vmatpush.bf16.msra.mxu0 %v1184
    %1206 = vmatpush.bf16.msra.mxu0 %v1183
    %1207 = vmatmul.bf16.gmra.mxu0 %v301
    %v1208 = vpop.f32.mrf.mxu0
    %v1209 = vadd.f32 0.0, %v1208
    %v1210 = vpop.f32.mrf.mxu0
    %1211 = vdwg.mxu0
    %1212 = vset.pattern.permute.xlu0 9
    %1213 = vperm.xlu0 %1212, %v128
    %v1214 = vpop.permute.xlu0 %1213
    %v1216 = vmul.f32 %v1214, %v1209
    %v1217 = vadd.f32 %v1133, %v1216
    %s1218 = scalar_lea.vmem [#allocation7], 640
    %v1219 = vld [vmem:[%s1218] sm:$0xf]
    %v1220 = vld [vmem:[%s1218 + $0x4] sm:$0xf]
    %v1221 = vld [vmem:[%s1218 + $0x8] sm:$0xf]
    %v1222 = vld [vmem:[%s1218 + $0xc] sm:$0xf]
    %v1223 = vld [vmem:[%s1218 + $0x10] sm:$0xf]
    %v1224 = vld [vmem:[%s1218 + $0x14] sm:$0xf]
    %v1225 = vld [vmem:[%s1218 + $0x18] sm:$0xf]
    %v1226 = vld [vmem:[%s1218 + $0x1c] sm:$0xf]
    %v1227 = vld [vmem:[%s1218 + $0x20] sm:$0xf]
    %v1228 = vld [vmem:[%s1218 + $0x24] sm:$0xf]
    %v1229 = vld [vmem:[%s1218 + $0x28] sm:$0xf]
    %v1230 = vld [vmem:[%s1218 + $0x2c] sm:$0xf]
    %v1231 = vld [vmem:[%s1218 + $0x30] sm:$0xf]
    %v1232 = vld [vmem:[%s1218 + $0x34] sm:$0xf]
    %v1233 = vld [vmem:[%s1218 + $0x38] sm:$0xf]
    %v1234 = vld [vmem:[%s1218 + $0x3c] sm:$0xf]
    %v1251 = vunpack.c.l.b16 %v1219
    %v1252 = vunpack.c.l.b16 %v1220
    %v1253 = vunpack.c.l.b16 %v1221
    %v1254 = vunpack.c.l.b16 %v1222
    %v1255 = vunpack.c.l.b16 %v1223
    %v1256 = vunpack.c.l.b16 %v1224
    %v1257 = vunpack.c.l.b16 %v1225
    %v1258 = vunpack.c.l.b16 %v1226
    %v1259 = vunpack.c.l.b16 %v1227
    %v1260 = vunpack.c.l.b16 %v1228
    %v1261 = vunpack.c.l.b16 %v1229
    %v1262 = vunpack.c.l.b16 %v1230
    %v1263 = vunpack.c.l.b16 %v1231
    %v1264 = vunpack.c.l.b16 %v1232
    %v1265 = vunpack.c.l.b16 %v1233
    %v1266 = vunpack.c.l.b16 %v1234
    %v1267 = vpack.c.b16 %v1252, %v1251
    %v1268 = vpack.c.b16 %v1254, %v1253
    %v1269 = vpack.c.b16 %v1256, %v1255
    %v1270 = vpack.c.b16 %v1258, %v1257
    %v1271 = vpack.c.b16 %v1260, %v1259
    %v1272 = vpack.c.b16 %v1262, %v1261
    %v1273 = vpack.c.b16 %v1264, %v1263
    %v1274 = vpack.c.b16 %v1266, %v1265
    %1283 = vmatpush.bf16.msra.mxu0 %v1274
    %1284 = vmatpush.bf16.msra.mxu0 %v1273
    %1285 = vmatpush.bf16.msra.mxu0 %v1272
    %1286 = vmatpush.bf16.msra.mxu0 %v1271
    %1287 = vmatpush.bf16.msra.mxu0 %v1270
    %1288 = vmatpush.bf16.msra.mxu0 %v1269
    %1289 = vmatpush.bf16.msra.mxu0 %v1268
    %1290 = vmatpush.bf16.msra.mxu0 %v1267
    %1291 = vmatmul.bf16.gmra.mxu0 %v301
    %v1292 = vpop.f32.mrf.mxu0
    %v1293 = vadd.f32 0.0, %v1292
    %v1294 = vpop.f32.mrf.mxu0
    %1295 = vdwg.mxu0
    %1296 = vset.pattern.permute.xlu0 10
    %1297 = vperm.xlu0 %1296, %v128
    %v1298 = vpop.permute.xlu0 %1297
    %v1300 = vmul.f32 %v1298, %v1293
    %v1301 = vadd.f32 %v1217, %v1300
    %s1302 = scalar_lea.vmem [#allocation7], 704
    %v1303 = vld [vmem:[%s1302] sm:$0xf]
    %v1304 = vld [vmem:[%s1302 + $0x4] sm:$0xf]
    %v1305 = vld [vmem:[%s1302 + $0x8] sm:$0xf]
    %v1306 = vld [vmem:[%s1302 + $0xc] sm:$0xf]
    %v1307 = vld [vmem:[%s1302 + $0x10] sm:$0xf]
    %v1308 = vld [vmem:[%s1302 + $0x14] sm:$0xf]
    %v1309 = vld [vmem:[%s1302 + $0x18] sm:$0xf]
    %v1310 = vld [vmem:[%s1302 + $0x1c] sm:$0xf]
    %v1311 = vld [vmem:[%s1302 + $0x20] sm:$0xf]
    %v1312 = vld [vmem:[%s1302 + $0x24] sm:$0xf]
    %v1313 = vld [vmem:[%s1302 + $0x28] sm:$0xf]
    %v1314 = vld [vmem:[%s1302 + $0x2c] sm:$0xf]
    %v1315 = vld [vmem:[%s1302 + $0x30] sm:$0xf]
    %v1316 = vld [vmem:[%s1302 + $0x34] sm:$0xf]
    %v1317 = vld [vmem:[%s1302 + $0x38] sm:$0xf]
    %v1318 = vld [vmem:[%s1302 + $0x3c] sm:$0xf]
    %v1335 = vunpack.c.l.b16 %v1303
    %v1336 = vunpack.c.l.b16 %v1304
    %v1337 = vunpack.c.l.b16 %v1305
    %v1338 = vunpack.c.l.b16 %v1306
    %v1339 = vunpack.c.l.b16 %v1307
    %v1340 = vunpack.c.l.b16 %v1308
    %v1341 = vunpack.c.l.b16 %v1309
    %v1342 = vunpack.c.l.b16 %v1310
    %v1343 = vunpack.c.l.b16 %v1311
    %v1344 = vunpack.c.l.b16 %v1312
    %v1345 = vunpack.c.l.b16 %v1313
    %v1346 = vunpack.c.l.b16 %v1314
    %v1347 = vunpack.c.l.b16 %v1315
    %v1348 = vunpack.c.l.b16 %v1316
    %v1349 = vunpack.c.l.b16 %v1317
    %v1350 = vunpack.c.l.b16 %v1318
    %v1351 = vpack.c.b16 %v1336, %v1335
    %v1352 = vpack.c.b16 %v1338, %v1337
    %v1353 = vpack.c.b16 %v1340, %v1339
    %v1354 = vpack.c.b16 %v1342, %v1341
    %v1355 = vpack.c.b16 %v1344, %v1343
    %v1356 = vpack.c.b16 %v1346, %v1345
    %v1357 = vpack.c.b16 %v1348, %v1347
    %v1358 = vpack.c.b16 %v1350, %v1349
    %1367 = vmatpush.bf16.msra.mxu0 %v1358
    %1368 = vmatpush.bf16.msra.mxu0 %v1357
    %1369 = vmatpush.bf16.msra.mxu0 %v1356
    %1370 = vmatpush.bf16.msra.mxu0 %v1355
    %1371 = vmatpush.bf16.msra.mxu0 %v1354
    %1372 = vmatpush.bf16.msra.mxu0 %v1353
    %1373 = vmatpush.bf16.msra.mxu0 %v1352
    %1374 = vmatpush.bf16.msra.mxu0 %v1351
    %1375 = vmatmul.bf16.gmra.mxu0 %v301
    %v1376 = vpop.f32.mrf.mxu0
    %v1377 = vadd.f32 0.0, %v1376
    %v1378 = vpop.f32.mrf.mxu0
    %1379 = vdwg.mxu0
    %1380 = vset.pattern.permute.xlu0 11
    %1381 = vperm.xlu0 %1380, %v128
    %v1382 = vpop.permute.xlu0 %1381
    %v1384 = vmul.f32 %v1382, %v1377
    %v1385 = vadd.f32 %v1301, %v1384
    %v1386 = vpack.c.bf16 %v1385, %v1385
    %1387 = vmatpush.bf16.msra.mxu0 %v188
    %1388 = vmatpush.bf16.msra.mxu0 %v187
    %1389 = vmatpush.bf16.msra.mxu0 %v186
    %1390 = vmatpush.bf16.msra.mxu0 %v185
    %1391 = vmatpush.bf16.msra.mxu0 %v184
    %1392 = vmatpush.bf16.msra.mxu0 %v183
    %1393 = vmatpush.bf16.msra.mxu0 %v182
    %1394 = vmatpush.bf16.msra.mxu0 %v181
    %1395 = vmatmul.bf16.gmra.mxu0 %v1386
    %v1396 = vpop.f32.mrf.mxu0
    %v1397 = vadd.f32 %v147, %v1396
    %v1398 = vpop.f32.mrf.mxu0
    %1399 = vdwg.mxu0
    %v1400 = vxor.u32 %v1397, 2147483648
    %v1401 = vmul.f32 %v1400, 1.442695
    %v1402 = vpow.pop %v1401
    %v1403 = vadd.f32 %v1402, 1.0
    %v1404 = vrcp.pop %v1403
    %v1405 = vmul.f32 %v1403, %v1404
    %v1406 = vsub.f32 1.0, %v1405
    %v1407 = vmul.f32 %v1404, %v1406
    %v1408 = vadd.f32 %v1404, %v1407
    %vm1409 = vweird.f32 %v1403
    %vm1410 = vweird.f32 %v1404
    %vm1411 = vmor %vm1409, %vm1410
    %v1412 = vsel %vm1411, %v1404, %v1408
    %v1413 = vand.u32 2147483647, %v1403
    %vm1414 = vcmp.eq.f32.partialorder %v1413, 8.507059e+37
    %v1415 = vand.u32 %v1403, 2147483648
    %v1416 = vor.u32 1.1754944e-38, %v1415
    %v1417 = vsel %vm1414, %v1416, %v1412
    %v1418 = vmul.f32 1.0, %v1417
    %v1419 = vpack.c.bf16 %v1418, %v1418
    %v1421 = vsel %vm265, %v1419, 0
    %1423 = vmatpush.bf16.msra.mxu0 0
    %1424 = vmatpush.bf16.msra.mxu0 0
    %1425 = vmatpush.bf16.msra.mxu0 0
    %1426 = vmatpush.bf16.msra.mxu0 0
    %1427 = vmatpush.bf16.msra.mxu0 %v260
    %1428 = vmatpush.bf16.msra.mxu0 %v259
    %1429 = vmatpush.bf16.msra.mxu0 %v258
    %1430 = vmatpush.bf16.msra.mxu0 %v257
    %1431 = vmatmul.bf16.gmra.mxu0 %v1421
    %v1432 = vpop.f32.mrf.mxu0
    %v1433 = vadd.f32 %v239, %v1432
    %v1434 = vpop.f32.mrf.mxu0
    %1435 = vdwg.mxu0
    %v1436 = vxor.u32 %v1433, 2147483648
    %v1437 = vmul.f32 %v1436, 1.442695
    %v1438 = vpow.pop %v1437
    %v1439 = vadd.f32 %v1438, 1.0
    %v1440 = vrcp.pop %v1439
    %v1441 = vmul.f32 %v1439, %v1440
    %v1442 = vsub.f32 1.0, %v1441
    %v1443 = vmul.f32 %v1440, %v1442
    %v1444 = vadd.f32 %v1440, %v1443
    %vm1445 = vweird.f32 %v1439
    %vm1446 = vweird.f32 %v1440
    %vm1447 = vmor %vm1445, %vm1446
    %v1448 = vsel %vm1447, %v1440, %v1444
    %v1449 = vand.u32 2147483647, %v1439
    %vm1450 = vcmp.eq.f32.partialorder %v1449, 8.507059e+37
    %v1451 = vand.u32 %v1439, 2147483648
    %v1452 = vor.u32 1.1754944e-38, %v1451
    %v1453 = vsel %vm1450, %v1452, %v1448
    %v1454 = vmul.f32 1.0, %v1453
    %v1455 = vpack.c.bf16 %v1454, %v1454
    %1456 = vmatpush.bf16.msra.mxu0 %v373
    %1457 = vmatpush.bf16.msra.mxu0 %v372
    %1458 = vmatpush.bf16.msra.mxu0 %v371
    %1459 = vmatpush.bf16.msra.mxu0 %v370
    %1460 = vmatpush.bf16.msra.mxu0 %v369
    %1461 = vmatpush.bf16.msra.mxu0 %v368
    %1462 = vmatpush.bf16.msra.mxu0 %v367
    %1463 = vmatpush.bf16.msra.mxu0 %v366
    %1464 = vmatmul.bf16.gmra.mxu0 %v1455
    %v1465 = vpop.f32.mrf.mxu0
    %v1466 = vadd.f32 0.0, %v1465
    %v1467 = vpop.f32.mrf.mxu0
    %1468 = vdwg.mxu0
    %1470 = vset.pattern.permute.xlu0 0
    %1471 = vperm.xlu0 %1470, %v1385
    %v1472 = vpop.permute.xlu0 %1471
    %v1474 = vmul.f32 %v1472, %v1466
    %1475 = vmatpush.bf16.msra.mxu0 %v440
    %1476 = vmatpush.bf16.msra.mxu0 %v439
    %1477 = vmatpush.bf16.msra.mxu0 %v438
    %1478 = vmatpush.bf16.msra.mxu0 %v437
    %1479 = vmatpush.bf16.msra.mxu0 %v436
    %1480 = vmatpush.bf16.msra.mxu0 %v435
    %1481 = vmatpush.bf16.msra.mxu0 %v434
    %1482 = vmatpush.bf16.msra.mxu0 %v433
    %1483 = vmatmul.bf16.gmra.mxu0 %v1386
    %v1484 = vpop.f32.mrf.mxu0
    %v1485 = vadd.f32 %v1474, %v1484
    %v1486 = vpop.f32.mrf.mxu0
    %1487 = vdwg.mxu0
    %1488 = vmatpush.bf16.msra.mxu0 %v518
    %1489 = vmatpush.bf16.msra.mxu0 %v517
    %1490 = vmatpush.bf16.msra.mxu0 %v516
    %1491 = vmatpush.bf16.msra.mxu0 %v515
    %1492 = vmatpush.bf16.msra.mxu0 %v514
    %1493 = vmatpush.bf16.msra.mxu0 %v513
    %1494 = vmatpush.bf16.msra.mxu0 %v512
    %1495 = vmatpush.bf16.msra.mxu0 %v511
    %1496 = vmatmul.bf16.gmra.mxu0 %v1455
    %v1497 = vpop.f32.mrf.mxu0
    %v1498 = vadd.f32 0.0, %v1497
    %v1499 = vpop.f32.mrf.mxu0
    %1500 = vdwg.mxu0
    %1501 = vset.pattern.permute.xlu0 1
    %1502 = vperm.xlu0 %1501, %v1385
    %v1503 = vpop.permute.xlu0 %1502
    %v1505 = vmul.f32 %v1503, %v1498
    %v1506 = vadd.f32 %v1485, %v1505
    %1507 = vmatpush.bf16.msra.mxu0 %v602
    %1508 = vmatpush.bf16.msra.mxu0 %v601
    %1509 = vmatpush.bf16.msra.mxu0 %v600
    %1510 = vmatpush.bf16.msra.mxu0 %v599
    %1511 = vmatpush.bf16.msra.mxu0 %v598
    %1512 = vmatpush.bf16.msra.mxu0 %v597
    %1513 = vmatpush.bf16.msra.mxu0 %v596
    %1514 = vmatpush.bf16.msra.mxu0 %v595
    %1515 = vmatmul.bf16.gmra.mxu0 %v1455
    %v1516 = vpop.f32.mrf.mxu0
    %v1517 = vadd.f32 0.0, %v1516
    %v1518 = vpop.f32.mrf.mxu0
    %1519 = vdwg.mxu0
    %1520 = vset.pattern.permute.xlu0 2
    %1521 = vperm.xlu0 %1520, %v1385
    %v1522 = vpop.permute.xlu0 %1521
    %v1524 = vmul.f32 %v1522, %v1517
    %v1525 = vadd.f32 %v1506, %v1524
    %1526 = vmatpush.bf16.msra.mxu0 %v686
    %1527 = vmatpush.bf16.msra.mxu0 %v685
    %1528 = vmatpush.bf16.msra.mxu0 %v684
    %1529 = vmatpush.bf16.msra.mxu0 %v683
    %1530 = vmatpush.bf16.msra.mxu0 %v682
    %1531 = vmatpush.bf16.msra.mxu0 %v681
    %1532 = vmatpush.bf16.msra.mxu0 %v680
    %1533 = vmatpush.bf16.msra.mxu0 %v679
    %1534 = vmatmul.bf16.gmra.mxu0 %v1455
    %v1535 = vpop.f32.mrf.mxu0
    %v1536 = vadd.f32 0.0, %v1535
    %v1537 = vpop.f32.mrf.mxu0
    %1538 = vdwg.mxu0
    %1539 = vset.pattern.permute.xlu0 3
    %1540 = vperm.xlu0 %1539, %v1385
    %v1541 = vpop.permute.xlu0 %1540
    %v1543 = vmul.f32 %v1541, %v1536
    %v1544 = vadd.f32 %v1525, %v1543
    %1545 = vmatpush.bf16.msra.mxu0 %v770
    %1546 = vmatpush.bf16.msra.mxu0 %v769
    %1547 = vmatpush.bf16.msra.mxu0 %v768
    %1548 = vmatpush.bf16.msra.mxu0 %v767
    %1549 = vmatpush.bf16.msra.mxu0 %v766
    %1550 = vmatpush.bf16.msra.mxu0 %v765
    %1551 = vmatpush.bf16.msra.mxu0 %v764
    %1552 = vmatpush.bf16.msra.mxu0 %v763
    %1553 = vmatmul.bf16.gmra.mxu0 %v1455
    %v1554 = vpop.f32.mrf.mxu0
    %v1555 = vadd.f32 0.0, %v1554
    %v1556 = vpop.f32.mrf.mxu0
    %1557 = vdwg.mxu0
    %1558 = vset.pattern.permute.xlu0 4
    %1559 = vperm.xlu0 %1558, %v1385
    %v1560 = vpop.permute.xlu0 %1559
    %v1562 = vmul.f32 %v1560, %v1555
    %v1563 = vadd.f32 %v1544, %v1562
    %1564 = vmatpush.bf16.msra.mxu0 %v854
    %1565 = vmatpush.bf16.msra.mxu0 %v853
    %1566 = vmatpush.bf16.msra.mxu0 %v852
    %1567 = vmatpush.bf16.msra.mxu0 %v851
    %1568 = vmatpush.bf16.msra.mxu0 %v850
    %1569 = vmatpush.bf16.msra.mxu0 %v849
    %1570 = vmatpush.bf16.msra.mxu0 %v848
    %1571 = vmatpush.bf16.msra.mxu0 %v847
    %1572 = vmatmul.bf16.gmra.mxu0 %v1455
    %v1573 = vpop.f32.mrf.mxu0
    %v1574 = vadd.f32 0.0, %v1573
    %v1575 = vpop.f32.mrf.mxu0
    %1576 = vdwg.mxu0
    %1577 = vset.pattern.permute.xlu0 5
    %1578 = vperm.xlu0 %1577, %v1385
    %v1579 = vpop.permute.xlu0 %1578
    %v1581 = vmul.f32 %v1579, %v1574
    %v1582 = vadd.f32 %v1563, %v1581
    %1583 = vmatpush.bf16.msra.mxu0 %v938
    %1584 = vmatpush.bf16.msra.mxu0 %v937
    %1585 = vmatpush.bf16.msra.mxu0 %v936
    %1586 = vmatpush.bf16.msra.mxu0 %v935
    %1587 = vmatpush.bf16.msra.mxu0 %v934
    %1588 = vmatpush.bf16.msra.mxu0 %v933
    %1589 = vmatpush.bf16.msra.mxu0 %v932
    %1590 = vmatpush.bf16.msra.mxu0 %v931
    %1591 = vmatmul.bf16.gmra.mxu0 %v1455
    %v1592 = vpop.f32.mrf.mxu0
    %v1593 = vadd.f32 0.0, %v1592
    %v1594 = vpop.f32.mrf.mxu0
    %1595 = vdwg.mxu0
    %1596 = vset.pattern.permute.xlu0 6
    %1597 = vperm.xlu0 %1596, %v1385
    %v1598 = vpop.permute.xlu0 %1597
    %v1600 = vmul.f32 %v1598, %v1593
    %v1601 = vadd.f32 %v1582, %v1600
    %1602 = vmatpush.bf16.msra.mxu0 %v1022
    %1603 = vmatpush.bf16.msra.mxu0 %v1021
    %1604 = vmatpush.bf16.msra.mxu0 %v1020
    %1605 = vmatpush.bf16.msra.mxu0 %v1019
    %1606 = vmatpush.bf16.msra.mxu0 %v1018
    %1607 = vmatpush.bf16.msra.mxu0 %v1017
    %1608 = vmatpush.bf16.msra.mxu0 %v1016
    %1609 = vmatpush.bf16.msra.mxu0 %v1015
    %1610 = vmatmul.bf16.gmra.mxu0 %v1455
    %v1611 = vpop.f32.mrf.mxu0
    %v1612 = vadd.f32 0.0, %v1611
    %v1613 = vpop.f32.mrf.mxu0
    %1614 = vdwg.mxu0
    %1615 = vset.pattern.permute.xlu0 7
    %1616 = vperm.xlu0 %1615, %v1385
    %v1617 = vpop.permute.xlu0 %1616
    %v1619 = vmul.f32 %v1617, %v1612
    %v1620 = vadd.f32 %v1601, %v1619
    %1621 = vmatpush.bf16.msra.mxu0 %v1106
    %1622 = vmatpush.bf16.msra.mxu0 %v1105
    %1623 = vmatpush.bf16.msra.mxu0 %v1104
    %1624 = vmatpush.bf16.msra.mxu0 %v1103
    %1625 = vmatpush.bf16.msra.mxu0 %v1102
    %1626 = vmatpush.bf16.msra.mxu0 %v1101
    %1627 = vmatpush.bf16.msra.mxu0 %v1100
    %1628 = vmatpush.bf16.msra.mxu0 %v1099
    %1629 = vmatmul.bf16.gmra.mxu0 %v1455
    %v1630 = vpop.f32.mrf.mxu0
    %v1631 = vadd.f32 0.0, %v1630
    %v1632 = vpop.f32.mrf.mxu0
    %1633 = vdwg.mxu0
    %1634 = vset.pattern.permute.xlu0 8
    %1635 = vperm.xlu0 %1634, %v1385
    %v1636 = vpop.permute.xlu0 %1635
    %v1638 = vmul.f32 %v1636, %v1631
    %v1639 = vadd.f32 %v1620, %v1638
    %1640 = vmatpush.bf16.msra.mxu0 %v1190
    %1641 = vmatpush.bf16.msra.mxu0 %v1189
    %1642 = vmatpush.bf16.msra.mxu0 %v1188
    %1643 = vmatpush.bf16.msra.mxu0 %v1187
    %1644 = vmatpush.bf16.msra.mxu0 %v1186
    %1645 = vmatpush.bf16.msra.mxu0 %v1185
    %1646 = vmatpush.bf16.msra.mxu0 %v1184
    %1647 = vmatpush.bf16.msra.mxu0 %v1183
    %1648 = vmatmul.bf16.gmra.mxu0 %v1455
    %v1649 = vpop.f32.mrf.mxu0
    %v1650 = vadd.f32 0.0, %v1649
    %v1651 = vpop.f32.mrf.mxu0
    %1652 = vdwg.mxu0
    %1653 = vset.pattern.permute.xlu0 9
    %1654 = vperm.xlu0 %1653, %v1385
    %v1655 = vpop.permute.xlu0 %1654
    %v1657 = vmul.f32 %v1655, %v1650
    %v1658 = vadd.f32 %v1639, %v1657
    %1659 = vmatpush.bf16.msra.mxu0 %v1274
    %1660 = vmatpush.bf16.msra.mxu0 %v1273
    %1661 = vmatpush.bf16.msra.mxu0 %v1272
    %1662 = vmatpush.bf16.msra.mxu0 %v1271
    %1663 = vmatpush.bf16.msra.mxu0 %v1270
    %1664 = vmatpush.bf16.msra.mxu0 %v1269
    %1665 = vmatpush.bf16.msra.mxu0 %v1268
    %1666 = vmatpush.bf16.msra.mxu0 %v1267
    %1667 = vmatmul.bf16.gmra.mxu0 %v1455
    %v1668 = vpop.f32.mrf.mxu0
    %v1669 = vadd.f32 0.0, %v1668
    %v1670 = vpop.f32.mrf.mxu0
    %1671 = vdwg.mxu0
    %1672 = vset.pattern.permute.xlu0 10
    %1673 = vperm.xlu0 %1672, %v1385
    %v1674 = vpop.permute.xlu0 %1673
    %v1676 = vmul.f32 %v1674, %v1669
    %v1677 = vadd.f32 %v1658, %v1676
    %1678 = vmatpush.bf16.msra.mxu0 %v1358
    %1679 = vmatpush.bf16.msra.mxu0 %v1357
    %1680 = vmatpush.bf16.msra.mxu0 %v1356
    %1681 = vmatpush.bf16.msra.mxu0 %v1355
    %1682 = vmatpush.bf16.msra.mxu0 %v1354
    %1683 = vmatpush.bf16.msra.mxu0 %v1353
    %1684 = vmatpush.bf16.msra.mxu0 %v1352
    %1685 = vmatpush.bf16.msra.mxu0 %v1351
    %1686 = vmatmul.bf16.gmra.mxu0 %v1455
    %v1687 = vpop.f32.mrf.mxu0
    %v1688 = vadd.f32 0.0, %v1687
    %v1689 = vpop.f32.mrf.mxu0
    %1690 = vdwg.mxu0
    %1691 = vset.pattern.permute.xlu0 11
    %1692 = vperm.xlu0 %1691, %v1385
    %v1693 = vpop.permute.xlu0 %1692
    %v1695 = vmul.f32 %v1693, %v1688
    %v1696 = vadd.f32 %v1677, %v1695
    %v1697 = vpack.c.bf16 %v1696, %v1696
    %1698 = vmatpush.bf16.msra.mxu0 %v188
    %1699 = vmatpush.bf16.msra.mxu0 %v187
    %1700 = vmatpush.bf16.msra.mxu0 %v186
    %1701 = vmatpush.bf16.msra.mxu0 %v185
    %1702 = vmatpush.bf16.msra.mxu0 %v184
    %1703 = vmatpush.bf16.msra.mxu0 %v183
    %1704 = vmatpush.bf16.msra.mxu0 %v182
    %1705 = vmatpush.bf16.msra.mxu0 %v181
    %1706 = vmatmul.bf16.gmra.mxu0 %v1697
    %v1707 = vpop.f32.mrf.mxu0
    %v1708 = vadd.f32 %v147, %v1707
    %v1709 = vpop.f32.mrf.mxu0
    %1710 = vdwg.mxu0
    %v1711 = vxor.u32 %v1708, 2147483648
    %v1712 = vmul.f32 %v1711, 1.442695
    %v1713 = vpow.pop %v1712
    %v1714 = vadd.f32 %v1713, 1.0
    %v1715 = vrcp.pop %v1714
    %v1716 = vmul.f32 %v1714, %v1715
    %v1717 = vsub.f32 1.0, %v1716
    %v1718 = vmul.f32 %v1715, %v1717
    %v1719 = vadd.f32 %v1715, %v1718
    %vm1720 = vweird.f32 %v1714
    %vm1721 = vweird.f32 %v1715
    %vm1722 = vmor %vm1720, %vm1721
    %v1723 = vsel %vm1722, %v1715, %v1719
    %v1724 = vand.u32 2147483647, %v1714
    %vm1725 = vcmp.eq.f32.partialorder %v1724, 8.507059e+37
    %v1726 = vand.u32 %v1714, 2147483648
    %v1727 = vor.u32 1.1754944e-38, %v1726
    %v1728 = vsel %vm1725, %v1727, %v1723
    %v1729 = vmul.f32 1.0, %v1728
    %v1730 = vpack.c.bf16 %v1729, %v1729
    %v1732 = vsel %vm265, %v1730, 0
    %1734 = vmatpush.bf16.msra.mxu0 0
    %1735 = vmatpush.bf16.msra.mxu0 0
    %1736 = vmatpush.bf16.msra.mxu0 0
    %1737 = vmatpush.bf16.msra.mxu0 0
    %1738 = vmatpush.bf16.msra.mxu0 %v260
    %1739 = vmatpush.bf16.msra.mxu0 %v259
    %1740 = vmatpush.bf16.msra.mxu0 %v258
    %1741 = vmatpush.bf16.msra.mxu0 %v257
    %1742 = vmatmul.bf16.gmra.mxu0 %v1732
    %v1743 = vpop.f32.mrf.mxu0
    %v1744 = vadd.f32 %v239, %v1743
    %v1745 = vpop.f32.mrf.mxu0
    %1746 = vdwg.mxu0
    %v1747 = vxor.u32 %v1744, 2147483648
    %v1748 = vmul.f32 %v1747, 1.442695
    %v1749 = vpow.pop %v1748
    %v1750 = vadd.f32 %v1749, 1.0
    %v1751 = vrcp.pop %v1750
    %v1752 = vmul.f32 %v1750, %v1751
    %v1753 = vsub.f32 1.0, %v1752
    %v1754 = vmul.f32 %v1751, %v1753
    %v1755 = vadd.f32 %v1751, %v1754
    %vm1756 = vweird.f32 %v1750
    %vm1757 = vweird.f32 %v1751
    %vm1758 = vmor %vm1756, %vm1757
    %v1759 = vsel %vm1758, %v1751, %v1755
    %v1760 = vand.u32 2147483647, %v1750
    %vm1761 = vcmp.eq.f32.partialorder %v1760, 8.507059e+37
    %v1762 = vand.u32 %v1750, 2147483648
    %v1763 = vor.u32 1.1754944e-38, %v1762
    %v1764 = vsel %vm1761, %v1763, %v1759
    %v1765 = vmul.f32 1.0, %v1764
    %v1766 = vpack.c.bf16 %v1765, %v1765
    %1767 = vmatpush.bf16.msra.mxu0 %v373
    %1768 = vmatpush.bf16.msra.mxu0 %v372
    %1769 = vmatpush.bf16.msra.mxu0 %v371
    %1770 = vmatpush.bf16.msra.mxu0 %v370
    %1771 = vmatpush.bf16.msra.mxu0 %v369
    %1772 = vmatpush.bf16.msra.mxu0 %v368
    %1773 = vmatpush.bf16.msra.mxu0 %v367
    %1774 = vmatpush.bf16.msra.mxu0 %v366
    %1775 = vmatmul.bf16.gmra.mxu0 %v1766
    %v1776 = vpop.f32.mrf.mxu0
    %v1777 = vadd.f32 0.0, %v1776
    %v1778 = vpop.f32.mrf.mxu0
    %1779 = vdwg.mxu0
    %1781 = vset.pattern.permute.xlu0 0
    %1782 = vperm.xlu0 %1781, %v1696
    %v1783 = vpop.permute.xlu0 %1782
    %v1785 = vmul.f32 %v1783, %v1777
    %1786 = vmatpush.bf16.msra.mxu0 %v440
    %1787 = vmatpush.bf16.msra.mxu0 %v439
    %1788 = vmatpush.bf16.msra.mxu0 %v438
    %1789 = vmatpush.bf16.msra.mxu0 %v437
    %1790 = vmatpush.bf16.msra.mxu0 %v436
    %1791 = vmatpush.bf16.msra.mxu0 %v435
    %1792 = vmatpush.bf16.msra.mxu0 %v434
    %1793 = vmatpush.bf16.msra.mxu0 %v433
    %1794 = vmatmul.bf16.gmra.mxu0 %v1697
    %v1795 = vpop.f32.mrf.mxu0
    %v1796 = vadd.f32 %v1785, %v1795
    %v1797 = vpop.f32.mrf.mxu0
    %1798 = vdwg.mxu0
    %1799 = vmatpush.bf16.msra.mxu0 %v518
    %1800 = vmatpush.bf16.msra.mxu0 %v517
    %1801 = vmatpush.bf16.msra.mxu0 %v516
    %1802 = vmatpush.bf16.msra.mxu0 %v515
    %1803 = vmatpush.bf16.msra.mxu0 %v514
    %1804 = vmatpush.bf16.msra.mxu0 %v513
    %1805 = vmatpush.bf16.msra.mxu0 %v512
    %1806 = vmatpush.bf16.msra.mxu0 %v511
    %1807 = vmatmul.bf16.gmra.mxu0 %v1766
    %v1808 = vpop.f32.mrf.mxu0
    %v1809 = vadd.f32 0.0, %v1808
    %v1810 = vpop.f32.mrf.mxu0
    %1811 = vdwg.mxu0
    %1812 = vset.pattern.permute.xlu0 1
    %1813 = vperm.xlu0 %1812, %v1696
    %v1814 = vpop.permute.xlu0 %1813
    %v1816 = vmul.f32 %v1814, %v1809
    %v1817 = vadd.f32 %v1796, %v1816
    %1818 = vmatpush.bf16.msra.mxu0 %v602
    %1819 = vmatpush.bf16.msra.mxu0 %v601
    %1820 = vmatpush.bf16.msra.mxu0 %v600
    %1821 = vmatpush.bf16.msra.mxu0 %v599
    %1822 = vmatpush.bf16.msra.mxu0 %v598
    %1823 = vmatpush.bf16.msra.mxu0 %v597
    %1824 = vmatpush.bf16.msra.mxu0 %v596
    %1825 = vmatpush.bf16.msra.mxu0 %v595
    %1826 = vmatmul.bf16.gmra.mxu0 %v1766
    %v1827 = vpop.f32.mrf.mxu0
    %v1828 = vadd.f32 0.0, %v1827
    %v1829 = vpop.f32.mrf.mxu0
    %1830 = vdwg.mxu0
    %1831 = vset.pattern.permute.xlu0 2
    %1832 = vperm.xlu0 %1831, %v1696
    %v1833 = vpop.permute.xlu0 %1832
    %v1835 = vmul.f32 %v1833, %v1828
    %v1836 = vadd.f32 %v1817, %v1835
    %1837 = vmatpush.bf16.msra.mxu0 %v686
    %1838 = vmatpush.bf16.msra.mxu0 %v685
    %1839 = vmatpush.bf16.msra.mxu0 %v684
    %1840 = vmatpush.bf16.msra.mxu0 %v683
    %1841 = vmatpush.bf16.msra.mxu0 %v682
    %1842 = vmatpush.bf16.msra.mxu0 %v681
    %1843 = vmatpush.bf16.msra.mxu0 %v680
    %1844 = vmatpush.bf16.msra.mxu0 %v679
    %1845 = vmatmul.bf16.gmra.mxu0 %v1766
    %v1846 = vpop.f32.mrf.mxu0
    %v1847 = vadd.f32 0.0, %v1846
    %v1848 = vpop.f32.mrf.mxu0
    %1849 = vdwg.mxu0
    %1850 = vset.pattern.permute.xlu0 3
    %1851 = vperm.xlu0 %1850, %v1696
    %v1852 = vpop.permute.xlu0 %1851
    %v1854 = vmul.f32 %v1852, %v1847
    %v1855 = vadd.f32 %v1836, %v1854
    %1856 = vmatpush.bf16.msra.mxu0 %v770
    %1857 = vmatpush.bf16.msra.mxu0 %v769
    %1858 = vmatpush.bf16.msra.mxu0 %v768
    %1859 = vmatpush.bf16.msra.mxu0 %v767
    %1860 = vmatpush.bf16.msra.mxu0 %v766
    %1861 = vmatpush.bf16.msra.mxu0 %v765
    %1862 = vmatpush.bf16.msra.mxu0 %v764
    %1863 = vmatpush.bf16.msra.mxu0 %v763
    %1864 = vmatmul.bf16.gmra.mxu0 %v1766
    %v1865 = vpop.f32.mrf.mxu0
    %v1866 = vadd.f32 0.0, %v1865
    %v1867 = vpop.f32.mrf.mxu0
    %1868 = vdwg.mxu0
    %1869 = vset.pattern.permute.xlu0 4
    %1870 = vperm.xlu0 %1869, %v1696
    %v1871 = vpop.permute.xlu0 %1870
    %v1873 = vmul.f32 %v1871, %v1866
    %v1874 = vadd.f32 %v1855, %v1873
    %1875 = vmatpush.bf16.msra.mxu0 %v854
    %1876 = vmatpush.bf16.msra.mxu0 %v853
    %1877 = vmatpush.bf16.msra.mxu0 %v852
    %1878 = vmatpush.bf16.msra.mxu0 %v851
    %1879 = vmatpush.bf16.msra.mxu0 %v850
    %1880 = vmatpush.bf16.msra.mxu0 %v849
    %1881 = vmatpush.bf16.msra.mxu0 %v848
    %1882 = vmatpush.bf16.msra.mxu0 %v847
    %1883 = vmatmul.bf16.gmra.mxu0 %v1766
    %v1884 = vpop.f32.mrf.mxu0
    %v1885 = vadd.f32 0.0, %v1884
    %v1886 = vpop.f32.mrf.mxu0
    %1887 = vdwg.mxu0
    %1888 = vset.pattern.permute.xlu0 5
    %1889 = vperm.xlu0 %1888, %v1696
    %v1890 = vpop.permute.xlu0 %1889
    %v1892 = vmul.f32 %v1890, %v1885
    %v1893 = vadd.f32 %v1874, %v1892
    %1894 = vmatpush.bf16.msra.mxu0 %v938
    %1895 = vmatpush.bf16.msra.mxu0 %v937
    %1896 = vmatpush.bf16.msra.mxu0 %v936
    %1897 = vmatpush.bf16.msra.mxu0 %v935
    %1898 = vmatpush.bf16.msra.mxu0 %v934
    %1899 = vmatpush.bf16.msra.mxu0 %v933
    %1900 = vmatpush.bf16.msra.mxu0 %v932
    %1901 = vmatpush.bf16.msra.mxu0 %v931
    %1902 = vmatmul.bf16.gmra.mxu0 %v1766
    %v1903 = vpop.f32.mrf.mxu0
    %v1904 = vadd.f32 0.0, %v1903
    %v1905 = vpop.f32.mrf.mxu0
    %1906 = vdwg.mxu0
    %1907 = vset.pattern.permute.xlu0 6
    %1908 = vperm.xlu0 %1907, %v1696
    %v1909 = vpop.permute.xlu0 %1908
    %v1911 = vmul.f32 %v1909, %v1904
    %v1912 = vadd.f32 %v1893, %v1911
    %1913 = vmatpush.bf16.msra.mxu0 %v1022
    %1914 = vmatpush.bf16.msra.mxu0 %v1021
    %1915 = vmatpush.bf16.msra.mxu0 %v1020
    %1916 = vmatpush.bf16.msra.mxu0 %v1019
    %1917 = vmatpush.bf16.msra.mxu0 %v1018
    %1918 = vmatpush.bf16.msra.mxu0 %v1017
    %1919 = vmatpush.bf16.msra.mxu0 %v1016
    %1920 = vmatpush.bf16.msra.mxu0 %v1015
    %1921 = vmatmul.bf16.gmra.mxu0 %v1766
    %v1922 = vpop.f32.mrf.mxu0
    %v1923 = vadd.f32 0.0, %v1922
    %v1924 = vpop.f32.mrf.mxu0
    %1925 = vdwg.mxu0
    %1926 = vset.pattern.permute.xlu0 7
    %1927 = vperm.xlu0 %1926, %v1696
    %v1928 = vpop.permute.xlu0 %1927
    %v1930 = vmul.f32 %v1928, %v1923
    %v1931 = vadd.f32 %v1912, %v1930
    %1932 = vmatpush.bf16.msra.mxu0 %v1106
    %1933 = vmatpush.bf16.msra.mxu0 %v1105
    %1934 = vmatpush.bf16.msra.mxu0 %v1104
    %1935 = vmatpush.bf16.msra.mxu0 %v1103
    %1936 = vmatpush.bf16.msra.mxu0 %v1102
    %1937 = vmatpush.bf16.msra.mxu0 %v1101
    %1938 = vmatpush.bf16.msra.mxu0 %v1100
    %1939 = vmatpush.bf16.msra.mxu0 %v1099
    %1940 = vmatmul.bf16.gmra.mxu0 %v1766
    %v1941 = vpop.f32.mrf.mxu0
    %v1942 = vadd.f32 0.0, %v1941
    %v1943 = vpop.f32.mrf.mxu0
    %1944 = vdwg.mxu0
    %1945 = vset.pattern.permute.xlu0 8
    %1946 = vperm.xlu0 %1945, %v1696
    %v1947 = vpop.permute.xlu0 %1946
    %v1949 = vmul.f32 %v1947, %v1942
    %v1950 = vadd.f32 %v1931, %v1949
    %1951 = vmatpush.bf16.msra.mxu0 %v1190
    %1952 = vmatpush.bf16.msra.mxu0 %v1189
    %1953 = vmatpush.bf16.msra.mxu0 %v1188
    %1954 = vmatpush.bf16.msra.mxu0 %v1187
    %1955 = vmatpush.bf16.msra.mxu0 %v1186
    %1956 = vmatpush.bf16.msra.mxu0 %v1185
    %1957 = vmatpush.bf16.msra.mxu0 %v1184
    %1958 = vmatpush.bf16.msra.mxu0 %v1183
    %1959 = vmatmul.bf16.gmra.mxu0 %v1766
    %v1960 = vpop.f32.mrf.mxu0
    %v1961 = vadd.f32 0.0, %v1960
    %v1962 = vpop.f32.mrf.mxu0
    %1963 = vdwg.mxu0
    %1964 = vset.pattern.permute.xlu0 9
    %1965 = vperm.xlu0 %1964, %v1696
    %v1966 = vpop.permute.xlu0 %1965
    %v1968 = vmul.f32 %v1966, %v1961
    %v1969 = vadd.f32 %v1950, %v1968
    %1970 = vmatpush.bf16.msra.mxu0 %v1274
    %1971 = vmatpush.bf16.msra.mxu0 %v1273
    %1972 = vmatpush.bf16.msra.mxu0 %v1272
    %1973 = vmatpush.bf16.msra.mxu0 %v1271
    %1974 = vmatpush.bf16.msra.mxu0 %v1270
    %1975 = vmatpush.bf16.msra.mxu0 %v1269
    %1976 = vmatpush.bf16.msra.mxu0 %v1268
    %1977 = vmatpush.bf16.msra.mxu0 %v1267
    %1978 = vmatmul.bf16.gmra.mxu0 %v1766
    %v1979 = vpop.f32.mrf.mxu0
    %v1980 = vadd.f32 0.0, %v1979
    %v1981 = vpop.f32.mrf.mxu0
    %1982 = vdwg.mxu0
    %1983 = vset.pattern.permute.xlu0 10
    %1984 = vperm.xlu0 %1983, %v1696
    %v1985 = vpop.permute.xlu0 %1984
    %v1987 = vmul.f32 %v1985, %v1980
    %v1988 = vadd.f32 %v1969, %v1987
    %1989 = vmatpush.bf16.msra.mxu0 %v1358
    %1990 = vmatpush.bf16.msra.mxu0 %v1357
    %1991 = vmatpush.bf16.msra.mxu0 %v1356
    %1992 = vmatpush.bf16.msra.mxu0 %v1355
    %1993 = vmatpush.bf16.msra.mxu0 %v1354
    %1994 = vmatpush.bf16.msra.mxu0 %v1353
    %1995 = vmatpush.bf16.msra.mxu0 %v1352
    %1996 = vmatpush.bf16.msra.mxu0 %v1351
    %1997 = vmatmul.bf16.gmra.mxu0 %v1766
    %v1998 = vpop.f32.mrf.mxu0
    %v1999 = vadd.f32 0.0, %v1998
    %v2000 = vpop.f32.mrf.mxu0
    %2001 = vdwg.mxu0
    %2002 = vset.pattern.permute.xlu0 11
    %2003 = vperm.xlu0 %2002, %v1696
    %v2004 = vpop.permute.xlu0 %2003
    %v2006 = vmul.f32 %v2004, %v1999
    %v2007 = vadd.f32 %v1988, %v2006
    %v2008 = vpack.c.bf16 %v2007, %v2007
    %v2009 = vld [vmem:[%s7] sm:$0xf]
    %v2010 = vld [vmem:[%s7 + $0x4] sm:$0xf]
    %v2011 = vld [vmem:[%s7 + $0x8] sm:$0xf]
    %v2012 = vld [vmem:[%s7 + $0xc] sm:$0xf]
    %v2013 = vld [vmem:[%s7 + $0x10] sm:$0xf]
    %v2014 = vld [vmem:[%s7 + $0x14] sm:$0xf]
    %v2015 = vld [vmem:[%s7 + $0x18] sm:$0xf]
    %v2016 = vld [vmem:[%s7 + $0x1c] sm:$0xf]
    %v2017 = vld [vmem:[%s7 + $0x20] sm:$0xf]
    %v2018 = vld [vmem:[%s7 + $0x24] sm:$0xf]
    %v2019 = vld [vmem:[%s7 + $0x28] sm:$0xf]
    %v2020 = vld [vmem:[%s7 + $0x2c] sm:$0xf]
    %v2021 = vld [vmem:[%s7 + $0x30] sm:$0xf]
    %v2022 = vld [vmem:[%s7 + $0x34] sm:$0xf]
    %v2023 = vld [vmem:[%s7 + $0x38] sm:$0xf]
    %v2024 = vld [vmem:[%s7 + $0x3c] sm:$0xf]
    %v2025 = vld [vmem:[%s8] sm:$0x1]
    %v2027 = vperm.slane %v2025, 0
    %v2045 = vunpack.c.l.b16 %v2009
    %v2046 = vunpack.c.l.b16 %v2010
    %v2047 = vunpack.c.l.b16 %v2011
    %v2048 = vunpack.c.l.b16 %v2012
    %v2049 = vunpack.c.l.b16 %v2013
    %v2050 = vunpack.c.l.b16 %v2014
    %v2051 = vunpack.c.l.b16 %v2015
    %v2052 = vunpack.c.l.b16 %v2016
    %v2053 = vunpack.c.l.b16 %v2017
    %v2054 = vunpack.c.l.b16 %v2018
    %v2055 = vunpack.c.l.b16 %v2019
    %v2056 = vunpack.c.l.b16 %v2020
    %v2057 = vunpack.c.l.b16 %v2021
    %v2058 = vunpack.c.l.b16 %v2022
    %v2059 = vunpack.c.l.b16 %v2023
    %v2060 = vunpack.c.l.b16 %v2024
    %v2061 = vpack.c.b16 %v2046, %v2045
    %v2062 = vpack.c.b16 %v2048, %v2047
    %v2063 = vpack.c.b16 %v2050, %v2049
    %v2064 = vpack.c.b16 %v2052, %v2051
    %v2065 = vpack.c.b16 %v2054, %v2053
    %v2066 = vpack.c.b16 %v2056, %v2055
    %v2067 = vpack.c.b16 %v2058, %v2057
    %v2068 = vpack.c.b16 %v2060, %v2059
    %2077 = vmatpush.bf16.msra.mxu0 %v2068
    %2078 = vmatpush.bf16.msra.mxu0 %v2067
    %2079 = vmatpush.bf16.msra.mxu0 %v2066
    %2080 = vmatpush.bf16.msra.mxu0 %v2065
    %2081 = vmatpush.bf16.msra.mxu0 %v2064
    %2082 = vmatpush.bf16.msra.mxu0 %v2063
    %2083 = vmatpush.bf16.msra.mxu0 %v2062
    %2084 = vmatpush.bf16.msra.mxu0 %v2061
    %2085 = vmatmul.bf16.gmra.mxu0 %v2008
    %v2086 = vpop.f32.mrf.mxu0
    %v2087 = vadd.f32 %v2027, %v2086
    %v2088 = vpop.f32.mrf.mxu0
    %2089 = vdwg.mxu0
    %v2090 = vmax.f32 %v2087, 0.0
    %v2091 = vpack.c.bf16 %v2090, %v2090
    %v2092 = vld [vmem:[#allocation8] sm:$0xf]
    %v2093 = vld [vmem:[#allocation8 + $0x4] sm:$0xf]
    %v2094 = vld [vmem:[#allocation8 + $0x8] sm:$0xf]
    %v2095 = vld [vmem:[#allocation8 + $0xc] sm:$0xf]
    %v2096 = vld [vmem:[#allocation8 + $0x10] sm:$0xf]
    %v2097 = vld [vmem:[#allocation8 + $0x14] sm:$0xf]
    %v2098 = vld [vmem:[#allocation8 + $0x18] sm:$0xf]
    %v2099 = vld [vmem:[#allocation8 + $0x1c] sm:$0xf]
    %v2100 = vld [vmem:[%s10] sm:$0x1]
    %v2102 = vperm.slane %v2100, 0
    %v2112 = vunpack.c.l.b16 %v2092
    %v2113 = vunpack.c.l.b16 %v2093
    %v2114 = vunpack.c.l.b16 %v2094
    %v2115 = vunpack.c.l.b16 %v2095
    %v2116 = vunpack.c.l.b16 %v2096
    %v2117 = vunpack.c.l.b16 %v2097
    %v2118 = vunpack.c.l.b16 %v2098
    %v2119 = vunpack.c.l.b16 %v2099
    %v2120 = vpack.c.b16 %v2113, %v2112
    %v2121 = vpack.c.b16 %v2115, %v2114
    %v2122 = vpack.c.b16 %v2117, %v2116
    %v2123 = vpack.c.b16 %v2119, %v2118
    %v2129 = vsel %vm265, %v2091, 0
    %2131 = vmatpush.bf16.msra.mxu0 0
    %2132 = vmatpush.bf16.msra.mxu0 0
    %2133 = vmatpush.bf16.msra.mxu0 0
    %2134 = vmatpush.bf16.msra.mxu0 0
    %2135 = vmatpush.bf16.msra.mxu0 %v2123
    %2136 = vmatpush.bf16.msra.mxu0 %v2122
    %2137 = vmatpush.bf16.msra.mxu0 %v2121
    %2138 = vmatpush.bf16.msra.mxu0 %v2120
    %2139 = vmatmul.bf16.gmra.mxu0 %v2129
    %v2140 = vpop.f32.mrf.mxu0
    %v2141 = vadd.f32 %v2102, %v2140
    %v2142 = vpop.f32.mrf.mxu0
    %2143 = vdwg.mxu0
    %v2144 = vmax.f32 %v2141, 0.0
    %v2145 = vpack.c.bf16 %v2144, %v2144
    %v2146 = vld [vmem:[%s11] sm:$0xf]
    %v2147 = vld [vmem:[%s11 + $0x4] sm:$0xf]
    %v2148 = vld [vmem:[%s11 + $0x8] sm:$0xf]
    %v2149 = vld [vmem:[%s11 + $0xc] sm:$0xf]
    %v2150 = vld [vmem:[%s11 + $0x10] sm:$0xf]
    %v2151 = vld [vmem:[%s11 + $0x14] sm:$0xf]
    %v2152 = vld [vmem:[%s11 + $0x18] sm:$0xf]
    %v2153 = vld [vmem:[%s11 + $0x1c] sm:$0xf]
    %v2154 = vld [vmem:[%s11 + $0x20] sm:$0xf]
    %v2155 = vld [vmem:[%s11 + $0x24] sm:$0xf]
    %v2156 = vld [vmem:[%s11 + $0x28] sm:$0xf]
    %v2157 = vld [vmem:[%s11 + $0x2c] sm:$0xf]
    %v2158 = vld [vmem:[%s11 + $0x30] sm:$0xf]
    %v2159 = vld [vmem:[%s11 + $0x34] sm:$0xf]
    %v2160 = vld [vmem:[%s11 + $0x38] sm:$0xf]
    %v2161 = vld [vmem:[%s11 + $0x3c] sm:$0xf]
    %v2162 = vld [vmem:[%s12] sm:$0x1]
    %v2164 = vperm.slane %v2162, 0
    %v2182 = vunpack.c.l.b16 %v2146
    %v2183 = vunpack.c.l.b16 %v2147
    %v2184 = vunpack.c.l.b16 %v2148
    %v2185 = vunpack.c.l.b16 %v2149
    %v2186 = vunpack.c.l.b16 %v2150
    %v2187 = vunpack.c.l.b16 %v2151
    %v2188 = vunpack.c.l.b16 %v2152
    %v2189 = vunpack.c.l.b16 %v2153
    %v2190 = vunpack.c.l.b16 %v2154
    %v2191 = vunpack.c.l.b16 %v2155
    %v2192 = vunpack.c.l.b16 %v2156
    %v2193 = vunpack.c.l.b16 %v2157
    %v2194 = vunpack.c.l.b16 %v2158
    %v2195 = vunpack.c.l.b16 %v2159
    %v2196 = vunpack.c.l.b16 %v2160
    %v2197 = vunpack.c.l.b16 %v2161
    %v2198 = vpack.c.b16 %v2183, %v2182
    %v2199 = vpack.c.b16 %v2185, %v2184
    %v2200 = vpack.c.b16 %v2187, %v2186
    %v2201 = vpack.c.b16 %v2189, %v2188
    %v2202 = vpack.c.b16 %v2191, %v2190
    %v2203 = vpack.c.b16 %v2193, %v2192
    %v2204 = vpack.c.b16 %v2195, %v2194
    %v2205 = vpack.c.b16 %v2197, %v2196
    %2214 = vmatpush.bf16.msra.mxu0 %v2205
    %2215 = vmatpush.bf16.msra.mxu0 %v2204
    %2216 = vmatpush.bf16.msra.mxu0 %v2203
    %2217 = vmatpush.bf16.msra.mxu0 %v2202
    %2218 = vmatpush.bf16.msra.mxu0 %v2201
    %2219 = vmatpush.bf16.msra.mxu0 %v2200
    %2220 = vmatpush.bf16.msra.mxu0 %v2199
    %2221 = vmatpush.bf16.msra.mxu0 %v2198
    %2222 = vmatmul.bf16.gmra.mxu0 %v2145
    %v2223 = vpop.f32.mrf.mxu0
    %v2224 = vadd.f32 %v2164, %v2223
    %v2225 = vpop.f32.mrf.mxu0
    %2226 = vdwg.mxu0
    %v2227 = vmax.f32 %v2224, 0.0
    %v2228 = vpack.c.bf16 %v2227, %v2227
    %v2229 = vld [vmem:[#allocation10] sm:$0xf]
    %v2230 = vld [vmem:[#allocation10 + $0x4] sm:$0xf]
    %v2231 = vld [vmem:[#allocation10 + $0x8] sm:$0xf]
    %v2232 = vld [vmem:[#allocation10 + $0xc] sm:$0xf]
    %v2233 = vld [vmem:[#allocation10 + $0x10] sm:$0xf]
    %v2234 = vld [vmem:[#allocation10 + $0x14] sm:$0xf]
    %v2235 = vld [vmem:[#allocation10 + $0x18] sm:$0xf]
    %v2236 = vld [vmem:[#allocation10 + $0x1c] sm:$0xf]
    %v2237 = vld [vmem:[#allocation10 + $0x20] sm:$0xf]
    %v2238 = vld [vmem:[#allocation10 + $0x24] sm:$0xf]
    %v2239 = vld [vmem:[#allocation10 + $0x28] sm:$0xf]
    %v2240 = vld [vmem:[#allocation10 + $0x2c] sm:$0xf]
    %v2241 = vld [vmem:[#allocation10 + $0x30] sm:$0xf]
    %v2242 = vld [vmem:[#allocation10 + $0x34] sm:$0xf]
    %v2243 = vld [vmem:[#allocation10 + $0x38] sm:$0xf]
    %v2244 = vld [vmem:[#allocation10 + $0x3c] sm:$0xf]
    %v2245 = vld [vmem:[%s14] sm:$0x1]
    %v2247 = vperm.slane %v2245, 0
    %v2265 = vunpack.c.l.b16 %v2229
    %v2266 = vunpack.c.l.b16 %v2230
    %v2267 = vunpack.c.l.b16 %v2231
    %v2268 = vunpack.c.l.b16 %v2232
    %v2269 = vunpack.c.l.b16 %v2233
    %v2270 = vunpack.c.l.b16 %v2234
    %v2271 = vunpack.c.l.b16 %v2235
    %v2272 = vunpack.c.l.b16 %v2236
    %v2273 = vunpack.c.l.b16 %v2237
    %v2274 = vunpack.c.l.b16 %v2238
    %v2275 = vunpack.c.l.b16 %v2239
    %v2276 = vunpack.c.l.b16 %v2240
    %v2277 = vunpack.c.l.b16 %v2241
    %v2278 = vunpack.c.l.b16 %v2242
    %v2279 = vunpack.c.l.b16 %v2243
    %v2280 = vunpack.c.l.b16 %v2244
    %v2281 = vpack.c.b16 %v2266, %v2265
    %v2282 = vpack.c.b16 %v2268, %v2267
    %v2283 = vpack.c.b16 %v2270, %v2269
    %v2284 = vpack.c.b16 %v2272, %v2271
    %v2285 = vpack.c.b16 %v2274, %v2273
    %v2286 = vpack.c.b16 %v2276, %v2275
    %v2287 = vpack.c.b16 %v2278, %v2277
    %v2288 = vpack.c.b16 %v2280, %v2279
    %2297 = vmatpush.bf16.msra.mxu0 %v2288
    %2298 = vmatpush.bf16.msra.mxu0 %v2287
    %2299 = vmatpush.bf16.msra.mxu0 %v2286
    %2300 = vmatpush.bf16.msra.mxu0 %v2285
    %2301 = vmatpush.bf16.msra.mxu0 %v2284
    %2302 = vmatpush.bf16.msra.mxu0 %v2283
    %2303 = vmatpush.bf16.msra.mxu0 %v2282
    %2304 = vmatpush.bf16.msra.mxu0 %v2281
    %2305 = vmatmul.bf16.gmra.mxu0 %v2228
    %v2306 = vpop.f32.mrf.mxu0
    %v2307 = vadd.f32 %v2247, %v2306
    %v2308 = vpop.f32.mrf.mxu0
    %2309 = vdwg.mxu0
    %v2310 = vxor.u32 %v2307, 2147483648
    %v2311 = vmul.f32 %v2310, 1.442695
    %v2312 = vpow.pop %v2311
    %v2313 = vadd.f32 %v2312, 1.0
    %v2314 = vrcp.pop %v2313
    %v2315 = vmul.f32 %v2313, %v2314
    %v2316 = vsub.f32 1.0, %v2315
    %v2317 = vmul.f32 %v2314, %v2316
    %v2318 = vadd.f32 %v2314, %v2317
    %vm2319 = vweird.f32 %v2313
    %vm2320 = vweird.f32 %v2314
    %vm2321 = vmor %vm2319, %vm2320
    %v2322 = vsel %vm2321, %v2314, %v2318
    %v2323 = vand.u32 2147483647, %v2313
    %vm2324 = vcmp.eq.f32.partialorder %v2323, 8.507059e+37
    %v2325 = vand.u32 %v2313, 2147483648
    %v2326 = vor.u32 1.1754944e-38, %v2325
    %v2327 = vsel %vm2324, %v2326, %v2322
    %v2328 = vmul.f32 1.0, %v2327
    %2329 = vst [vmem:[#allocation11] sm:$0xff] %v2328
    // Predicated region
    $region82: #{tpu_custom_call.1} parent=1 // pred_check
      _
    $region83: #{tpu_custom_call.1} parent=1 // pred_check_branch
      %2331 = sbr.rel (0) target = $region85
    $region84: #{tpu_custom_call.1} parent=1 // pred_region
      %2333 = vsyncadd [#allocation4], 0
      %s2335 = sshll.u32 [#allocation11], 4
      %s2336 = int_to_ptr.vmem [resolvable:$true] %s2335
      %s2337 = sshll.u32 %s15, 4
      %s2338 = int_to_ptr.hbm [resolvable:$true] %s2337
      %2340 = dma.vmem_to_hbm [thread:$0]  %s2336, 128, %s2338, [#allocation4]
    $region85: #{tpu_custom_call.1} parent=1 // pred_fallthru
      _
    // Predicated region
    $region86: #{tpu_custom_call.1} parent=1 // pred_check
      _
    $region87: #{tpu_custom_call.1} parent=1 // pred_check_branch
      %2342 = sbr.rel (0) target = $region89
    $region88: #{tpu_custom_call.1} parent=1 // pred_region
      %2344 = dma.done [#allocation4], 128
    $region89: #{tpu_custom_call.1} parent=1 // pred_fallthru
      _
    %2345 = vsyncpa [#allocation3], 1
    %2346 = vsyncpa [#allocation6], 1
    %2347 = vsyncpa [#allocation9], 1
    %2348 = vsyncpa [#allocation4], 1

</llo_original>
